<compile_context>
chip_gen: v6e
topology: v6e:2x2x1
jax: 0.10.0
libtpu: 0.0.40
codegen_flags: <defaults>
</compile_context>

<pallas_src>
import math

import jax
import jax.numpy as jnp
import numpy as np
from jax.experimental import pallas as pl
from jax.experimental.pallas import tpu as pltpu

# ---------------------------------------------------------------------------
# Synthetic "Electra" config (small, deterministic)
# ---------------------------------------------------------------------------
VOCAB = 50
MAX_POS = 16
HIDDEN = 32
NUM_HEADS = 4
HEAD_DIM = HIDDEN // NUM_HEADS
INTERMEDIATE = 64
NUM_LAYERS = 2
NUM_MULTI_LABELS = 6
NUM_HIER_LABELS = 5
LN_EPS = 1e-12

OUT_W = 32          # lane width of the single fused output slab
LOSS_COL = 16       # column of the output slab that carries the scalar loss


# ---------------------------------------------------------------------------
# Small math helpers (pure jnp, usable both inside the kernel and in the ref)
# ---------------------------------------------------------------------------
def _layer_norm(x, g, b):
    mean = jnp.mean(x, axis=-1, keepdims=True)
    xc = x - mean
    var = jnp.mean(xc * xc, axis=-1, keepdims=True)
    return xc * jax.lax.rsqrt(var + LN_EPS) * g + b


def _gelu(x):
    # TODO(synk): HF Electra uses the erf-based GELU; the tanh approximation is
    # used here for a guaranteed EUP lowering inside the kernel.
    c = math.sqrt(2.0 / math.pi)
    return 0.5 * x * (1.0 + jnp.tanh(c * (x + 0.044715 * x * x * x)))


# ---------------------------------------------------------------------------
# Fused Pallas kernel: encoder + heads + losses (single invocation, no grid)
# ---------------------------------------------------------------------------
def _electra_mtl_kernel(emb_ref, mask_ref, gvec_ref, wqkv_ref, wo_ref,
                        wi_ref, wo2_ref, lvec_ref, whead_ref, lab_ref,
                        out_ref, ctx_ref):
    BS, H = emb_ref.shape
    B, S = mask_ref.shape
    L = wqkv_ref.shape[0]
    I = wi_ref.shape[2]
    NM, NH = NUM_MULTI_LABELS, NUM_HIER_LABELS
    scale = 1.0 / math.sqrt(HEAD_DIM)
    f32, bf16 = jnp.float32, jnp.bfloat16

    g = gvec_ref[...]                                    # [3, OUT_W] packed globals

    # Embedding LayerNorm over the whole [B*S, H] slab (emb dropout = identity).
    x = _layer_norm(emb_ref[...], g[0:1, :H], g[1:2, :H])

    for l in range(L):
        lv = lvec_ref[l]                                 # [8, 3H] biases + LN params

        # Fused QKV projection for all B*S rows at once (bf16 MXU, f32 acc).
        qkv = jnp.dot(x.astype(bf16), wqkv_ref[l],
                      preferred_element_type=f32) + lv[0:1, :]      # [B*S, 3H]

        # Per-(batch, head) attention on tiny [S, HEAD_DIM] tiles; contexts are
        # scattered directly into the VMEM scratch slab (no lane concat).
        for b in range(B):
            r0 = b * S
            mask_row = mask_ref[b:b + 1, :]              # [1, S] additive bias
            for hh in range(NUM_HEADS):
                c0 = hh * HEAD_DIM
                qh = qkv[r0:r0 + S, c0:c0 + HEAD_DIM].astype(bf16)
                kh = qkv[r0:r0 + S, H + c0:H + c0 + HEAD_DIM].astype(bf16)
                vh = qkv[r0:r0 + S, 2 * H + c0:2 * H + c0 + HEAD_DIM].astype(bf16)
                scores = jax.lax.dot_general(
                    qh, kh, (((1,), (1,)), ((), ())),
                    preferred_element_type=f32) * scale + mask_row
                m = jnp.max(scores, axis=-1, keepdims=True)
                e = jnp.exp(scores - m)
                probs = e * pl.reciprocal(jnp.sum(e, axis=-1, keepdims=True),
                                          approx=True)   # attn dropout = identity
                ctx_ref[r0:r0 + S, c0:c0 + HEAD_DIM] = jnp.dot(
                    probs.astype(bf16), vh, preferred_element_type=f32)

        attn = jnp.dot(ctx_ref[...].astype(bf16), wo_ref[l],
                       preferred_element_type=f32) + lv[1:2, :H]
        x = _layer_norm(x + attn, lv[2:3, :H], lv[3:4, :H])

        hmid = _gelu(jnp.dot(x.astype(bf16), wi_ref[l],
                             preferred_element_type=f32) + lv[4:5, :I])
        ffn = jnp.dot(hmid.astype(bf16), wo2_ref[l],
                      preferred_element_type=f32) + lv[5:6, :H]
        x = _layer_norm(x + ffn, lv[6:7, :H], lv[7:8, :H])

    # CLS rows (one per batch element); dropout(cls_output) is identity in eval.
    cls = jnp.concatenate([x[b * S:b * S + 1, :] for b in range(B)], axis=0)
    head = jnp.dot(cls.astype(bf16), whead_ref[...],
                   preferred_element_type=f32) + g[2:3, :]          # [B, OUT_W]
    ml = head[:, :NM]                                               # [B, NM]
    hl = head[:, NM:NM + NH]                                        # [B, NH]

    # BCEWithLogitsLoss, mean over all B*NM elements (numerically stable form).
    y = lab_ref[:, :NM]
    bce_e = jnp.maximum(ml, 0.0) - ml * y + jnp.log(1.0 + jnp.exp(-jnp.abs(ml)))
    bce = jnp.sum(jnp.sum(bce_e, axis=1, keepdims=True),
                  axis=0, keepdims=True) * (1.0 / (B * NM))

    # CrossEntropyLoss with ignore_index=-1 (mean over valid rows).
    # NOTE: if every row is ignored ce_cnt == 0 and the loss is NaN, matching
    # PyTorch's behaviour for an all-ignored batch.
    labf = lab_ref[:, NM:NM + 1]                                    # [B, 1] float
    valid = (labf >= 0.0).astype(f32)
    labi = jnp.where(labf >= 0.0, labf, 0.0).astype(jnp.int32)
    col = jax.lax.broadcasted_iota(jnp.int32, (B, NH), 1)
    onehot = (col == labi).astype(f32)
    m = jnp.max(hl, axis=-1, keepdims=True)
    lse = m + jnp.log(jnp.sum(jnp.exp(hl - m), axis=-1, keepdims=True))
    picked = jnp.sum(onehot * hl, axis=-1, keepdims=True)
    nll = (lse - picked) * valid
    ce = (jnp.sum(nll, axis=0, keepdims=True)
          * pl.reciprocal(jnp.sum(valid, axis=0, keepdims=True), approx=True))

    loss = bce + ce                                                 # [1, 1]

    # Single output slab: head logits everywhere, scalar loss at LOSS_COL.
    colw = jax.lax.broadcasted_iota(jnp.int32, (B, head.shape[1]), 1)
    out_ref[...] = jnp.where(colw == LOSS_COL, loss, head)


# ---------------------------------------------------------------------------
# Parameter init (deterministic, synthetic)
# ---------------------------------------------------------------------------
def init_params(key):
    ks = jax.random.split(key, 16)

    def dense(k, shape, scale=0.02):
        return (scale * jax.random.normal(k, shape)).astype(jnp.float32)

    L, H, I = NUM_LAYERS, HIDDEN, INTERMEDIATE
    return dict(
        word_emb=dense(ks[0], (VOCAB, H)),
        pos_emb=dense(ks[1], (MAX_POS, H)),
        type_emb=dense(ks[2], (2, H)),
        emb_ln_g=jnp.ones((1, H), jnp.float32),
        emb_ln_b=jnp.zeros((1, H), jnp.float32),
        wq=dense(ks[3], (L, H, H)), wk=dense(ks[4], (L, H, H)),
        wv=dense(ks[5], (L, H, H)), wo=dense(ks[6], (L, H, H)),
        bq=jnp.zeros((L, 1, H), jnp.float32), bk=jnp.zeros((L, 1, H), jnp.float32),
        bv=jnp.zeros((L, 1, H), jnp.float32), bo=jnp.zeros((L, 1, H), jnp.float32),
        ln1_g=jnp.ones((L, 1, H), jnp.float32), ln1_b=jnp.zeros((L, 1, H), jnp.float32),
        wi=dense(ks[7], (L, H, I)), bi=jnp.zeros((L, 1, I), jnp.float32),
        wo2=dense(ks[8], (L, I, H)), bo2=jnp.zeros((L, 1, H), jnp.float32),
        ln2_g=jnp.ones((L, 1, H), jnp.float32), ln2_b=jnp.zeros((L, 1, H), jnp.float32),
        w_ml=dense(ks[9], (H, NUM_MULTI_LABELS)),
        b_ml=dense(ks[10], (1, NUM_MULTI_LABELS)),
        w_h=dense(ks[11], (H, NUM_HIER_LABELS)),
        b_h=dense(ks[12], (1, NUM_HIER_LABELS)),
    )


# ---------------------------------------------------------------------------
# Wrapper: embedding lookup (gather) + parameter packing in plain JAX,
# everything else inside the fused kernel.
# ---------------------------------------------------------------------------
@jax.jit
def forward(params, input_ids, attention_mask, multi_labels, hier_labels):
    B, S = input_ids.shape
    H, L = HIDDEN, NUM_LAYERS
    f32, bf16 = jnp.float32, jnp.bfloat16

    emb = (jnp.take(params['word_emb'], input_ids, axis=0)
           + params['pos_emb'][:S][None, :, :]
           + params['type_emb'][0][None, None, :]).astype(f32)
    emb_flat = emb.reshape(B * S, H)
    mask_bias = (1.0 - attention_mask.astype(f32)) * -1e9           # [B, S]

    # --- pack parameters into a handful of arrays (fewer DMA descriptors) ---
    wqkv = jnp.concatenate([params['wq'], params['wk'], params['wv']],
                           axis=-1).astype(bf16)                     # [L, H, 3H]
    wo = params['wo'].astype(bf16)                                   # [L, H, H]
    wi = params['wi'].astype(bf16)                                   # [L, H, I]
    wo2 = params['wo2'].astype(bf16)                                 # [L, I, H]

    vw = 3 * H

    def pad_row(v):
        return jnp.pad(v, ((0, 0), (0, 0), (0, vw - v.shape[-1])))

    lvec = jnp.concatenate([
        jnp.concatenate([params['bq'], params['bk'], params['bv']], axis=-1),
        pad_row(params['bo']), pad_row(params['ln1_g']), pad_row(params['ln1_b']),
        pad_row(params['bi']), pad_row(params['bo2']),
        pad_row(params['ln2_g']), pad_row(params['ln2_b'])],
        axis=1).astype(f32)                                          # [L, 8, 3H]

    nmh = NUM_MULTI_LABELS + NUM_HIER_LABELS
    whead = jnp.concatenate(
        [params['w_ml'], params['w_h'], jnp.zeros((H, OUT_W - nmh), f32)],
        axis=-1).astype(bf16)                                        # [H, OUT_W]
    bhead = jnp.concatenate(
        [params['b_ml'], params['b_h'], jnp.zeros((1, OUT_W - nmh), f32)],
        axis=-1)                                                     # [1, OUT_W]
    assert H == OUT_W  # lets the emb-LN params and the head bias share one array
    gvec = jnp.concatenate([params['emb_ln_g'], params['emb_ln_b'], bhead],
                           axis=0).astype(f32)                       # [3, OUT_W]

    labels = jnp.concatenate(
        [multi_labels.astype(f32), hier_labels.astype(f32)[:, None]],
        axis=-1)                                                     # [B, NM+1]

    vmem = pl.BlockSpec(memory_space=pltpu.MemorySpace.VMEM)
    out = pl.pallas_call(
        _electra_mtl_kernel,
        out_shape=jax.ShapeDtypeStruct((B, OUT_W), f32),
        in_specs=[vmem] * 10,
        out_specs=vmem,
        scratch_shapes=[pltpu.VMEM((B * S, H), f32)],                # attention ctx
    )(emb_flat, mask_bias, gvec, wqkv, wo, wi, wo2, lvec, whead, labels)

    ml_logits = out[:, :NUM_MULTI_LABELS]
    hier_logits = out[:, NUM_MULTI_LABELS:NUM_MULTI_LABELS + NUM_HIER_LABELS]
    loss = out[0, LOSS_COL]
    return ml_logits, hier_logits, loss


# ---------------------------------------------------------------------------
# Pure-JAX reference (same math, f32) for correctness checking
# ---------------------------------------------------------------------------
def reference_forward(params, input_ids, attention_mask, multi_labels, hier_labels):
    B, S = input_ids.shape
    emb = (jnp.take(params['word_emb'], input_ids, axis=0)
           + params['pos_emb'][:S][None, :, :]
           + params['type_emb'][0][None, None, :]).astype(jnp.float32)
    mask_bias = (1.0 - attention_mask.astype(jnp.float32)) * -1e9
    scale = 1.0 / math.sqrt(HEAD_DIM)

    x = _layer_norm(emb, params['emb_ln_g'], params['emb_ln_b'])
    for l in range(NUM_LAYERS):
        q = jnp.einsum('bsh,hk->bsk', x, params['wq'][l]) + params['bq'][l]
        k = jnp.einsum('bsh,hk->bsk', x, params['wk'][l]) + params['bk'][l]
        v = jnp.einsum('bsh,hk->bsk', x, params['wv'][l]) + params['bv'][l]
        q4 = q.reshape(B, S, NUM_HEADS, HEAD_DIM)
        k4 = k.reshape(B, S, NUM_HEADS, HEAD_DIM)
        v4 = v.reshape(B, S, NUM_HEADS, HEAD_DIM)
        scores = jnp.einsum('bqnd,bknd->bnqk', q4, k4) * scale
        scores = scores + mask_bias[:, None, None, :]
        probs = jax.nn.softmax(scores, axis=-1)
        ctx = jnp.einsum('bnqk,bknd->bqnd', probs, v4).reshape(B, S, HIDDEN)
        attn_out = jnp.einsum('bsh,hk->bsk', ctx, params['wo'][l]) + params['bo'][l]
        x = _layer_norm(x + attn_out, params['ln1_g'][l], params['ln1_b'][l])
        hmid = _gelu(jnp.einsum('bsh,hi->bsi', x, params['wi'][l]) + params['bi'][l])
        ffn = jnp.einsum('bsi,ih->bsh', hmid, params['wo2'][l]) + params['bo2'][l]
        x = _layer_norm(x + ffn, params['ln2_g'][l], params['ln2_b'][l])

    cls = x[:, 0, :]
    ml_logits = cls @ params['w_ml'] + params['b_ml']
    hier_logits = cls @ params['w_h'] + params['b_h']

    y = multi_labels.astype(jnp.float32)
    z = ml_logits
    bce = jnp.mean(jnp.maximum(z, 0.0) - z * y + jnp.log(1.0 + jnp.exp(-jnp.abs(z))))

    lab = hier_labels
    valid = lab >= 0
    labc = jnp.where(valid, lab, 0)
    logp = jax.nn.log_softmax(hier_logits, axis=-1)
    picked = jnp.take_along_axis(logp, labc[:, None], axis=-1)[:, 0]
    ce = jnp.sum(jnp.where(valid, -picked, 0.0)) / jnp.sum(valid.astype(jnp.float32))
    return ml_logits, hier_logits, bce + ce


# ---------------------------------------------------------------------------
if __name__ == "__main__":
    key = jax.random.PRNGKey(0)
    pkey, ikey, mkey = jax.random.split(key, 3)
    params = init_params(pkey)

    B, S = 2, 8
    input_ids = jax.random.randint(ikey, (B, S), 0, VOCAB, dtype=jnp.int32)
    attention_mask = jnp.array([[1, 1, 1, 1, 1, 1, 1, 1],
                                [1, 1, 1, 1, 1, 1, 0, 0]], dtype=jnp.int32)
    multi_labels = jax.random.bernoulli(mkey, 0.4, (B, NUM_MULTI_LABELS)).astype(jnp.float32)
    hier_labels = jnp.array([3, -1], dtype=jnp.int32)   # second row exercises ignore_index=-1

    ml_logits, hier_logits, loss = forward(params, input_ids, attention_mask,
                                           multi_labels, hier_labels)
    jax.block_until_ready((ml_logits, hier_logits, loss))

    ml_r, h_r, loss_r = reference_forward(params, input_ids, attention_mask,
                                          multi_labels, hier_labels)
    np.testing.assert_allclose(np.asarray(ml_logits), np.asarray(ml_r), atol=1e-2, rtol=1e-2)
    np.testing.assert_allclose(np.asarray(hier_logits), np.asarray(h_r), atol=1e-2, rtol=1e-2)
    np.testing.assert_allclose(float(loss), float(loss_r), atol=1e-2, rtol=1e-2)

    print("KERNEL_OK")
</pallas_src>

<mosaic_0001>
module attributes {stable_mosaic.version = 11 : i64} {
  func.func @_electra_mtl_kernel(%arg0: memref<16x32xf32, #tpu.memory_space<vmem>>, %arg1: memref<2x8xf32, #tpu.memory_space<vmem>>, %arg2: memref<3x32xf32, #tpu.memory_space<vmem>>, %arg3: memref<2x32x96xbf16, #tpu.memory_space<vmem>>, %arg4: memref<2x32x32xbf16, #tpu.memory_space<vmem>>, %arg5: memref<2x32x64xbf16, #tpu.memory_space<vmem>>, %arg6: memref<2x64x32xbf16, #tpu.memory_space<vmem>>, %arg7: memref<2x8x96xf32, #tpu.memory_space<vmem>>, %arg8: memref<32x32xbf16, #tpu.memory_space<vmem>>, %arg9: memref<2x7xf32, #tpu.memory_space<vmem>>, %arg10: memref<2x32xf32, #tpu.memory_space<vmem>>, %arg11: memref<16x32xf32, #tpu.memory_space<vmem>>) attributes {dimension_semantics = [], scalar_prefetch = 0 : i64, scratch_operands = 1 : i64, tpu.core_type = #tpu.core_type<tc>} {
    %c0 = arith.constant 0 : index
    %c0_0 = arith.constant 0 : index
    %0 = vector.load %arg2[%c0, %c0_0] : memref<3x32xf32, #tpu.memory_space<vmem>>, vector<3x32xf32>
    %c0_1 = arith.constant 0 : index
    %c0_2 = arith.constant 0 : index
    %1 = vector.load %arg0[%c0_1, %c0_2] : memref<16x32xf32, #tpu.memory_space<vmem>>, vector<16x32xf32>
    %2 = vector.extract_strided_slice %0 {offsets = [0, 0], sizes = [1, 32], strides = [1, 1]} : vector<3x32xf32> to vector<1x32xf32>
    %3 = vector.extract_strided_slice %0 {offsets = [1, 0], sizes = [1, 32], strides = [1, 1]} : vector<3x32xf32> to vector<1x32xf32>
    %cst = arith.constant dense<0.000000e+00> : vector<16xf32>
    %4 = vector.multi_reduction <add>, %1, %cst [1] : vector<16x32xf32> to vector<16xf32>
    %5 = vector.shape_cast %4 : vector<16xf32> to vector<16x1xf32>
    %cst_3 = arith.constant 3.200000e+01 : f32
    %6 = vector.broadcast %cst_3 : f32 to vector<16x1xf32>
    %7 = arith.divf %5, %6 : vector<16x1xf32>
    %8 = vector.broadcast %7 : vector<16x1xf32> to vector<16x32xf32>
    %9 = arith.subf %1, %8 : vector<16x32xf32>
    %10 = arith.mulf %9, %9 : vector<16x32xf32>
    %cst_4 = arith.constant dense<0.000000e+00> : vector<16xf32>
    %11 = vector.multi_reduction <add>, %10, %cst_4 [1] : vector<16x32xf32> to vector<16xf32>
    %12 = vector.shape_cast %11 : vector<16xf32> to vector<16x1xf32>
    %cst_5 = arith.constant 3.200000e+01 : f32
    %13 = vector.broadcast %cst_5 : f32 to vector<16x1xf32>
    %14 = arith.divf %12, %13 : vector<16x1xf32>
    %cst_6 = arith.constant 9.99999996E-13 : f32
    %15 = vector.broadcast %cst_6 : f32 to vector<16x1xf32>
    %16 = arith.addf %14, %15 : vector<16x1xf32>
    %17 = math.rsqrt %16 : vector<16x1xf32>
    %18 = vector.broadcast %17 : vector<16x1xf32> to vector<16x32xf32>
    %19 = arith.mulf %9, %18 : vector<16x32xf32>
    %20 = vector.broadcast %2 : vector<1x32xf32> to vector<16x32xf32>
    %21 = arith.mulf %19, %20 : vector<16x32xf32>
    %22 = vector.broadcast %3 : vector<1x32xf32> to vector<16x32xf32>
    %23 = arith.addf %21, %22 : vector<16x32xf32>
    %c0_7 = arith.constant 0 : index
    %c0_8 = arith.constant 0 : index
    %c0_9 = arith.constant 0 : index
    %24 = vector.load %arg7[%c0_7, %c0_8, %c0_9] : memref<2x8x96xf32, #tpu.memory_space<vmem>>, vector<1x8x96xf32>
    %25 = vector.shape_cast %24 : vector<1x8x96xf32> to vector<8x96xf32>
    %26 = arith.truncf %23 : vector<16x32xf32> to vector<16x32xbf16>
    %c0_10 = arith.constant 0 : index
    %c0_11 = arith.constant 0 : index
    %c0_12 = arith.constant 0 : index
    %27 = vector.load %arg3[%c0_10, %c0_11, %c0_12] : memref<2x32x96xbf16, #tpu.memory_space<vmem>>, vector<1x32x96xbf16>
    %28 = vector.shape_cast %27 : vector<1x32x96xbf16> to vector<32x96xbf16>
    %cst_13 = arith.constant dense<0.000000e+00> : vector<16x96xf32>
    %29 = tpu.matmul %26, %28, %cst_13 {dimension_numbers = #tpu.dot_dimension_numbers<[1], [0], [0], [1], [0, 0, 1, 1], [], []>} : vector<16x32xbf16>, vector<32x96xbf16>, vector<16x96xf32> -> vector<16x96xf32>
    %30 = vector.extract_strided_slice %25 {offsets = [0, 0], sizes = [1, 96], strides = [1, 1]} : vector<8x96xf32> to vector<1x96xf32>
    %31 = vector.broadcast %30 : vector<1x96xf32> to vector<16x96xf32>
    %32 = arith.addf %29, %31 : vector<16x96xf32>
    %c0_14 = arith.constant 0 : index
    %c0_15 = arith.constant 0 : index
    %33 = vector.load %arg1[%c0_14, %c0_15] : memref<2x8xf32, #tpu.memory_space<vmem>>, vector<1x8xf32>
    %34 = vector.extract_strided_slice %32 {offsets = [0, 0], sizes = [8, 8], strides = [1, 1]} : vector<16x96xf32> to vector<8x8xf32>
    %35 = arith.truncf %34 : vector<8x8xf32> to vector<8x8xbf16>
    %36 = vector.extract_strided_slice %32 {offsets = [0, 32], sizes = [8, 8], strides = [1, 1]} : vector<16x96xf32> to vector<8x8xf32>
    %37 = arith.truncf %36 : vector<8x8xf32> to vector<8x8xbf16>
    %38 = vector.extract_strided_slice %32 {offsets = [0, 64], sizes = [8, 8], strides = [1, 1]} : vector<16x96xf32> to vector<8x8xf32>
    %39 = arith.truncf %38 : vector<8x8xf32> to vector<8x8xbf16>
    %cst_16 = arith.constant dense<0.000000e+00> : vector<8x8xf32>
    %40 = tpu.matmul %35, %37, %cst_16 {dimension_numbers = #tpu.dot_dimension_numbers<[1], [1], [0], [0], [0, 0, 1, 0], [], []>} : vector<8x8xbf16>, vector<8x8xbf16>, vector<8x8xf32> -> vector<8x8xf32>
    %cst_17 = arith.constant 0.353553385 : f32
    %41 = vector.broadcast %cst_17 : f32 to vector<8x8xf32>
    %42 = arith.mulf %40, %41 : vector<8x8xf32>
    %43 = vector.broadcast %33 : vector<1x8xf32> to vector<8x8xf32>
    %44 = arith.addf %42, %43 : vector<8x8xf32>
    %cst_18 = arith.constant dense<0xFF800000> : vector<8xf32>
    %45 = vector.multi_reduction <maximumf>, %44, %cst_18 [1] : vector<8x8xf32> to vector<8xf32>
    %46 = vector.shape_cast %45 : vector<8xf32> to vector<8x1xf32>
    %47 = vector.broadcast %46 : vector<8x1xf32> to vector<8x8xf32>
    %48 = arith.subf %44, %47 : vector<8x8xf32>
    %49 = math.exp %48 : vector<8x8xf32>
    %cst_19 = arith.constant dense<0.000000e+00> : vector<8xf32>
    %50 = vector.multi_reduction <add>, %49, %cst_19 [1] : vector<8x8xf32> to vector<8xf32>
    %51 = vector.shape_cast %50 : vector<8xf32> to vector<8x1xf32>
    %52 = tpu.reciprocal %51 {approx = true} : vector<8x1xf32> -> vector<8x1xf32>
    %53 = vector.broadcast %52 : vector<8x1xf32> to vector<8x8xf32>
    %54 = arith.mulf %49, %53 : vector<8x8xf32>
    %55 = arith.truncf %54 : vector<8x8xf32> to vector<8x8xbf16>
    %cst_20 = arith.constant dense<0.000000e+00> : vector<8x8xf32>
    %56 = tpu.matmul %55, %39, %cst_20 {dimension_numbers = #tpu.dot_dimension_numbers<[1], [0], [0], [1], [0, 0, 1, 1], [], []>} : vector<8x8xbf16>, vector<8x8xbf16>, vector<8x8xf32> -> vector<8x8xf32>
    %c0_21 = arith.constant 0 : index
    %c0_22 = arith.constant 0 : index
    %57 = vector.load %arg11[%c0_21, %c0_22] : memref<16x32xf32, #tpu.memory_space<vmem>>, vector<8x8xf32>
    tpu.vector_store %arg11[%c0_21, %c0_22], %56 {strides = array<i32>} : memref<16x32xf32, #tpu.memory_space<vmem>>, vector<8x8xf32>,
    %58 = vector.extract_strided_slice %32 {offsets = [0, 8], sizes = [8, 8], strides = [1, 1]} : vector<16x96xf32> to vector<8x8xf32>
    %59 = arith.truncf %58 : vector<8x8xf32> to vector<8x8xbf16>
    %60 = vector.extract_strided_slice %32 {offsets = [0, 40], sizes = [8, 8], strides = [1, 1]} : vector<16x96xf32> to vector<8x8xf32>
    %61 = arith.truncf %60 : vector<8x8xf32> to vector<8x8xbf16>
    %62 = vector.extract_strided_slice %32 {offsets = [0, 72], sizes = [8, 8], strides = [1, 1]} : vector<16x96xf32> to vector<8x8xf32>
    %63 = arith.truncf %62 : vector<8x8xf32> to vector<8x8xbf16>
    %cst_23 = arith.constant dense<0.000000e+00> : vector<8x8xf32>
    %64 = tpu.matmul %59, %61, %cst_23 {dimension_numbers = #tpu.dot_dimension_numbers<[1], [1], [0], [0], [0, 0, 1, 0], [], []>} : vector<8x8xbf16>, vector<8x8xbf16>, vector<8x8xf32> -> vector<8x8xf32>
    %cst_24 = arith.constant 0.353553385 : f32
    %65 = vector.broadcast %cst_24 : f32 to vector<8x8xf32>
    %66 = arith.mulf %64, %65 : vector<8x8xf32>
    %67 = vector.broadcast %33 : vector<1x8xf32> to vector<8x8xf32>
    %68 = arith.addf %66, %67 : vector<8x8xf32>
    %cst_25 = arith.constant dense<0xFF800000> : vector<8xf32>
    %69 = vector.multi_reduction <maximumf>, %68, %cst_25 [1] : vector<8x8xf32> to vector<8xf32>
    %70 = vector.shape_cast %69 : vector<8xf32> to vector<8x1xf32>
    %71 = vector.broadcast %70 : vector<8x1xf32> to vector<8x8xf32>
    %72 = arith.subf %68, %71 : vector<8x8xf32>
    %73 = math.exp %72 : vector<8x8xf32>
    %cst_26 = arith.constant dense<0.000000e+00> : vector<8xf32>
    %74 = vector.multi_reduction <add>, %73, %cst_26 [1] : vector<8x8xf32> to vector<8xf32>
    %75 = vector.shape_cast %74 : vector<8xf32> to vector<8x1xf32>
    %76 = tpu.reciprocal %75 {approx = true} : vector<8x1xf32> -> vector<8x1xf32>
    %77 = vector.broadcast %76 : vector<8x1xf32> to vector<8x8xf32>
    %78 = arith.mulf %73, %77 : vector<8x8xf32>
    %79 = arith.truncf %78 : vector<8x8xf32> to vector<8x8xbf16>
    %cst_27 = arith.constant dense<0.000000e+00> : vector<8x8xf32>
    %80 = tpu.matmul %79, %63, %cst_27 {dimension_numbers = #tpu.dot_dimension_numbers<[1], [0], [0], [1], [0, 0, 1, 1], [], []>} : vector<8x8xbf16>, vector<8x8xbf16>, vector<8x8xf32> -> vector<8x8xf32>
    %c0_28 = arith.constant 0 : index
    %c8 = arith.constant 8 : index
    %81 = vector.load %arg11[%c0_28, %c8] : memref<16x32xf32, #tpu.memory_space<vmem>>, vector<8x8xf32>
    tpu.vector_store %arg11[%c0_28, %c8], %80 {strides = array<i32>} : memref<16x32xf32, #tpu.memory_space<vmem>>, vector<8x8xf32>,
    %82 = vector.extract_strided_slice %32 {offsets = [0, 16], sizes = [8, 8], strides = [1, 1]} : vector<16x96xf32> to vector<8x8xf32>
    %83 = arith.truncf %82 : vector<8x8xf32> to vector<8x8xbf16>
    %84 = vector.extract_strided_slice %32 {offsets = [0, 48], sizes = [8, 8], strides = [1, 1]} : vector<16x96xf32> to vector<8x8xf32>
    %85 = arith.truncf %84 : vector<8x8xf32> to vector<8x8xbf16>
    %86 = vector.extract_strided_slice %32 {offsets = [0, 80], sizes = [8, 8], strides = [1, 1]} : vector<16x96xf32> to vector<8x8xf32>
    %87 = arith.truncf %86 : vector<8x8xf32> to vector<8x8xbf16>
    %cst_29 = arith.constant dense<0.000000e+00> : vector<8x8xf32>
    %88 = tpu.matmul %83, %85, %cst_29 {dimension_numbers = #tpu.dot_dimension_numbers<[1], [1], [0], [0], [0, 0, 1, 0], [], []>} : vector<8x8xbf16>, vector<8x8xbf16>, vector<8x8xf32> -> vector<8x8xf32>
    %cst_30 = arith.constant 0.353553385 : f32
    %89 = vector.broadcast %cst_30 : f32 to vector<8x8xf32>
    %90 = arith.mulf %88, %89 : vector<8x8xf32>
    %91 = vector.broadcast %33 : vector<1x8xf32> to vector<8x8xf32>
    %92 = arith.addf %90, %91 : vector<8x8xf32>
    %cst_31 = arith.constant dense<0xFF800000> : vector<8xf32>
    %93 = vector.multi_reduction <maximumf>, %92, %cst_31 [1] : vector<8x8xf32> to vector<8xf32>
    %94 = vector.shape_cast %93 : vector<8xf32> to vector<8x1xf32>
    %95 = vector.broadcast %94 : vector<8x1xf32> to vector<8x8xf32>
    %96 = arith.subf %92, %95 : vector<8x8xf32>
    %97 = math.exp %96 : vector<8x8xf32>
    %cst_32 = arith.constant dense<0.000000e+00> : vector<8xf32>
    %98 = vector.multi_reduction <add>, %97, %cst_32 [1] : vector<8x8xf32> to vector<8xf32>
    %99 = vector.shape_cast %98 : vector<8xf32> to vector<8x1xf32>
    %100 = tpu.reciprocal %99 {approx = true} : vector<8x1xf32> -> vector<8x1xf32>
    %101 = vector.broadcast %100 : vector<8x1xf32> to vector<8x8xf32>
    %102 = arith.mulf %97, %101 : vector<8x8xf32>
    %103 = arith.truncf %102 : vector<8x8xf32> to vector<8x8xbf16>
    %cst_33 = arith.constant dense<0.000000e+00> : vector<8x8xf32>
    %104 = tpu.matmul %103, %87, %cst_33 {dimension_numbers = #tpu.dot_dimension_numbers<[1], [0], [0], [1], [0, 0, 1, 1], [], []>} : vector<8x8xbf16>, vector<8x8xbf16>, vector<8x8xf32> -> vector<8x8xf32>
    %c0_34 = arith.constant 0 : index
    %c16 = arith.constant 16 : index
    %105 = vector.load %arg11[%c0_34, %c16] : memref<16x32xf32, #tpu.memory_space<vmem>>, vector<8x8xf32>
    tpu.vector_store %arg11[%c0_34, %c16], %104 {strides = array<i32>} : memref<16x32xf32, #tpu.memory_space<vmem>>, vector<8x8xf32>,
    %106 = vector.extract_strided_slice %32 {offsets = [0, 24], sizes = [8, 8], strides = [1, 1]} : vector<16x96xf32> to vector<8x8xf32>
    %107 = arith.truncf %106 : vector<8x8xf32> to vector<8x8xbf16>
    %108 = vector.extract_strided_slice %32 {offsets = [0, 56], sizes = [8, 8], strides = [1, 1]} : vector<16x96xf32> to vector<8x8xf32>
    %109 = arith.truncf %108 : vector<8x8xf32> to vector<8x8xbf16>
    %110 = vector.extract_strided_slice %32 {offsets = [0, 88], sizes = [8, 8], strides = [1, 1]} : vector<16x96xf32> to vector<8x8xf32>
    %111 = arith.truncf %110 : vector<8x8xf32> to vector<8x8xbf16>
    %cst_35 = arith.constant dense<0.000000e+00> : vector<8x8xf32>
    %112 = tpu.matmul %107, %109, %cst_35 {dimension_numbers = #tpu.dot_dimension_numbers<[1], [1], [0], [0], [0, 0, 1, 0], [], []>} : vector<8x8xbf16>, vector<8x8xbf16>, vector<8x8xf32> -> vector<8x8xf32>
    %cst_36 = arith.constant 0.353553385 : f32
    %113 = vector.broadcast %cst_36 : f32 to vector<8x8xf32>
    %114 = arith.mulf %112, %113 : vector<8x8xf32>
    %115 = vector.broadcast %33 : vector<1x8xf32> to vector<8x8xf32>
    %116 = arith.addf %114, %115 : vector<8x8xf32>
    %cst_37 = arith.constant dense<0xFF800000> : vector<8xf32>
    %117 = vector.multi_reduction <maximumf>, %116, %cst_37 [1] : vector<8x8xf32> to vector<8xf32>
    %118 = vector.shape_cast %117 : vector<8xf32> to vector<8x1xf32>
    %119 = vector.broadcast %118 : vector<8x1xf32> to vector<8x8xf32>
    %120 = arith.subf %116, %119 : vector<8x8xf32>
    %121 = math.exp %120 : vector<8x8xf32>
    %cst_38 = arith.constant dense<0.000000e+00> : vector<8xf32>
    %122 = vector.multi_reduction <add>, %121, %cst_38 [1] : vector<8x8xf32> to vector<8xf32>
    %123 = vector.shape_cast %122 : vector<8xf32> to vector<8x1xf32>
    %124 = tpu.reciprocal %123 {approx = true} : vector<8x1xf32> -> vector<8x1xf32>
    %125 = vector.broadcast %124 : vector<8x1xf32> to vector<8x8xf32>
    %126 = arith.mulf %121, %125 : vector<8x8xf32>
    %127 = arith.truncf %126 : vector<8x8xf32> to vector<8x8xbf16>
    %cst_39 = arith.constant dense<0.000000e+00> : vector<8x8xf32>
    %128 = tpu.matmul %127, %111, %cst_39 {dimension_numbers = #tpu.dot_dimension_numbers<[1], [0], [0], [1], [0, 0, 1, 1], [], []>} : vector<8x8xbf16>, vector<8x8xbf16>, vector<8x8xf32> -> vector<8x8xf32>
    %c0_40 = arith.constant 0 : index
    %c24 = arith.constant 24 : index
    %129 = vector.load %arg11[%c0_40, %c24] : memref<16x32xf32, #tpu.memory_space<vmem>>, vector<8x8xf32>
    tpu.vector_store %arg11[%c0_40, %c24], %128 {strides = array<i32>} : memref<16x32xf32, #tpu.memory_space<vmem>>, vector<8x8xf32>,
    %c1 = arith.constant 1 : index
    %c0_41 = arith.constant 0 : index
    %130 = vector.load %arg1[%c1, %c0_41] : memref<2x8xf32, #tpu.memory_space<vmem>>, vector<1x8xf32>
    %131 = vector.extract_strided_slice %32 {offsets = [8, 0], sizes = [8, 8], strides = [1, 1]} : vector<16x96xf32> to vector<8x8xf32>
    %132 = arith.truncf %131 : vector<8x8xf32> to vector<8x8xbf16>
    %133 = vector.extract_strided_slice %32 {offsets = [8, 32], sizes = [8, 8], strides = [1, 1]} : vector<16x96xf32> to vector<8x8xf32>
    %134 = arith.truncf %133 : vector<8x8xf32> to vector<8x8xbf16>
    %135 = vector.extract_strided_slice %32 {offsets = [8, 64], sizes = [8, 8], strides = [1, 1]} : vector<16x96xf32> to vector<8x8xf32>
    %136 = arith.truncf %135 : vector<8x8xf32> to vector<8x8xbf16>
    %cst_42 = arith.constant dense<0.000000e+00> : vector<8x8xf32>
    %137 = tpu.matmul %132, %134, %cst_42 {dimension_numbers = #tpu.dot_dimension_numbers<[1], [1], [0], [0], [0, 0, 1, 0], [], []>} : vector<8x8xbf16>, vector<8x8xbf16>, vector<8x8xf32> -> vector<8x8xf32>
    %cst_43 = arith.constant 0.353553385 : f32
    %138 = vector.broadcast %cst_43 : f32 to vector<8x8xf32>
    %139 = arith.mulf %137, %138 : vector<8x8xf32>
    %140 = vector.broadcast %130 : vector<1x8xf32> to vector<8x8xf32>
    %141 = arith.addf %139, %140 : vector<8x8xf32>
    %cst_44 = arith.constant dense<0xFF800000> : vector<8xf32>
    %142 = vector.multi_reduction <maximumf>, %141, %cst_44 [1] : vector<8x8xf32> to vector<8xf32>
    %143 = vector.shape_cast %142 : vector<8xf32> to vector<8x1xf32>
    %144 = vector.broadcast %143 : vector<8x1xf32> to vector<8x8xf32>
    %145 = arith.subf %141, %144 : vector<8x8xf32>
    %146 = math.exp %145 : vector<8x8xf32>
    %cst_45 = arith.constant dense<0.000000e+00> : vector<8xf32>
    %147 = vector.multi_reduction <add>, %146, %cst_45 [1] : vector<8x8xf32> to vector<8xf32>
    %148 = vector.shape_cast %147 : vector<8xf32> to vector<8x1xf32>
    %149 = tpu.reciprocal %148 {approx = true} : vector<8x1xf32> -> vector<8x1xf32>
    %150 = vector.broadcast %149 : vector<8x1xf32> to vector<8x8xf32>
    %151 = arith.mulf %146, %150 : vector<8x8xf32>
    %152 = arith.truncf %151 : vector<8x8xf32> to vector<8x8xbf16>
    %cst_46 = arith.constant dense<0.000000e+00> : vector<8x8xf32>
    %153 = tpu.matmul %152, %136, %cst_46 {dimension_numbers = #tpu.dot_dimension_numbers<[1], [0], [0], [1], [0, 0, 1, 1], [], []>} : vector<8x8xbf16>, vector<8x8xbf16>, vector<8x8xf32> -> vector<8x8xf32>
    %c8_47 = arith.constant 8 : index
    %c0_48 = arith.constant 0 : index
    %154 = vector.load %arg11[%c8_47, %c0_48] : memref<16x32xf32, #tpu.memory_space<vmem>>, vector<8x8xf32>
    tpu.vector_store %arg11[%c8_47, %c0_48], %153 {strides = array<i32>} : memref<16x32xf32, #tpu.memory_space<vmem>>, vector<8x8xf32>,
    %155 = vector.extract_strided_slice %32 {offsets = [8, 8], sizes = [8, 8], strides = [1, 1]} : vector<16x96xf32> to vector<8x8xf32>
    %156 = arith.truncf %155 : vector<8x8xf32> to vector<8x8xbf16>
    %157 = vector.extract_strided_slice %32 {offsets = [8, 40], sizes = [8, 8], strides = [1, 1]} : vector<16x96xf32> to vector<8x8xf32>
    %158 = arith.truncf %157 : vector<8x8xf32> to vector<8x8xbf16>
    %159 = vector.extract_strided_slice %32 {offsets = [8, 72], sizes = [8, 8], strides = [1, 1]} : vector<16x96xf32> to vector<8x8xf32>
    %160 = arith.truncf %159 : vector<8x8xf32> to vector<8x8xbf16>
    %cst_49 = arith.constant dense<0.000000e+00> : vector<8x8xf32>
    %161 = tpu.matmul %156, %158, %cst_49 {dimension_numbers = #tpu.dot_dimension_numbers<[1], [1], [0], [0], [0, 0, 1, 0], [], []>} : vector<8x8xbf16>, vector<8x8xbf16>, vector<8x8xf32> -> vector<8x8xf32>
    %cst_50 = arith.constant 0.353553385 : f32
    %162 = vector.broadcast %cst_50 : f32 to vector<8x8xf32>
    %163 = arith.mulf %161, %162 : vector<8x8xf32>
    %164 = vector.broadcast %130 : vector<1x8xf32> to vector<8x8xf32>
    %165 = arith.addf %163, %164 : vector<8x8xf32>
    %cst_51 = arith.constant dense<0xFF800000> : vector<8xf32>
    %166 = vector.multi_reduction <maximumf>, %165, %cst_51 [1] : vector<8x8xf32> to vector<8xf32>
    %167 = vector.shape_cast %166 : vector<8xf32> to vector<8x1xf32>
    %168 = vector.broadcast %167 : vector<8x1xf32> to vector<8x8xf32>
    %169 = arith.subf %165, %168 : vector<8x8xf32>
    %170 = math.exp %169 : vector<8x8xf32>
    %cst_52 = arith.constant dense<0.000000e+00> : vector<8xf32>
    %171 = vector.multi_reduction <add>, %170, %cst_52 [1] : vector<8x8xf32> to vector<8xf32>
    %172 = vector.shape_cast %171 : vector<8xf32> to vector<8x1xf32>
    %173 = tpu.reciprocal %172 {approx = true} : vector<8x1xf32> -> vector<8x1xf32>
    %174 = vector.broadcast %173 : vector<8x1xf32> to vector<8x8xf32>
    %175 = arith.mulf %170, %174 : vector<8x8xf32>
    %176 = arith.truncf %175 : vector<8x8xf32> to vector<8x8xbf16>
    %cst_53 = arith.constant dense<0.000000e+00> : vector<8x8xf32>
    %177 = tpu.matmul %176, %160, %cst_53 {dimension_numbers = #tpu.dot_dimension_numbers<[1], [0], [0], [1], [0, 0, 1, 1], [], []>} : vector<8x8xbf16>, vector<8x8xbf16>, vector<8x8xf32> -> vector<8x8xf32>
    %c8_54 = arith.constant 8 : index
    %c8_55 = arith.constant 8 : index
    %178 = vector.load %arg11[%c8_54, %c8_55] : memref<16x32xf32, #tpu.memory_space<vmem>>, vector<8x8xf32>
    tpu.vector_store %arg11[%c8_54, %c8_55], %177 {strides = array<i32>} : memref<16x32xf32, #tpu.memory_space<vmem>>, vector<8x8xf32>,
    %179 = vector.extract_strided_slice %32 {offsets = [8, 16], sizes = [8, 8], strides = [1, 1]} : vector<16x96xf32> to vector<8x8xf32>
    %180 = arith.truncf %179 : vector<8x8xf32> to vector<8x8xbf16>
    %181 = vector.extract_strided_slice %32 {offsets = [8, 48], sizes = [8, 8], strides = [1, 1]} : vector<16x96xf32> to vector<8x8xf32>
    %182 = arith.truncf %181 : vector<8x8xf32> to vector<8x8xbf16>
    %183 = vector.extract_strided_slice %32 {offsets = [8, 80], sizes = [8, 8], strides = [1, 1]} : vector<16x96xf32> to vector<8x8xf32>
    %184 = arith.truncf %183 : vector<8x8xf32> to vector<8x8xbf16>
    %cst_56 = arith.constant dense<0.000000e+00> : vector<8x8xf32>
    %185 = tpu.matmul %180, %182, %cst_56 {dimension_numbers = #tpu.dot_dimension_numbers<[1], [1], [0], [0], [0, 0, 1, 0], [], []>} : vector<8x8xbf16>, vector<8x8xbf16>, vector<8x8xf32> -> vector<8x8xf32>
    %cst_57 = arith.constant 0.353553385 : f32
    %186 = vector.broadcast %cst_57 : f32 to vector<8x8xf32>
    %187 = arith.mulf %185, %186 : vector<8x8xf32>
    %188 = vector.broadcast %130 : vector<1x8xf32> to vector<8x8xf32>
    %189 = arith.addf %187, %188 : vector<8x8xf32>
    %cst_58 = arith.constant dense<0xFF800000> : vector<8xf32>
    %190 = vector.multi_reduction <maximumf>, %189, %cst_58 [1] : vector<8x8xf32> to vector<8xf32>
    %191 = vector.shape_cast %190 : vector<8xf32> to vector<8x1xf32>
    %192 = vector.broadcast %191 : vector<8x1xf32> to vector<8x8xf32>
    %193 = arith.subf %189, %192 : vector<8x8xf32>
    %194 = math.exp %193 : vector<8x8xf32>
    %cst_59 = arith.constant dense<0.000000e+00> : vector<8xf32>
    %195 = vector.multi_reduction <add>, %194, %cst_59 [1] : vector<8x8xf32> to vector<8xf32>
    %196 = vector.shape_cast %195 : vector<8xf32> to vector<8x1xf32>
    %197 = tpu.reciprocal %196 {approx = true} : vector<8x1xf32> -> vector<8x1xf32>
    %198 = vector.broadcast %197 : vector<8x1xf32> to vector<8x8xf32>
    %199 = arith.mulf %194, %198 : vector<8x8xf32>
    %200 = arith.truncf %199 : vector<8x8xf32> to vector<8x8xbf16>
    %cst_60 = arith.constant dense<0.000000e+00> : vector<8x8xf32>
    %201 = tpu.matmul %200, %184, %cst_60 {dimension_numbers = #tpu.dot_dimension_numbers<[1], [0], [0], [1], [0, 0, 1, 1], [], []>} : vector<8x8xbf16>, vector<8x8xbf16>, vector<8x8xf32> -> vector<8x8xf32>
    %c8_61 = arith.constant 8 : index
    %c16_62 = arith.constant 16 : index
    %202 = vector.load %arg11[%c8_61, %c16_62] : memref<16x32xf32, #tpu.memory_space<vmem>>, vector<8x8xf32>
    tpu.vector_store %arg11[%c8_61, %c16_62], %201 {strides = array<i32>} : memref<16x32xf32, #tpu.memory_space<vmem>>, vector<8x8xf32>,
    %203 = vector.extract_strided_slice %32 {offsets = [8, 24], sizes = [8, 8], strides = [1, 1]} : vector<16x96xf32> to vector<8x8xf32>
    %204 = arith.truncf %203 : vector<8x8xf32> to vector<8x8xbf16>
    %205 = vector.extract_strided_slice %32 {offsets = [8, 56], sizes = [8, 8], strides = [1, 1]} : vector<16x96xf32> to vector<8x8xf32>
    %206 = arith.truncf %205 : vector<8x8xf32> to vector<8x8xbf16>
    %207 = vector.extract_strided_slice %32 {offsets = [8, 88], sizes = [8, 8], strides = [1, 1]} : vector<16x96xf32> to vector<8x8xf32>
    %208 = arith.truncf %207 : vector<8x8xf32> to vector<8x8xbf16>
    %cst_63 = arith.constant dense<0.000000e+00> : vector<8x8xf32>
    %209 = tpu.matmul %204, %206, %cst_63 {dimension_numbers = #tpu.dot_dimension_numbers<[1], [1], [0], [0], [0, 0, 1, 0], [], []>} : vector<8x8xbf16>, vector<8x8xbf16>, vector<8x8xf32> -> vector<8x8xf32>
    %cst_64 = arith.constant 0.353553385 : f32
    %210 = vector.broadcast %cst_64 : f32 to vector<8x8xf32>
    %211 = arith.mulf %209, %210 : vector<8x8xf32>
    %212 = vector.broadcast %130 : vector<1x8xf32> to vector<8x8xf32>
    %213 = arith.addf %211, %212 : vector<8x8xf32>
    %cst_65 = arith.constant dense<0xFF800000> : vector<8xf32>
    %214 = vector.multi_reduction <maximumf>, %213, %cst_65 [1] : vector<8x8xf32> to vector<8xf32>
    %215 = vector.shape_cast %214 : vector<8xf32> to vector<8x1xf32>
    %216 = vector.broadcast %215 : vector<8x1xf32> to vector<8x8xf32>
    %217 = arith.subf %213, %216 : vector<8x8xf32>
    %218 = math.exp %217 : vector<8x8xf32>
    %cst_66 = arith.constant dense<0.000000e+00> : vector<8xf32>
    %219 = vector.multi_reduction <add>, %218, %cst_66 [1] : vector<8x8xf32> to vector<8xf32>
    %220 = vector.shape_cast %219 : vector<8xf32> to vector<8x1xf32>
    %221 = tpu.reciprocal %220 {approx = true} : vector<8x1xf32> -> vector<8x1xf32>
    %222 = vector.broadcast %221 : vector<8x1xf32> to vector<8x8xf32>
    %223 = arith.mulf %218, %222 : vector<8x8xf32>
    %224 = arith.truncf %223 : vector<8x8xf32> to vector<8x8xbf16>
    %cst_67 = arith.constant dense<0.000000e+00> : vector<8x8xf32>
    %225 = tpu.matmul %224, %208, %cst_67 {dimension_numbers = #tpu.dot_dimension_numbers<[1], [0], [0], [1], [0, 0, 1, 1], [], []>} : vector<8x8xbf16>, vector<8x8xbf16>, vector<8x8xf32> -> vector<8x8xf32>
    %c8_68 = arith.constant 8 : index
    %c24_69 = arith.constant 24 : index
    %226 = vector.load %arg11[%c8_68, %c24_69] : memref<16x32xf32, #tpu.memory_space<vmem>>, vector<8x8xf32>
    tpu.vector_store %arg11[%c8_68, %c24_69], %225 {strides = array<i32>} : memref<16x32xf32, #tpu.memory_space<vmem>>, vector<8x8xf32>,
    %c0_70 = arith.constant 0 : index
    %c0_71 = arith.constant 0 : index
    %227 = vector.load %arg11[%c0_70, %c0_71] : memref<16x32xf32, #tpu.memory_space<vmem>>, vector<16x32xf32>
    %228 = arith.truncf %227 : vector<16x32xf32> to vector<16x32xbf16>
    %c0_72 = arith.constant 0 : index
    %c0_73 = arith.constant 0 : index
    %c0_74 = arith.constant 0 : index
    %229 = vector.load %arg4[%c0_72, %c0_73, %c0_74] : memref<2x32x32xbf16, #tpu.memory_space<vmem>>, vector<1x32x32xbf16>
    %230 = vector.shape_cast %229 : vector<1x32x32xbf16> to vector<32x32xbf16>
    %cst_75 = arith.constant dense<0.000000e+00> : vector<16x32xf32>
    %231 = tpu.matmul %228, %230, %cst_75 {dimension_numbers = #tpu.dot_dimension_numbers<[1], [0], [0], [1], [0, 0, 1, 1], [], []>} : vector<16x32xbf16>, vector<32x32xbf16>, vector<16x32xf32> -> vector<16x32xf32>
    %232 = vector.extract_strided_slice %25 {offsets = [1, 0], sizes = [1, 32], strides = [1, 1]} : vector<8x96xf32> to vector<1x32xf32>
    %233 = vector.broadcast %232 : vector<1x32xf32> to vector<16x32xf32>
    %234 = arith.addf %231, %233 : vector<16x32xf32>
    %235 = arith.addf %23, %234 : vector<16x32xf32>
    %236 = vector.extract_strided_slice %25 {offsets = [2, 0], sizes = [1, 32], strides = [1, 1]} : vector<8x96xf32> to vector<1x32xf32>
    %237 = vector.extract_strided_slice %25 {offsets = [3, 0], sizes = [1, 32], strides = [1, 1]} : vector<8x96xf32> to vector<1x32xf32>
    %cst_76 = arith.constant dense<0.000000e+00> : vector<16xf32>
    %238 = vector.multi_reduction <add>, %235, %cst_76 [1] : vector<16x32xf32> to vector<16xf32>
    %239 = vector.shape_cast %238 : vector<16xf32> to vector<16x1xf32>
    %cst_77 = arith.constant 3.200000e+01 : f32
    %240 = vector.broadcast %cst_77 : f32 to vector<16x1xf32>
    %241 = arith.divf %239, %240 : vector<16x1xf32>
    %242 = vector.broadcast %241 : vector<16x1xf32> to vector<16x32xf32>
    %243 = arith.subf %235, %242 : vector<16x32xf32>
    %244 = arith.mulf %243, %243 : vector<16x32xf32>
    %cst_78 = arith.constant dense<0.000000e+00> : vector<16xf32>
    %245 = vector.multi_reduction <add>, %244, %cst_78 [1] : vector<16x32xf32> to vector<16xf32>
    %246 = vector.shape_cast %245 : vector<16xf32> to vector<16x1xf32>
    %cst_79 = arith.constant 3.200000e+01 : f32
    %247 = vector.broadcast %cst_79 : f32 to vector<16x1xf32>
    %248 = arith.divf %246, %247 : vector<16x1xf32>
    %cst_80 = arith.constant 9.99999996E-13 : f32
    %249 = vector.broadcast %cst_80 : f32 to vector<16x1xf32>
    %250 = arith.addf %248, %249 : vector<16x1xf32>
    %251 = math.rsqrt %250 : vector<16x1xf32>
    %252 = vector.broadcast %251 : vector<16x1xf32> to vector<16x32xf32>
    %253 = arith.mulf %243, %252 : vector<16x32xf32>
    %254 = vector.broadcast %236 : vector<1x32xf32> to vector<16x32xf32>
    %255 = arith.mulf %253, %254 : vector<16x32xf32>
    %256 = vector.broadcast %237 : vector<1x32xf32> to vector<16x32xf32>
    %257 = arith.addf %255, %256 : vector<16x32xf32>
    %258 = arith.truncf %257 : vector<16x32xf32> to vector<16x32xbf16>
    %c0_81 = arith.constant 0 : index
    %c0_82 = arith.constant 0 : index
    %c0_83 = arith.constant 0 : index
    %259 = vector.load %arg5[%c0_81, %c0_82, %c0_83] : memref<2x32x64xbf16, #tpu.memory_space<vmem>>, vector<1x32x64xbf16>
    %260 = vector.shape_cast %259 : vector<1x32x64xbf16> to vector<32x64xbf16>
    %cst_84 = arith.constant dense<0.000000e+00> : vector<16x64xf32>
    %261 = tpu.matmul %258, %260, %cst_84 {dimension_numbers = #tpu.dot_dimension_numbers<[1], [0], [0], [1], [0, 0, 1, 1], [], []>} : vector<16x32xbf16>, vector<32x64xbf16>, vector<16x64xf32> -> vector<16x64xf32>
    %262 = vector.extract_strided_slice %25 {offsets = [4, 0], sizes = [1, 64], strides = [1, 1]} : vector<8x96xf32> to vector<1x64xf32>
    %263 = vector.broadcast %262 : vector<1x64xf32> to vector<16x64xf32>
    %264 = arith.addf %261, %263 : vector<16x64xf32>
    %cst_85 = arith.constant 5.000000e-01 : f32
    %265 = vector.broadcast %cst_85 : f32 to vector<16x64xf32>
    %266 = arith.mulf %265, %264 : vector<16x64xf32>
    %cst_86 = arith.constant 4.471500e-02 : f32
    %267 = vector.broadcast %cst_86 : f32 to vector<16x64xf32>
    %268 = arith.mulf %267, %264 : vector<16x64xf32>
    %269 = arith.mulf %268, %264 : vector<16x64xf32>
    %270 = arith.mulf %269, %264 : vector<16x64xf32>
    %271 = arith.addf %264, %270 : vector<16x64xf32>
    %cst_87 = arith.constant 0.797884583 : f32
    %272 = vector.broadcast %cst_87 : f32 to vector<16x64xf32>
    %273 = arith.mulf %272, %271 : vector<16x64xf32>
    %274 = math.tanh %273 : vector<16x64xf32>
    %cst_88 = arith.constant 1.000000e+00 : f32
    %275 = vector.broadcast %cst_88 : f32 to vector<16x64xf32>
    %276 = arith.addf %275, %274 : vector<16x64xf32>
    %277 = arith.mulf %266, %276 : vector<16x64xf32>
    %278 = arith.truncf %277 : vector<16x64xf32> to vector<16x64xbf16>
    %c0_89 = arith.constant 0 : index
    %c0_90 = arith.constant 0 : index
    %c0_91 = arith.constant 0 : index
    %279 = vector.load %arg6[%c0_89, %c0_90, %c0_91] : memref<2x64x32xbf16, #tpu.memory_space<vmem>>, vector<1x64x32xbf16>
    %280 = vector.shape_cast %279 : vector<1x64x32xbf16> to vector<64x32xbf16>
    %cst_92 = arith.constant dense<0.000000e+00> : vector<16x32xf32>
    %281 = tpu.matmul %278, %280, %cst_92 {dimension_numbers = #tpu.dot_dimension_numbers<[1], [0], [0], [1], [0, 0, 1, 1], [], []>} : vector<16x64xbf16>, vector<64x32xbf16>, vector<16x32xf32> -> vector<16x32xf32>
    %282 = vector.extract_strided_slice %25 {offsets = [5, 0], sizes = [1, 32], strides = [1, 1]} : vector<8x96xf32> to vector<1x32xf32>
    %283 = vector.broadcast %282 : vector<1x32xf32> to vector<16x32xf32>
    %284 = arith.addf %281, %283 : vector<16x32xf32>
    %285 = arith.addf %257, %284 : vector<16x32xf32>
    %286 = vector.extract_strided_slice %25 {offsets = [6, 0], sizes = [1, 32], strides = [1, 1]} : vector<8x96xf32> to vector<1x32xf32>
    %287 = vector.extract_strided_slice %25 {offsets = [7, 0], sizes = [1, 32], strides = [1, 1]} : vector<8x96xf32> to vector<1x32xf32>
    %cst_93 = arith.constant dense<0.000000e+00> : vector<16xf32>
    %288 = vector.multi_reduction <add>, %285, %cst_93 [1] : vector<16x32xf32> to vector<16xf32>
    %289 = vector.shape_cast %288 : vector<16xf32> to vector<16x1xf32>
    %cst_94 = arith.constant 3.200000e+01 : f32
    %290 = vector.broadcast %cst_94 : f32 to vector<16x1xf32>
    %291 = arith.divf %289, %290 : vector<16x1xf32>
    %292 = vector.broadcast %291 : vector<16x1xf32> to vector<16x32xf32>
    %293 = arith.subf %285, %292 : vector<16x32xf32>
    %294 = arith.mulf %293, %293 : vector<16x32xf32>
    %cst_95 = arith.constant dense<0.000000e+00> : vector<16xf32>
    %295 = vector.multi_reduction <add>, %294, %cst_95 [1] : vector<16x32xf32> to vector<16xf32>
    %296 = vector.shape_cast %295 : vector<16xf32> to vector<16x1xf32>
    %cst_96 = arith.constant 3.200000e+01 : f32
    %297 = vector.broadcast %cst_96 : f32 to vector<16x1xf32>
    %298 = arith.divf %296, %297 : vector<16x1xf32>
    %cst_97 = arith.constant 9.99999996E-13 : f32
    %299 = vector.broadcast %cst_97 : f32 to vector<16x1xf32>
    %300 = arith.addf %298, %299 : vector<16x1xf32>
    %301 = math.rsqrt %300 : vector<16x1xf32>
    %302 = vector.broadcast %301 : vector<16x1xf32> to vector<16x32xf32>
    %303 = arith.mulf %293, %302 : vector<16x32xf32>
    %304 = vector.broadcast %286 : vector<1x32xf32> to vector<16x32xf32>
    %305 = arith.mulf %303, %304 : vector<16x32xf32>
    %306 = vector.broadcast %287 : vector<1x32xf32> to vector<16x32xf32>
    %307 = arith.addf %305, %306 : vector<16x32xf32>
    %c1_98 = arith.constant 1 : index
    %c0_99 = arith.constant 0 : index
    %c0_100 = arith.constant 0 : index
    %308 = vector.load %arg7[%c1_98, %c0_99, %c0_100] : memref<2x8x96xf32, #tpu.memory_space<vmem>>, vector<1x8x96xf32>
    %309 = vector.shape_cast %308 : vector<1x8x96xf32> to vector<8x96xf32>
    %310 = arith.truncf %307 : vector<16x32xf32> to vector<16x32xbf16>
    %c1_101 = arith.constant 1 : index
    %c0_102 = arith.constant 0 : index
    %c0_103 = arith.constant 0 : index
    %311 = vector.load %arg3[%c1_101, %c0_102, %c0_103] : memref<2x32x96xbf16, #tpu.memory_space<vmem>>, vector<1x32x96xbf16>
    %312 = vector.shape_cast %311 : vector<1x32x96xbf16> to vector<32x96xbf16>
    %cst_104 = arith.constant dense<0.000000e+00> : vector<16x96xf32>
    %313 = tpu.matmul %310, %312, %cst_104 {dimension_numbers = #tpu.dot_dimension_numbers<[1], [0], [0], [1], [0, 0, 1, 1], [], []>} : vector<16x32xbf16>, vector<32x96xbf16>, vector<16x96xf32> -> vector<16x96xf32>
    %314 = vector.extract_strided_slice %309 {offsets = [0, 0], sizes = [1, 96], strides = [1, 1]} : vector<8x96xf32> to vector<1x96xf32>
    %315 = vector.broadcast %314 : vector<1x96xf32> to vector<16x96xf32>
    %316 = arith.addf %313, %315 : vector<16x96xf32>
    %c0_105 = arith.constant 0 : index
    %c0_106 = arith.constant 0 : index
    %317 = vector.load %arg1[%c0_105, %c0_106] : memref<2x8xf32, #tpu.memory_space<vmem>>, vector<1x8xf32>
    %318 = vector.extract_strided_slice %316 {offsets = [0, 0], sizes = [8, 8], strides = [1, 1]} : vector<16x96xf32> to vector<8x8xf32>
    %319 = arith.truncf %318 : vector<8x8xf32> to vector<8x8xbf16>
    %320 = vector.extract_strided_slice %316 {offsets = [0, 32], sizes = [8, 8], strides = [1, 1]} : vector<16x96xf32> to vector<8x8xf32>
    %321 = arith.truncf %320 : vector<8x8xf32> to vector<8x8xbf16>
    %322 = vector.extract_strided_slice %316 {offsets = [0, 64], sizes = [8, 8], strides = [1, 1]} : vector<16x96xf32> to vector<8x8xf32>
    %323 = arith.truncf %322 : vector<8x8xf32> to vector<8x8xbf16>
    %cst_107 = arith.constant dense<0.000000e+00> : vector<8x8xf32>
    %324 = tpu.matmul %319, %321, %cst_107 {dimension_numbers = #tpu.dot_dimension_numbers<[1], [1], [0], [0], [0, 0, 1, 0], [], []>} : vector<8x8xbf16>, vector<8x8xbf16>, vector<8x8xf32> -> vector<8x8xf32>
    %cst_108 = arith.constant 0.353553385 : f32
    %325 = vector.broadcast %cst_108 : f32 to vector<8x8xf32>
    %326 = arith.mulf %324, %325 : vector<8x8xf32>
    %327 = vector.broadcast %317 : vector<1x8xf32> to vector<8x8xf32>
    %328 = arith.addf %326, %327 : vector<8x8xf32>
    %cst_109 = arith.constant dense<0xFF800000> : vector<8xf32>
    %329 = vector.multi_reduction <maximumf>, %328, %cst_109 [1] : vector<8x8xf32> to vector<8xf32>
    %330 = vector.shape_cast %329 : vector<8xf32> to vector<8x1xf32>
    %331 = vector.broadcast %330 : vector<8x1xf32> to vector<8x8xf32>
    %332 = arith.subf %328, %331 : vector<8x8xf32>
    %333 = math.exp %332 : vector<8x8xf32>
    %cst_110 = arith.constant dense<0.000000e+00> : vector<8xf32>
    %334 = vector.multi_reduction <add>, %333, %cst_110 [1] : vector<8x8xf32> to vector<8xf32>
    %335 = vector.shape_cast %334 : vector<8xf32> to vector<8x1xf32>
    %336 = tpu.reciprocal %335 {approx = true} : vector<8x1xf32> -> vector<8x1xf32>
    %337 = vector.broadcast %336 : vector<8x1xf32> to vector<8x8xf32>
    %338 = arith.mulf %333, %337 : vector<8x8xf32>
    %339 = arith.truncf %338 : vector<8x8xf32> to vector<8x8xbf16>
    %cst_111 = arith.constant dense<0.000000e+00> : vector<8x8xf32>
    %340 = tpu.matmul %339, %323, %cst_111 {dimension_numbers = #tpu.dot_dimension_numbers<[1], [0], [0], [1], [0, 0, 1, 1], [], []>} : vector<8x8xbf16>, vector<8x8xbf16>, vector<8x8xf32> -> vector<8x8xf32>
    %c0_112 = arith.constant 0 : index
    %c0_113 = arith.constant 0 : index
    %341 = vector.load %arg11[%c0_112, %c0_113] : memref<16x32xf32, #tpu.memory_space<vmem>>, vector<8x8xf32>
    tpu.vector_store %arg11[%c0_112, %c0_113], %340 {strides = array<i32>} : memref<16x32xf32, #tpu.memory_space<vmem>>, vector<8x8xf32>,
    %342 = vector.extract_strided_slice %316 {offsets = [0, 8], sizes = [8, 8], strides = [1, 1]} : vector<16x96xf32> to vector<8x8xf32>
    %343 = arith.truncf %342 : vector<8x8xf32> to vector<8x8xbf16>
    %344 = vector.extract_strided_slice %316 {offsets = [0, 40], sizes = [8, 8], strides = [1, 1]} : vector<16x96xf32> to vector<8x8xf32>
    %345 = arith.truncf %344 : vector<8x8xf32> to vector<8x8xbf16>
    %346 = vector.extract_strided_slice %316 {offsets = [0, 72], sizes = [8, 8], strides = [1, 1]} : vector<16x96xf32> to vector<8x8xf32>
    %347 = arith.truncf %346 : vector<8x8xf32> to vector<8x8xbf16>
    %cst_114 = arith.constant dense<0.000000e+00> : vector<8x8xf32>
    %348 = tpu.matmul %343, %345, %cst_114 {dimension_numbers = #tpu.dot_dimension_numbers<[1], [1], [0], [0], [0, 0, 1, 0], [], []>} : vector<8x8xbf16>, vector<8x8xbf16>, vector<8x8xf32> -> vector<8x8xf32>
    %cst_115 = arith.constant 0.353553385 : f32
    %349 = vector.broadcast %cst_115 : f32 to vector<8x8xf32>
    %350 = arith.mulf %348, %349 : vector<8x8xf32>
    %351 = vector.broadcast %317 : vector<1x8xf32> to vector<8x8xf32>
    %352 = arith.addf %350, %351 : vector<8x8xf32>
    %cst_116 = arith.constant dense<0xFF800000> : vector<8xf32>
    %353 = vector.multi_reduction <maximumf>, %352, %cst_116 [1] : vector<8x8xf32> to vector<8xf32>
    %354 = vector.shape_cast %353 : vector<8xf32> to vector<8x1xf32>
    %355 = vector.broadcast %354 : vector<8x1xf32> to vector<8x8xf32>
    %356 = arith.subf %352, %355 : vector<8x8xf32>
    %357 = math.exp %356 : vector<8x8xf32>
    %cst_117 = arith.constant dense<0.000000e+00> : vector<8xf32>
    %358 = vector.multi_reduction <add>, %357, %cst_117 [1] : vector<8x8xf32> to vector<8xf32>
    %359 = vector.shape_cast %358 : vector<8xf32> to vector<8x1xf32>
    %360 = tpu.reciprocal %359 {approx = true} : vector<8x1xf32> -> vector<8x1xf32>
    %361 = vector.broadcast %360 : vector<8x1xf32> to vector<8x8xf32>
    %362 = arith.mulf %357, %361 : vector<8x8xf32>
    %363 = arith.truncf %362 : vector<8x8xf32> to vector<8x8xbf16>
    %cst_118 = arith.constant dense<0.000000e+00> : vector<8x8xf32>
    %364 = tpu.matmul %363, %347, %cst_118 {dimension_numbers = #tpu.dot_dimension_numbers<[1], [0], [0], [1], [0, 0, 1, 1], [], []>} : vector<8x8xbf16>, vector<8x8xbf16>, vector<8x8xf32> -> vector<8x8xf32>
    %c0_119 = arith.constant 0 : index
    %c8_120 = arith.constant 8 : index
    %365 = vector.load %arg11[%c0_119, %c8_120] : memref<16x32xf32, #tpu.memory_space<vmem>>, vector<8x8xf32>
    tpu.vector_store %arg11[%c0_119, %c8_120], %364 {strides = array<i32>} : memref<16x32xf32, #tpu.memory_space<vmem>>, vector<8x8xf32>,
    %366 = vector.extract_strided_slice %316 {offsets = [0, 16], sizes = [8, 8], strides = [1, 1]} : vector<16x96xf32> to vector<8x8xf32>
    %367 = arith.truncf %366 : vector<8x8xf32> to vector<8x8xbf16>
    %368 = vector.extract_strided_slice %316 {offsets = [0, 48], sizes = [8, 8], strides = [1, 1]} : vector<16x96xf32> to vector<8x8xf32>
    %369 = arith.truncf %368 : vector<8x8xf32> to vector<8x8xbf16>
    %370 = vector.extract_strided_slice %316 {offsets = [0, 80], sizes = [8, 8], strides = [1, 1]} : vector<16x96xf32> to vector<8x8xf32>
    %371 = arith.truncf %370 : vector<8x8xf32> to vector<8x8xbf16>
    %cst_121 = arith.constant dense<0.000000e+00> : vector<8x8xf32>
    %372 = tpu.matmul %367, %369, %cst_121 {dimension_numbers = #tpu.dot_dimension_numbers<[1], [1], [0], [0], [0, 0, 1, 0], [], []>} : vector<8x8xbf16>, vector<8x8xbf16>, vector<8x8xf32> -> vector<8x8xf32>
    %cst_122 = arith.constant 0.353553385 : f32
    %373 = vector.broadcast %cst_122 : f32 to vector<8x8xf32>
    %374 = arith.mulf %372, %373 : vector<8x8xf32>
    %375 = vector.broadcast %317 : vector<1x8xf32> to vector<8x8xf32>
    %376 = arith.addf %374, %375 : vector<8x8xf32>
    %cst_123 = arith.constant dense<0xFF800000> : vector<8xf32>
    %377 = vector.multi_reduction <maximumf>, %376, %cst_123 [1] : vector<8x8xf32> to vector<8xf32>
    %378 = vector.shape_cast %377 : vector<8xf32> to vector<8x1xf32>
    %379 = vector.broadcast %378 : vector<8x1xf32> to vector<8x8xf32>
    %380 = arith.subf %376, %379 : vector<8x8xf32>
    %381 = math.exp %380 : vector<8x8xf32>
    %cst_124 = arith.constant dense<0.000000e+00> : vector<8xf32>
    %382 = vector.multi_reduction <add>, %381, %cst_124 [1] : vector<8x8xf32> to vector<8xf32>
    %383 = vector.shape_cast %382 : vector<8xf32> to vector<8x1xf32>
    %384 = tpu.reciprocal %383 {approx = true} : vector<8x1xf32> -> vector<8x1xf32>
    %385 = vector.broadcast %384 : vector<8x1xf32> to vector<8x8xf32>
    %386 = arith.mulf %381, %385 : vector<8x8xf32>
    %387 = arith.truncf %386 : vector<8x8xf32> to vector<8x8xbf16>
    %cst_125 = arith.constant dense<0.000000e+00> : vector<8x8xf32>
    %388 = tpu.matmul %387, %371, %cst_125 {dimension_numbers = #tpu.dot_dimension_numbers<[1], [0], [0], [1], [0, 0, 1, 1], [], []>} : vector<8x8xbf16>, vector<8x8xbf16>, vector<8x8xf32> -> vector<8x8xf32>
    %c0_126 = arith.constant 0 : index
    %c16_127 = arith.constant 16 : index
    %389 = vector.load %arg11[%c0_126, %c16_127] : memref<16x32xf32, #tpu.memory_space<vmem>>, vector<8x8xf32>
    tpu.vector_store %arg11[%c0_126, %c16_127], %388 {strides = array<i32>} : memref<16x32xf32, #tpu.memory_space<vmem>>, vector<8x8xf32>,
    %390 = vector.extract_strided_slice %316 {offsets = [0, 24], sizes = [8, 8], strides = [1, 1]} : vector<16x96xf32> to vector<8x8xf32>
    %391 = arith.truncf %390 : vector<8x8xf32> to vector<8x8xbf16>
    %392 = vector.extract_strided_slice %316 {offsets = [0, 56], sizes = [8, 8], strides = [1, 1]} : vector<16x96xf32> to vector<8x8xf32>
    %393 = arith.truncf %392 : vector<8x8xf32> to vector<8x8xbf16>
    %394 = vector.extract_strided_slice %316 {offsets = [0, 88], sizes = [8, 8], strides = [1, 1]} : vector<16x96xf32> to vector<8x8xf32>
    %395 = arith.truncf %394 : vector<8x8xf32> to vector<8x8xbf16>
    %cst_128 = arith.constant dense<0.000000e+00> : vector<8x8xf32>
    %396 = tpu.matmul %391, %393, %cst_128 {dimension_numbers = #tpu.dot_dimension_numbers<[1], [1], [0], [0], [0, 0, 1, 0], [], []>} : vector<8x8xbf16>, vector<8x8xbf16>, vector<8x8xf32> -> vector<8x8xf32>
    %cst_129 = arith.constant 0.353553385 : f32
    %397 = vector.broadcast %cst_129 : f32 to vector<8x8xf32>
    %398 = arith.mulf %396, %397 : vector<8x8xf32>
    %399 = vector.broadcast %317 : vector<1x8xf32> to vector<8x8xf32>
    %400 = arith.addf %398, %399 : vector<8x8xf32>
    %cst_130 = arith.constant dense<0xFF800000> : vector<8xf32>
    %401 = vector.multi_reduction <maximumf>, %400, %cst_130 [1] : vector<8x8xf32> to vector<8xf32>
    %402 = vector.shape_cast %401 : vector<8xf32> to vector<8x1xf32>
    %403 = vector.broadcast %402 : vector<8x1xf32> to vector<8x8xf32>
    %404 = arith.subf %400, %403 : vector<8x8xf32>
    %405 = math.exp %404 : vector<8x8xf32>
    %cst_131 = arith.constant dense<0.000000e+00> : vector<8xf32>
    %406 = vector.multi_reduction <add>, %405, %cst_131 [1] : vector<8x8xf32> to vector<8xf32>
    %407 = vector.shape_cast %406 : vector<8xf32> to vector<8x1xf32>
    %408 = tpu.reciprocal %407 {approx = true} : vector<8x1xf32> -> vector<8x1xf32>
    %409 = vector.broadcast %408 : vector<8x1xf32> to vector<8x8xf32>
    %410 = arith.mulf %405, %409 : vector<8x8xf32>
    %411 = arith.truncf %410 : vector<8x8xf32> to vector<8x8xbf16>
    %cst_132 = arith.constant dense<0.000000e+00> : vector<8x8xf32>
    %412 = tpu.matmul %411, %395, %cst_132 {dimension_numbers = #tpu.dot_dimension_numbers<[1], [0], [0], [1], [0, 0, 1, 1], [], []>} : vector<8x8xbf16>, vector<8x8xbf16>, vector<8x8xf32> -> vector<8x8xf32>
    %c0_133 = arith.constant 0 : index
    %c24_134 = arith.constant 24 : index
    %413 = vector.load %arg11[%c0_133, %c24_134] : memref<16x32xf32, #tpu.memory_space<vmem>>, vector<8x8xf32>
    tpu.vector_store %arg11[%c0_133, %c24_134], %412 {strides = array<i32>} : memref<16x32xf32, #tpu.memory_space<vmem>>, vector<8x8xf32>,
    %c1_135 = arith.constant 1 : index
    %c0_136 = arith.constant 0 : index
    %414 = vector.load %arg1[%c1_135, %c0_136] : memref<2x8xf32, #tpu.memory_space<vmem>>, vector<1x8xf32>
    %415 = vector.extract_strided_slice %316 {offsets = [8, 0], sizes = [8, 8], strides = [1, 1]} : vector<16x96xf32> to vector<8x8xf32>
    %416 = arith.truncf %415 : vector<8x8xf32> to vector<8x8xbf16>
    %417 = vector.extract_strided_slice %316 {offsets = [8, 32], sizes = [8, 8], strides = [1, 1]} : vector<16x96xf32> to vector<8x8xf32>
    %418 = arith.truncf %417 : vector<8x8xf32> to vector<8x8xbf16>
    %419 = vector.extract_strided_slice %316 {offsets = [8, 64], sizes = [8, 8], strides = [1, 1]} : vector<16x96xf32> to vector<8x8xf32>
    %420 = arith.truncf %419 : vector<8x8xf32> to vector<8x8xbf16>
    %cst_137 = arith.constant dense<0.000000e+00> : vector<8x8xf32>
    %421 = tpu.matmul %416, %418, %cst_137 {dimension_numbers = #tpu.dot_dimension_numbers<[1], [1], [0], [0], [0, 0, 1, 0], [], []>} : vector<8x8xbf16>, vector<8x8xbf16>, vector<8x8xf32> -> vector<8x8xf32>
    %cst_138 = arith.constant 0.353553385 : f32
    %422 = vector.broadcast %cst_138 : f32 to vector<8x8xf32>
    %423 = arith.mulf %421, %422 : vector<8x8xf32>
    %424 = vector.broadcast %414 : vector<1x8xf32> to vector<8x8xf32>
    %425 = arith.addf %423, %424 : vector<8x8xf32>
    %cst_139 = arith.constant dense<0xFF800000> : vector<8xf32>
    %426 = vector.multi_reduction <maximumf>, %425, %cst_139 [1] : vector<8x8xf32> to vector<8xf32>
    %427 = vector.shape_cast %426 : vector<8xf32> to vector<8x1xf32>
    %428 = vector.broadcast %427 : vector<8x1xf32> to vector<8x8xf32>
    %429 = arith.subf %425, %428 : vector<8x8xf32>
    %430 = math.exp %429 : vector<8x8xf32>
    %cst_140 = arith.constant dense<0.000000e+00> : vector<8xf32>
    %431 = vector.multi_reduction <add>, %430, %cst_140 [1] : vector<8x8xf32> to vector<8xf32>
    %432 = vector.shape_cast %431 : vector<8xf32> to vector<8x1xf32>
    %433 = tpu.reciprocal %432 {approx = true} : vector<8x1xf32> -> vector<8x1xf32>
    %434 = vector.broadcast %433 : vector<8x1xf32> to vector<8x8xf32>
    %435 = arith.mulf %430, %434 : vector<8x8xf32>
    %436 = arith.truncf %435 : vector<8x8xf32> to vector<8x8xbf16>
    %cst_141 = arith.constant dense<0.000000e+00> : vector<8x8xf32>
    %437 = tpu.matmul %436, %420, %cst_141 {dimension_numbers = #tpu.dot_dimension_numbers<[1], [0], [0], [1], [0, 0, 1, 1], [], []>} : vector<8x8xbf16>, vector<8x8xbf16>, vector<8x8xf32> -> vector<8x8xf32>
    %c8_142 = arith.constant 8 : index
    %c0_143 = arith.constant 0 : index
    %438 = vector.load %arg11[%c8_142, %c0_143] : memref<16x32xf32, #tpu.memory_space<vmem>>, vector<8x8xf32>
    tpu.vector_store %arg11[%c8_142, %c0_143], %437 {strides = array<i32>} : memref<16x32xf32, #tpu.memory_space<vmem>>, vector<8x8xf32>,
    %439 = vector.extract_strided_slice %316 {offsets = [8, 8], sizes = [8, 8], strides = [1, 1]} : vector<16x96xf32> to vector<8x8xf32>
    %440 = arith.truncf %439 : vector<8x8xf32> to vector<8x8xbf16>
    %441 = vector.extract_strided_slice %316 {offsets = [8, 40], sizes = [8, 8], strides = [1, 1]} : vector<16x96xf32> to vector<8x8xf32>
    %442 = arith.truncf %441 : vector<8x8xf32> to vector<8x8xbf16>
    %443 = vector.extract_strided_slice %316 {offsets = [8, 72], sizes = [8, 8], strides = [1, 1]} : vector<16x96xf32> to vector<8x8xf32>
    %444 = arith.truncf %443 : vector<8x8xf32> to vector<8x8xbf16>
    %cst_144 = arith.constant dense<0.000000e+00> : vector<8x8xf32>
    %445 = tpu.matmul %440, %442, %cst_144 {dimension_numbers = #tpu.dot_dimension_numbers<[1], [1], [0], [0], [0, 0, 1, 0], [], []>} : vector<8x8xbf16>, vector<8x8xbf16>, vector<8x8xf32> -> vector<8x8xf32>
    %cst_145 = arith.constant 0.353553385 : f32
    %446 = vector.broadcast %cst_145 : f32 to vector<8x8xf32>
    %447 = arith.mulf %445, %446 : vector<8x8xf32>
    %448 = vector.broadcast %414 : vector<1x8xf32> to vector<8x8xf32>
    %449 = arith.addf %447, %448 : vector<8x8xf32>
    %cst_146 = arith.constant dense<0xFF800000> : vector<8xf32>
    %450 = vector.multi_reduction <maximumf>, %449, %cst_146 [1] : vector<8x8xf32> to vector<8xf32>
    %451 = vector.shape_cast %450 : vector<8xf32> to vector<8x1xf32>
    %452 = vector.broadcast %451 : vector<8x1xf32> to vector<8x8xf32>
    %453 = arith.subf %449, %452 : vector<8x8xf32>
    %454 = math.exp %453 : vector<8x8xf32>
    %cst_147 = arith.constant dense<0.000000e+00> : vector<8xf32>
    %455 = vector.multi_reduction <add>, %454, %cst_147 [1] : vector<8x8xf32> to vector<8xf32>
    %456 = vector.shape_cast %455 : vector<8xf32> to vector<8x1xf32>
    %457 = tpu.reciprocal %456 {approx = true} : vector<8x1xf32> -> vector<8x1xf32>
    %458 = vector.broadcast %457 : vector<8x1xf32> to vector<8x8xf32>
    %459 = arith.mulf %454, %458 : vector<8x8xf32>
    %460 = arith.truncf %459 : vector<8x8xf32> to vector<8x8xbf16>
    %cst_148 = arith.constant dense<0.000000e+00> : vector<8x8xf32>
    %461 = tpu.matmul %460, %444, %cst_148 {dimension_numbers = #tpu.dot_dimension_numbers<[1], [0], [0], [1], [0, 0, 1, 1], [], []>} : vector<8x8xbf16>, vector<8x8xbf16>, vector<8x8xf32> -> vector<8x8xf32>
    %c8_149 = arith.constant 8 : index
    %c8_150 = arith.constant 8 : index
    %462 = vector.load %arg11[%c8_149, %c8_150] : memref<16x32xf32, #tpu.memory_space<vmem>>, vector<8x8xf32>
    tpu.vector_store %arg11[%c8_149, %c8_150], %461 {strides = array<i32>} : memref<16x32xf32, #tpu.memory_space<vmem>>, vector<8x8xf32>,
    %463 = vector.extract_strided_slice %316 {offsets = [8, 16], sizes = [8, 8], strides = [1, 1]} : vector<16x96xf32> to vector<8x8xf32>
    %464 = arith.truncf %463 : vector<8x8xf32> to vector<8x8xbf16>
    %465 = vector.extract_strided_slice %316 {offsets = [8, 48], sizes = [8, 8], strides = [1, 1]} : vector<16x96xf32> to vector<8x8xf32>
    %466 = arith.truncf %465 : vector<8x8xf32> to vector<8x8xbf16>
    %467 = vector.extract_strided_slice %316 {offsets = [8, 80], sizes = [8, 8], strides = [1, 1]} : vector<16x96xf32> to vector<8x8xf32>
    %468 = arith.truncf %467 : vector<8x8xf32> to vector<8x8xbf16>
    %cst_151 = arith.constant dense<0.000000e+00> : vector<8x8xf32>
    %469 = tpu.matmul %464, %466, %cst_151 {dimension_numbers = #tpu.dot_dimension_numbers<[1], [1], [0], [0], [0, 0, 1, 0], [], []>} : vector<8x8xbf16>, vector<8x8xbf16>, vector<8x8xf32> -> vector<8x8xf32>
    %cst_152 = arith.constant 0.353553385 : f32
    %470 = vector.broadcast %cst_152 : f32 to vector<8x8xf32>
    %471 = arith.mulf %469, %470 : vector<8x8xf32>
    %472 = vector.broadcast %414 : vector<1x8xf32> to vector<8x8xf32>
    %473 = arith.addf %471, %472 : vector<8x8xf32>
    %cst_153 = arith.constant dense<0xFF800000> : vector<8xf32>
    %474 = vector.multi_reduction <maximumf>, %473, %cst_153 [1] : vector<8x8xf32> to vector<8xf32>
    %475 = vector.shape_cast %474 : vector<8xf32> to vector<8x1xf32>
    %476 = vector.broadcast %475 : vector<8x1xf32> to vector<8x8xf32>
    %477 = arith.subf %473, %476 : vector<8x8xf32>
    %478 = math.exp %477 : vector<8x8xf32>
    %cst_154 = arith.constant dense<0.000000e+00> : vector<8xf32>
    %479 = vector.multi_reduction <add>, %478, %cst_154 [1] : vector<8x8xf32> to vector<8xf32>
    %480 = vector.shape_cast %479 : vector<8xf32> to vector<8x1xf32>
    %481 = tpu.reciprocal %480 {approx = true} : vector<8x1xf32> -> vector<8x1xf32>
    %482 = vector.broadcast %481 : vector<8x1xf32> to vector<8x8xf32>
    %483 = arith.mulf %478, %482 : vector<8x8xf32>
    %484 = arith.truncf %483 : vector<8x8xf32> to vector<8x8xbf16>
    %cst_155 = arith.constant dense<0.000000e+00> : vector<8x8xf32>
    %485 = tpu.matmul %484, %468, %cst_155 {dimension_numbers = #tpu.dot_dimension_numbers<[1], [0], [0], [1], [0, 0, 1, 1], [], []>} : vector<8x8xbf16>, vector<8x8xbf16>, vector<8x8xf32> -> vector<8x8xf32>
    %c8_156 = arith.constant 8 : index
    %c16_157 = arith.constant 16 : index
    %486 = vector.load %arg11[%c8_156, %c16_157] : memref<16x32xf32, #tpu.memory_space<vmem>>, vector<8x8xf32>
    tpu.vector_store %arg11[%c8_156, %c16_157], %485 {strides = array<i32>} : memref<16x32xf32, #tpu.memory_space<vmem>>, vector<8x8xf32>,
    %487 = vector.extract_strided_slice %316 {offsets = [8, 24], sizes = [8, 8], strides = [1, 1]} : vector<16x96xf32> to vector<8x8xf32>
    %488 = arith.truncf %487 : vector<8x8xf32> to vector<8x8xbf16>
    %489 = vector.extract_strided_slice %316 {offsets = [8, 56], sizes = [8, 8], strides = [1, 1]} : vector<16x96xf32> to vector<8x8xf32>
    %490 = arith.truncf %489 : vector<8x8xf32> to vector<8x8xbf16>
    %491 = vector.extract_strided_slice %316 {offsets = [8, 88], sizes = [8, 8], strides = [1, 1]} : vector<16x96xf32> to vector<8x8xf32>
    %492 = arith.truncf %491 : vector<8x8xf32> to vector<8x8xbf16>
    %cst_158 = arith.constant dense<0.000000e+00> : vector<8x8xf32>
    %493 = tpu.matmul %488, %490, %cst_158 {dimension_numbers = #tpu.dot_dimension_numbers<[1], [1], [0], [0], [0, 0, 1, 0], [], []>} : vector<8x8xbf16>, vector<8x8xbf16>, vector<8x8xf32> -> vector<8x8xf32>
    %cst_159 = arith.constant 0.353553385 : f32
    %494 = vector.broadcast %cst_159 : f32 to vector<8x8xf32>
    %495 = arith.mulf %493, %494 : vector<8x8xf32>
    %496 = vector.broadcast %414 : vector<1x8xf32> to vector<8x8xf32>
    %497 = arith.addf %495, %496 : vector<8x8xf32>
    %cst_160 = arith.constant dense<0xFF800000> : vector<8xf32>
    %498 = vector.multi_reduction <maximumf>, %497, %cst_160 [1] : vector<8x8xf32> to vector<8xf32>
    %499 = vector.shape_cast %498 : vector<8xf32> to vector<8x1xf32>
    %500 = vector.broadcast %499 : vector<8x1xf32> to vector<8x8xf32>
    %501 = arith.subf %497, %500 : vector<8x8xf32>
    %502 = math.exp %501 : vector<8x8xf32>
    %cst_161 = arith.constant dense<0.000000e+00> : vector<8xf32>
    %503 = vector.multi_reduction <add>, %502, %cst_161 [1] : vector<8x8xf32> to vector<8xf32>
    %504 = vector.shape_cast %503 : vector<8xf32> to vector<8x1xf32>
    %505 = tpu.reciprocal %504 {approx = true} : vector<8x1xf32> -> vector<8x1xf32>
    %506 = vector.broadcast %505 : vector<8x1xf32> to vector<8x8xf32>
    %507 = arith.mulf %502, %506 : vector<8x8xf32>
    %508 = arith.truncf %507 : vector<8x8xf32> to vector<8x8xbf16>
    %cst_162 = arith.constant dense<0.000000e+00> : vector<8x8xf32>
    %509 = tpu.matmul %508, %492, %cst_162 {dimension_numbers = #tpu.dot_dimension_numbers<[1], [0], [0], [1], [0, 0, 1, 1], [], []>} : vector<8x8xbf16>, vector<8x8xbf16>, vector<8x8xf32> -> vector<8x8xf32>
    %c8_163 = arith.constant 8 : index
    %c24_164 = arith.constant 24 : index
    %510 = vector.load %arg11[%c8_163, %c24_164] : memref<16x32xf32, #tpu.memory_space<vmem>>, vector<8x8xf32>
    tpu.vector_store %arg11[%c8_163, %c24_164], %509 {strides = array<i32>} : memref<16x32xf32, #tpu.memory_space<vmem>>, vector<8x8xf32>,
    %c0_165 = arith.constant 0 : index
    %c0_166 = arith.constant 0 : index
    %511 = vector.load %arg11[%c0_165, %c0_166] : memref<16x32xf32, #tpu.memory_space<vmem>>, vector<16x32xf32>
    %512 = arith.truncf %511 : vector<16x32xf32> to vector<16x32xbf16>
    %c1_167 = arith.constant 1 : index
    %c0_168 = arith.constant 0 : index
    %c0_169 = arith.constant 0 : index
    %513 = vector.load %arg4[%c1_167, %c0_168, %c0_169] : memref<2x32x32xbf16, #tpu.memory_space<vmem>>, vector<1x32x32xbf16>
    %514 = vector.shape_cast %513 : vector<1x32x32xbf16> to vector<32x32xbf16>
    %cst_170 = arith.constant dense<0.000000e+00> : vector<16x32xf32>
    %515 = tpu.matmul %512, %514, %cst_170 {dimension_numbers = #tpu.dot_dimension_numbers<[1], [0], [0], [1], [0, 0, 1, 1], [], []>} : vector<16x32xbf16>, vector<32x32xbf16>, vector<16x32xf32> -> vector<16x32xf32>
    %516 = vector.extract_strided_slice %309 {offsets = [1, 0], sizes = [1, 32], strides = [1, 1]} : vector<8x96xf32> to vector<1x32xf32>
    %517 = vector.broadcast %516 : vector<1x32xf32> to vector<16x32xf32>
    %518 = arith.addf %515, %517 : vector<16x32xf32>
    %519 = arith.addf %307, %518 : vector<16x32xf32>
    %520 = vector.extract_strided_slice %309 {offsets = [2, 0], sizes = [1, 32], strides = [1, 1]} : vector<8x96xf32> to vector<1x32xf32>
    %521 = vector.extract_strided_slice %309 {offsets = [3, 0], sizes = [1, 32], strides = [1, 1]} : vector<8x96xf32> to vector<1x32xf32>
    %cst_171 = arith.constant dense<0.000000e+00> : vector<16xf32>
    %522 = vector.multi_reduction <add>, %519, %cst_171 [1] : vector<16x32xf32> to vector<16xf32>
    %523 = vector.shape_cast %522 : vector<16xf32> to vector<16x1xf32>
    %cst_172 = arith.constant 3.200000e+01 : f32
    %524 = vector.broadcast %cst_172 : f32 to vector<16x1xf32>
    %525 = arith.divf %523, %524 : vector<16x1xf32>
    %526 = vector.broadcast %525 : vector<16x1xf32> to vector<16x32xf32>
    %527 = arith.subf %519, %526 : vector<16x32xf32>
    %528 = arith.mulf %527, %527 : vector<16x32xf32>
    %cst_173 = arith.constant dense<0.000000e+00> : vector<16xf32>
    %529 = vector.multi_reduction <add>, %528, %cst_173 [1] : vector<16x32xf32> to vector<16xf32>
    %530 = vector.shape_cast %529 : vector<16xf32> to vector<16x1xf32>
    %cst_174 = arith.constant 3.200000e+01 : f32
    %531 = vector.broadcast %cst_174 : f32 to vector<16x1xf32>
    %532 = arith.divf %530, %531 : vector<16x1xf32>
    %cst_175 = arith.constant 9.99999996E-13 : f32
    %533 = vector.broadcast %cst_175 : f32 to vector<16x1xf32>
    %534 = arith.addf %532, %533 : vector<16x1xf32>
    %535 = math.rsqrt %534 : vector<16x1xf32>
    %536 = vector.broadcast %535 : vector<16x1xf32> to vector<16x32xf32>
    %537 = arith.mulf %527, %536 : vector<16x32xf32>
    %538 = vector.broadcast %520 : vector<1x32xf32> to vector<16x32xf32>
    %539 = arith.mulf %537, %538 : vector<16x32xf32>
    %540 = vector.broadcast %521 : vector<1x32xf32> to vector<16x32xf32>
    %541 = arith.addf %539, %540 : vector<16x32xf32>
    %542 = arith.truncf %541 : vector<16x32xf32> to vector<16x32xbf16>
    %c1_176 = arith.constant 1 : index
    %c0_177 = arith.constant 0 : index
    %c0_178 = arith.constant 0 : index
    %543 = vector.load %arg5[%c1_176, %c0_177, %c0_178] : memref<2x32x64xbf16, #tpu.memory_space<vmem>>, vector<1x32x64xbf16>
    %544 = vector.shape_cast %543 : vector<1x32x64xbf16> to vector<32x64xbf16>
    %cst_179 = arith.constant dense<0.000000e+00> : vector<16x64xf32>
    %545 = tpu.matmul %542, %544, %cst_179 {dimension_numbers = #tpu.dot_dimension_numbers<[1], [0], [0], [1], [0, 0, 1, 1], [], []>} : vector<16x32xbf16>, vector<32x64xbf16>, vector<16x64xf32> -> vector<16x64xf32>
    %546 = vector.extract_strided_slice %309 {offsets = [4, 0], sizes = [1, 64], strides = [1, 1]} : vector<8x96xf32> to vector<1x64xf32>
    %547 = vector.broadcast %546 : vector<1x64xf32> to vector<16x64xf32>
    %548 = arith.addf %545, %547 : vector<16x64xf32>
    %cst_180 = arith.constant 5.000000e-01 : f32
    %549 = vector.broadcast %cst_180 : f32 to vector<16x64xf32>
    %550 = arith.mulf %549, %548 : vector<16x64xf32>
    %cst_181 = arith.constant 4.471500e-02 : f32
    %551 = vector.broadcast %cst_181 : f32 to vector<16x64xf32>
    %552 = arith.mulf %551, %548 : vector<16x64xf32>
    %553 = arith.mulf %552, %548 : vector<16x64xf32>
    %554 = arith.mulf %553, %548 : vector<16x64xf32>
    %555 = arith.addf %548, %554 : vector<16x64xf32>
    %cst_182 = arith.constant 0.797884583 : f32
    %556 = vector.broadcast %cst_182 : f32 to vector<16x64xf32>
    %557 = arith.mulf %556, %555 : vector<16x64xf32>
    %558 = math.tanh %557 : vector<16x64xf32>
    %cst_183 = arith.constant 1.000000e+00 : f32
    %559 = vector.broadcast %cst_183 : f32 to vector<16x64xf32>
    %560 = arith.addf %559, %558 : vector<16x64xf32>
    %561 = arith.mulf %550, %560 : vector<16x64xf32>
    %562 = arith.truncf %561 : vector<16x64xf32> to vector<16x64xbf16>
    %c1_184 = arith.constant 1 : index
    %c0_185 = arith.constant 0 : index
    %c0_186 = arith.constant 0 : index
    %563 = vector.load %arg6[%c1_184, %c0_185, %c0_186] : memref<2x64x32xbf16, #tpu.memory_space<vmem>>, vector<1x64x32xbf16>
    %564 = vector.shape_cast %563 : vector<1x64x32xbf16> to vector<64x32xbf16>
    %cst_187 = arith.constant dense<0.000000e+00> : vector<16x32xf32>
    %565 = tpu.matmul %562, %564, %cst_187 {dimension_numbers = #tpu.dot_dimension_numbers<[1], [0], [0], [1], [0, 0, 1, 1], [], []>} : vector<16x64xbf16>, vector<64x32xbf16>, vector<16x32xf32> -> vector<16x32xf32>
    %566 = vector.extract_strided_slice %309 {offsets = [5, 0], sizes = [1, 32], strides = [1, 1]} : vector<8x96xf32> to vector<1x32xf32>
    %567 = vector.broadcast %566 : vector<1x32xf32> to vector<16x32xf32>
    %568 = arith.addf %565, %567 : vector<16x32xf32>
    %569 = arith.addf %541, %568 : vector<16x32xf32>
    %570 = vector.extract_strided_slice %309 {offsets = [6, 0], sizes = [1, 32], strides = [1, 1]} : vector<8x96xf32> to vector<1x32xf32>
    %571 = vector.extract_strided_slice %309 {offsets = [7, 0], sizes = [1, 32], strides = [1, 1]} : vector<8x96xf32> to vector<1x32xf32>
    %cst_188 = arith.constant dense<0.000000e+00> : vector<16xf32>
    %572 = vector.multi_reduction <add>, %569, %cst_188 [1] : vector<16x32xf32> to vector<16xf32>
    %573 = vector.shape_cast %572 : vector<16xf32> to vector<16x1xf32>
    %cst_189 = arith.constant 3.200000e+01 : f32
    %574 = vector.broadcast %cst_189 : f32 to vector<16x1xf32>
    %575 = arith.divf %573, %574 : vector<16x1xf32>
    %576 = vector.broadcast %575 : vector<16x1xf32> to vector<16x32xf32>
    %577 = arith.subf %569, %576 : vector<16x32xf32>
    %578 = arith.mulf %577, %577 : vector<16x32xf32>
    %cst_190 = arith.constant dense<0.000000e+00> : vector<16xf32>
    %579 = vector.multi_reduction <add>, %578, %cst_190 [1] : vector<16x32xf32> to vector<16xf32>
    %580 = vector.shape_cast %579 : vector<16xf32> to vector<16x1xf32>
    %cst_191 = arith.constant 3.200000e+01 : f32
    %581 = vector.broadcast %cst_191 : f32 to vector<16x1xf32>
    %582 = arith.divf %580, %581 : vector<16x1xf32>
    %cst_192 = arith.constant 9.99999996E-13 : f32
    %583 = vector.broadcast %cst_192 : f32 to vector<16x1xf32>
    %584 = arith.addf %582, %583 : vector<16x1xf32>
    %585 = math.rsqrt %584 : vector<16x1xf32>
    %586 = vector.broadcast %585 : vector<16x1xf32> to vector<16x32xf32>
    %587 = arith.mulf %577, %586 : vector<16x32xf32>
    %588 = vector.broadcast %570 : vector<1x32xf32> to vector<16x32xf32>
    %589 = arith.mulf %587, %588 : vector<16x32xf32>
    %590 = vector.broadcast %571 : vector<1x32xf32> to vector<16x32xf32>
    %591 = arith.addf %589, %590 : vector<16x32xf32>
    %592 = vector.extract_strided_slice %591 {offsets = [0, 0], sizes = [1, 32], strides = [1, 1]} : vector<16x32xf32> to vector<1x32xf32>
    %593 = vector.extract_strided_slice %591 {offsets = [8, 0], sizes = [1, 32], strides = [1, 1]} : vector<16x32xf32> to vector<1x32xf32>
    %594 = tpu.concatenate %592, %593 in 0 : vector<1x32xf32>, vector<1x32xf32> -> vector<2x32xf32>
    %595 = arith.truncf %594 : vector<2x32xf32> to vector<2x32xbf16>
    %c0_193 = arith.constant 0 : index
    %c0_194 = arith.constant 0 : index
    %596 = vector.load %arg8[%c0_193, %c0_194] : memref<32x32xbf16, #tpu.memory_space<vmem>>, vector<32x32xbf16>
    %cst_195 = arith.constant dense<0.000000e+00> : vector<2x32xf32>
    %597 = tpu.matmul %595, %596, %cst_195 {dimension_numbers = #tpu.dot_dimension_numbers<[1], [0], [0], [1], [0, 0, 1, 1], [], []>} : vector<2x32xbf16>, vector<32x32xbf16>, vector<2x32xf32> -> vector<2x32xf32>
    %598 = vector.extract_strided_slice %0 {offsets = [2, 0], sizes = [1, 32], strides = [1, 1]} : vector<3x32xf32> to vector<1x32xf32>
    %599 = vector.broadcast %598 : vector<1x32xf32> to vector<2x32xf32>
    %600 = arith.addf %597, %599 : vector<2x32xf32>
    %601 = vector.extract_strided_slice %600 {offsets = [0, 0], sizes = [2, 6], strides = [1, 1]} : vector<2x32xf32> to vector<2x6xf32>
    %602 = vector.extract_strided_slice %600 {offsets = [0, 6], sizes = [2, 5], strides = [1, 1]} : vector<2x32xf32> to vector<2x5xf32>
    %c0_196 = arith.constant 0 : index
    %c0_197 = arith.constant 0 : index
    %603 = vector.load %arg9[%c0_196, %c0_197] : memref<2x7xf32, #tpu.memory_space<vmem>>, vector<2x6xf32>
    %cst_198 = arith.constant 0.000000e+00 : f32
    %604 = vector.broadcast %cst_198 : f32 to vector<2x6xf32>
    %605 = arith.maximumf %601, %604 : vector<2x6xf32>
    %606 = arith.mulf %601, %603 : vector<2x6xf32>
    %607 = arith.subf %605, %606 : vector<2x6xf32>
    %608 = math.absf %601 : vector<2x6xf32>
    %cst_199 = arith.constant 0.000000e+00 : f32
    %609 = vector.broadcast %cst_199 : f32 to vector<2x6xf32>
    %610 = arith.subf %609, %608 : vector<2x6xf32>
    %611 = math.exp %610 : vector<2x6xf32>
    %cst_200 = arith.constant 1.000000e+00 : f32
    %612 = vector.broadcast %cst_200 : f32 to vector<2x6xf32>
    %613 = arith.addf %612, %611 : vector<2x6xf32>
    %614 = math.log %613 : vector<2x6xf32>
    %615 = arith.addf %607, %614 : vector<2x6xf32>
    %cst_201 = arith.constant dense<0.000000e+00> : vector<2xf32>
    %616 = vector.multi_reduction <add>, %615, %cst_201 [1] : vector<2x6xf32> to vector<2xf32>
    %617 = vector.shape_cast %616 : vector<2xf32> to vector<2x1xf32>
    %cst_202 = arith.constant dense<0.000000e+00> : vector<1xf32>
    %618 = vector.multi_reduction <add>, %617, %cst_202 [0] : vector<2x1xf32> to vector<1xf32>
    %619 = vector.shape_cast %618 : vector<1xf32> to vector<1x1xf32>
    %cst_203 = arith.constant 0.0833333358 : f32
    %620 = vector.broadcast %cst_203 : f32 to vector<1x1xf32>
    %621 = arith.mulf %619, %620 : vector<1x1xf32>
    %c0_204 = arith.constant 0 : index
    %c6 = arith.constant 6 : index
    %622 = vector.load %arg9[%c0_204, %c6] : memref<2x7xf32, #tpu.memory_space<vmem>>, vector<2x1xf32>
    %cst_205 = arith.constant 0.000000e+00 : f32
    %623 = vector.broadcast %cst_205 : f32 to vector<2x1xf32>
    %624 = arith.cmpf oge, %622, %623 : vector<2x1xf32>
    %625 = arith.extui %624 : vector<2x1xi1> to vector<2x1xi32>
    %626 = arith.sitofp %625 : vector<2x1xi32> to vector<2x1xf32>
    %cst_206 = arith.constant 0.000000e+00 : f32
    %627 = vector.broadcast %cst_206 : f32 to vector<2x1xf32>
    %628 = arith.cmpf oge, %622, %627 : vector<2x1xf32>
    %cst_207 = arith.constant 0.000000e+00 : f32
    %629 = vector.broadcast %cst_207 : f32 to vector<2x1xf32>
    %630 = arith.select %628, %622, %629 : vector<2x1xi1>, vector<2x1xf32>
    %631 = arith.fptosi %630 : vector<2x1xf32> to vector<2x1xi32>
    %632 = tpu.iota {dimensions = array<i32: 1>} : vector<2x5xi32>
    %633 = vector.broadcast %631 : vector<2x1xi32> to vector<2x5xi32>
    %634 = arith.cmpi eq, %632, %633 : vector<2x5xi32>
    %635 = arith.extui %634 : vector<2x5xi1> to vector<2x5xi32>
    %636 = arith.sitofp %635 : vector<2x5xi32> to vector<2x5xf32>
    %cst_208 = arith.constant dense<0xFF800000> : vector<2xf32>
    %637 = vector.multi_reduction <maximumf>, %602, %cst_208 [1] : vector<2x5xf32> to vector<2xf32>
    %638 = vector.shape_cast %637 : vector<2xf32> to vector<2x1xf32>
    %639 = vector.broadcast %638 : vector<2x1xf32> to vector<2x5xf32>
    %640 = arith.subf %602, %639 : vector<2x5xf32>
    %641 = math.exp %640 : vector<2x5xf32>
    %cst_209 = arith.constant dense<0.000000e+00> : vector<2xf32>
    %642 = vector.multi_reduction <add>, %641, %cst_209 [1] : vector<2x5xf32> to vector<2xf32>
    %643 = vector.shape_cast %642 : vector<2xf32> to vector<2x1xf32>
    %644 = math.log %643 : vector<2x1xf32>
    %645 = arith.addf %638, %644 : vector<2x1xf32>
    %646 = arith.mulf %636, %602 : vector<2x5xf32>
    %cst_210 = arith.constant dense<0.000000e+00> : vector<2xf32>
    %647 = vector.multi_reduction <add>, %646, %cst_210 [1] : vector<2x5xf32> to vector<2xf32>
    %648 = vector.shape_cast %647 : vector<2xf32> to vector<2x1xf32>
    %649 = arith.subf %645, %648 : vector<2x1xf32>
    %650 = arith.mulf %649, %626 : vector<2x1xf32>
    %cst_211 = arith.constant dense<0.000000e+00> : vector<1xf32>
    %651 = vector.multi_reduction <add>, %650, %cst_211 [0] : vector<2x1xf32> to vector<1xf32>
    %652 = vector.shape_cast %651 : vector<1xf32> to vector<1x1xf32>
    %cst_212 = arith.constant dense<0.000000e+00> : vector<1xf32>
    %653 = vector.multi_reduction <add>, %626, %cst_212 [0] : vector<2x1xf32> to vector<1xf32>
    %654 = vector.shape_cast %653 : vector<1xf32> to vector<1x1xf32>
    %655 = tpu.reciprocal %654 {approx = true} : vector<1x1xf32> -> vector<1x1xf32>
    %656 = arith.mulf %652, %655 : vector<1x1xf32>
    %657 = arith.addf %621, %656 : vector<1x1xf32>
    %658 = tpu.iota {dimensions = array<i32: 1>} : vector<2x32xi32>
    %c16_i32 = arith.constant 16 : i32
    %659 = vector.broadcast %c16_i32 : i32 to vector<2x32xi32>
    %660 = arith.cmpi eq, %658, %659 : vector<2x32xi32>
    %661 = vector.shape_cast %657 : vector<1x1xf32> to vector<1x1xf32>
    %662 = vector.broadcast %661 : vector<1x1xf32> to vector<2x32xf32>
    %663 = arith.select %660, %662, %600 : vector<2x32xi1>, vector<2x32xf32>
    %c0_213 = arith.constant 0 : index
    %c0_214 = arith.constant 0 : index
    %664 = vector.load %arg10[%c0_213, %c0_214] : memref<2x32xf32, #tpu.memory_space<vmem>>, vector<2x32xf32>
    tpu.vector_store %arg10[%c0_213, %c0_214], %663 {strides = array<i32>} : memref<2x32xf32, #tpu.memory_space<vmem>>, vector<2x32xf32>,
    return
  }
}

</mosaic_0001>

<llo_original>
// kernel: forward.1
$region0: #{forward.1}
  #allocation0 [shape = 'u32[]', space=smem, size = 0x4, offset = 0x4, fixed_abs, tag = 'smem constant byte address 0x4 - core index']
  #allocation1 [shape = 'u32[144,128]{1,0:T(1,128)}', space=vmem, size = 0x12000, scoped, tag = 'internal scratch']
  #allocation2 [shape = 'f32[16,32]{1,0:T(8,128)}', space=vmem, size = 0x2000, scoped, tag = 'scratch operand']
  %s0 = inlined_call_operand.vmem [shape: f32[16,32], index: 0, kind: input, shape index: {}]
  %s1 = inlined_call_operand.vmem [shape: f32[2,8], index: 1, kind: input, shape index: {}]
  %s2 = inlined_call_operand.vmem [shape: f32[3,32], index: 2, kind: input, shape index: {}]
  %s3 = inlined_call_operand.vmem [shape: bf16[2,32,96], index: 3, kind: input, shape index: {}]
  %s4 = inlined_call_operand.vmem [shape: bf16[2,32,32], index: 4, kind: input, shape index: {}]
  %s5 = inlined_call_operand.vmem [shape: bf16[2,32,64], index: 5, kind: input, shape index: {}]
  %s6 = inlined_call_operand.vmem [shape: bf16[2,64,32], index: 6, kind: input, shape index: {}]
  %s7 = inlined_call_operand.vmem [shape: f32[2,8,96], index: 7, kind: input, shape index: {}]
  %s8 = inlined_call_operand.vmem [shape: bf16[32,32], index: 8, kind: input, shape index: {}]
  %s9 = inlined_call_operand.vmem [shape: f32[2,7], index: 9, kind: input, shape index: {}]
  %s10 = inlined_call_operand.vmem [shape: f32[2,32], index: 10, kind: output, shape index: {}]
  %s11 = sld [smem:[#allocation0]]
  $region50: #{forward.1} parent=0
    _
  %s13 = ssub.s32 1, %s11
  %s14 = scalar_select 0, %s13, %s11
  // Predicated region
  $region2: #{forward.1} parent=0 // pred_check
    _
  $region3: #{forward.1} parent=0 // pred_check_branch
    %16 = sbr.rel (0) target = $region5
  $region4: #{forward.1} parent=0 // pred_region
    _
  $region5: #{forward.1} parent=0 // pred_fallthru
    _
  // Predicated region
  $region6: #{forward.1} parent=0 // pred_check
    _
  $region7: #{forward.1} parent=0 // pred_check_branch
    %18 = sbr.rel (0) target = $region9
  $region8: #{forward.1} parent=0 // pred_region
    _
  $region9: #{forward.1} parent=0 // pred_fallthru
    _
  // Predicated region
  $region10: #{forward.1} parent=0 // pred_check
    _
  $region11: #{forward.1} parent=0 // pred_check_branch
    %20 = sbr.rel (0) target = $region13
  $region12: #{forward.1} parent=0 // pred_region
    _
  $region13: #{forward.1} parent=0 // pred_fallthru
    _
  // Predicated region
  $region14: #{forward.1} parent=0 // pred_check
    _
  $region15: #{forward.1} parent=0 // pred_check_branch
    %22 = sbr.rel (0) target = $region17
  $region16: #{forward.1} parent=0 // pred_region
    _
  $region17: #{forward.1} parent=0 // pred_fallthru
    _
  // Predicated region
  $region18: #{forward.1} parent=0 // pred_check
    _
  $region19: #{forward.1} parent=0 // pred_check_branch
    %24 = sbr.rel (0) target = $region21
  $region20: #{forward.1} parent=0 // pred_region
    _
  $region21: #{forward.1} parent=0 // pred_fallthru
    _
  // Predicated region
  $region22: #{forward.1} parent=0 // pred_check
    _
  $region23: #{forward.1} parent=0 // pred_check_branch
    %26 = sbr.rel (0) target = $region25
  $region24: #{forward.1} parent=0 // pred_region
    _
  $region25: #{forward.1} parent=0 // pred_fallthru
    _
  // Predicated region
  $region26: #{forward.1} parent=0 // pred_check
    _
  $region27: #{forward.1} parent=0 // pred_check_branch
    %28 = sbr.rel (0) target = $region29
  $region28: #{forward.1} parent=0 // pred_region
    _
  $region29: #{forward.1} parent=0 // pred_fallthru
    _
  // Predicated region
  $region30: #{forward.1} parent=0 // pred_check
    _
  $region31: #{forward.1} parent=0 // pred_check_branch
    %30 = sbr.rel (0) target = $region33
  $region32: #{forward.1} parent=0 // pred_region
    _
  $region33: #{forward.1} parent=0 // pred_fallthru
    _
  // Predicated region
  $region34: #{forward.1} parent=0 // pred_check
    _
  $region35: #{forward.1} parent=0 // pred_check_branch
    %32 = sbr.rel (0) target = $region37
  $region36: #{forward.1} parent=0 // pred_region
    _
  $region37: #{forward.1} parent=0 // pred_fallthru
    _
  // Predicated region
  $region38: #{forward.1} parent=0 // pred_check
    _
  $region39: #{forward.1} parent=0 // pred_check_branch
    %34 = sbr.rel (0) target = $region41
  $region40: #{forward.1} parent=0 // pred_region
    _
  $region41: #{forward.1} parent=0 // pred_fallthru
    _
  %v36 = vld [vmem:[%s2] sm:$0x7]
  %v37 = vld [vmem:[%s0] sm:$0xff]
  %v38 = vld [vmem:[%s0 + $0x8] sm:$0xff]
  %vm39 = vcmask 261120
  %v40 = vsel %vm39, %v37, 0.0
  %41 = vadd.xlane.f32.xlu0 %v40
  %v42 = vpop.xlane.xlu0 %41
  %v43 = vsel %vm39, %v38, 0.0
  %44 = vadd.xlane.f32.xlu0 %v43
  %v45 = vpop.xlane.xlu0 %44
  %v46 = vrcp.pop 32.0
  %v47 = vmul.f32 %v42, %v46
  %v48 = vmul.f32 %v45, %v46
  %v49 = vsub.f32 %v37, %v47
  %v50 = vsub.f32 %v38, %v48
  %v51 = vmul.f32 %v49, %v49
  %v52 = vmul.f32 %v50, %v50
  %v53 = vsel %vm39, %v51, 0.0
  %54 = vadd.xlane.f32.xlu0 %v53
  %v55 = vpop.xlane.xlu0 %54
  %v56 = vsel %vm39, %v52, 0.0
  %57 = vadd.xlane.f32.xlu0 %v56
  %v58 = vpop.xlane.xlu0 %57
  %v59 = vmul.f32 %v55, %v46
  %v60 = vmul.f32 %v58, %v46
  %v61 = vadd.f32 %v59, 1e-12
  %v62 = vadd.f32 %v60, 1e-12
  %v63 = vrsqrt.pop %v61
  %v64 = vrsqrt.pop %v62
  %v65 = vmul.f32 %v49, %v63
  %v66 = vmul.f32 %v50, %v64
  %v67 = vlaneseq
  %v68 = vshrl.u32 %v67, 7
  %v69 = vsub.s32 0, %v68
  %v70 = vrot.slane %v36, %v69
  %v71 = vmul.f32 %v65, %v70
  %v72 = vmul.f32 %v66, %v70
  %v73 = vlaneseq
  %v74 = vshrl.u32 %v73, 7
  %v75 = vsub.s32 1, %v74
  %v76 = vrot.slane %v36, %v75
  %v77 = vadd.f32 %v71, %v76
  %v78 = vadd.f32 %v72, %v76
  %v79 = vld [vmem:[%s7] sm:$0xff]
  %v80 = vpack.c.bf16 %v78, %v77
  %v81 = vld [vmem:[%s3] sm:$0xf]
  %v82 = vld [vmem:[%s3 + $0x4] sm:$0xf]
  %v83 = vld [vmem:[%s3 + $0x8] sm:$0xf]
  %v84 = vld [vmem:[%s3 + $0xc] sm:$0xf]
  %v85 = vlaneseq
  %v86 = vshrl.u32 %v85, 7
  %v87 = vsub.s32 0, %v86
  %v88 = vrot.slane %v79, %v87
  %v93 = vunpack.c.l.b16 %v81
  %v94 = vunpack.c.l.b16 %v82
  %v95 = vunpack.c.l.b16 %v83
  %v96 = vunpack.c.l.b16 %v84
  %v97 = vpack.c.b16 %v94, %v93
  %v98 = vpack.c.b16 %v96, %v95
  %v102 = vsel %vm39, %v80, 0
  %104 = vmatprep.subr.bf16.mxu0 0
  %105 = vmatpush1.bf16.msra.mxu0 0
  %106 = vmatprep.subr.bf16.mxu0 0
  %107 = vmatpush1.bf16.msra.mxu0 0
  %108 = vmatprep.subr.bf16.mxu0 0
  %109 = vmatpush1.bf16.msra.mxu0 0
  %110 = vmatprep.subr.bf16.mxu0 0
  %111 = vmatpush1.bf16.msra.mxu0 0
  %112 = vmatprep.subr.bf16.mxu0 0
  %113 = vmatpush1.bf16.msra.mxu0 0
  %114 = vmatprep.subr.bf16.mxu0 0
  %115 = vmatpush1.bf16.msra.mxu0 0
  %116 = vmatprep.subr.bf16.mxu0 0
  %117 = vmatpush1.bf16.msra.mxu0 %v98
  %118 = vmatprep.subr.bf16.mxu0 0
  %119 = vmatpush1.bf16.msra.mxu0 %v97
  %120 = vmatprep.subr.bf16.mxu0 0
  %121 = vmatpush2.bf16.msra.mxu0 0
  %122 = vmatprep.subr.bf16.mxu0 0
  %123 = vmatpush2.bf16.msra.mxu0 0
  %124 = vmatprep.subr.bf16.mxu0 0
  %125 = vmatpush2.bf16.msra.mxu0 0
  %126 = vmatprep.subr.bf16.mxu0 0
  %127 = vmatpush2.bf16.msra.mxu0 0
  %128 = vmatprep.subr.bf16.mxu0 0
  %129 = vmatpush2.bf16.msra.mxu0 0
  %130 = vmatprep.subr.bf16.mxu0 0
  %131 = vmatpush2.bf16.msra.mxu0 0
  %132 = vmatprep.subr.bf16.mxu0 0
  %133 = vmatpush2.bf16.msra.mxu0 0
  %134 = vmatprep.subr.bf16.mxu0 0
  %135 = vmatpush2.bf16.msra.mxu0 0
  %136 = vmatprep.mubr.bf16.mxu0 0
  %137 = vmatmul.mubr.bf16.gmra.mxu0 %v102
  %v138 = vpop.f32.mrf.mxu0
  %v139 = vadd.f32 %v88, %v138
  %v140 = vpop.f32.mrf.mxu0
  %v141 = vpop.f32.mrf.mxu0
  %v142 = vadd.f32 %v88, %v141
  %v143 = vpop.f32.mrf.mxu0
  %144 = vdwg.mxu0
  %v145 = vld [vmem:[%s1] sm:$0x1]
  %v146 = vpack.c.bf16 %v139, %v139
  %148 = vrot.lane.b32.xlu0 %v146, 96
  %v149 = vpop.permute.xlu0 %148
  %vm150 = vcmask 64512
  %v152 = vsel %vm150, %v146, 0
  %v155 = vsel %vm150, %v149, 0
  %157 = vmatprep.subr.bf16.mxu0 0
  %158 = vmatpush1.bf16.xpose.msra.mxu0 0
  %159 = vmatprep.subr.bf16.mxu0 0
  %160 = vmatpush1.bf16.xpose.msra.mxu0 0
  %161 = vmatprep.subr.bf16.mxu0 0
  %162 = vmatpush1.bf16.xpose.msra.mxu0 0
  %163 = vmatprep.subr.bf16.mxu0 0
  %164 = vmatpush1.bf16.xpose.msra.mxu0 0
  %165 = vmatprep.subr.bf16.mxu0 0
  %166 = vmatpush1.bf16.xpose.msra.mxu0 0
  %167 = vmatprep.subr.bf16.mxu0 0
  %168 = vmatpush1.bf16.xpose.msra.mxu0 0
  %169 = vmatprep.subr.bf16.mxu0 0
  %170 = vmatpush1.bf16.xpose.msra.mxu0 0
  %171 = vmatprep.subr.bf16.mxu0 0
  %172 = vmatpush1.bf16.xpose.msra.mxu0 %v155
  %173 = vmatprep.subr.bf16.mxu0 0
  %174 = vmatpush2.bf16.xpose.msra.mxu0 0
  %175 = vmatprep.subr.bf16.mxu0 0
  %176 = vmatpush2.bf16.xpose.msra.mxu0 0
  %177 = vmatprep.subr.bf16.mxu0 0
  %178 = vmatpush2.bf16.xpose.msra.mxu0 0
  %179 = vmatprep.subr.bf16.mxu0 0
  %180 = vmatpush2.bf16.xpose.msra.mxu0 0
  %181 = vmatprep.subr.bf16.mxu0 0
  %182 = vmatpush2.bf16.xpose.msra.mxu0 0
  %183 = vmatprep.subr.bf16.mxu0 0
  %184 = vmatpush2.bf16.xpose.msra.mxu0 0
  %185 = vmatprep.subr.bf16.mxu0 0
  %186 = vmatpush2.bf16.xpose.msra.mxu0 0
  %187 = vmatprep.subr.bf16.mxu0 0
  %188 = vmatpush2.bf16.xpose.msra.mxu0 0
  %189 = vmatprep.mubr.bf16.mxu0 0
  %190 = vmatmul.mubr.bf16.gmra.mxu0 %v152
  %v191 = vpop.f32.mrf.mxu0
  %v192 = vadd.f32 0.0, %v191
  %v193 = vpop.f32.mrf.mxu0
  %v194 = vpop.f32.mrf.mxu0
  %v195 = vpop.f32.mrf.mxu0
  %196 = vdwg.mxu0
  %v197 = vmul.f32 %v192, 0.35355338
  %v198 = vlaneseq
  %v199 = vshrl.u32 %v198, 7
  %v200 = vsub.s32 0, %v199
  %v201 = vrot.slane %v145, %v200
  %v202 = vadd.f32 %v197, %v201
  %v203 = vsel %vm150, %v202, -inf
  %204 = vmax.xlane.f32.xlu0 %v203
  %v205 = vpop.xlane.xlu0 %204
  %v206 = vsub.f32 %v202, %v205
  %v207 = vmul.f32 %v206, 1.442695
  %v208 = vpow.pop %v207
  %v209 = vsel %vm150, %v208, 0.0
  %210 = vadd.xlane.f32.xlu0 %v209
  %v211 = vpop.xlane.xlu0 %210
  %v212 = vrcp.pop %v211
  %v213 = vmul.f32 %v208, %v212
  %v214 = vpack.c.bf16 %v213, %v213
  %215 = vrot.lane.b32.xlu0 %v146, 64
  %v216 = vpop.permute.xlu0 %215
  %v218 = vsel %vm150, %v214, 0
  %vm220 = vcmask 1043456
  %v222 = vsel %vm220, %v216, 0
  %224 = vmatprep.subr.bf16.mxu0 0
  %225 = vmatpush1.bf16.msra.mxu0 0
  %226 = vmatprep.subr.bf16.mxu0 0
  %227 = vmatpush1.bf16.msra.mxu0 0
  %228 = vmatprep.subr.bf16.mxu0 0
  %229 = vmatpush1.bf16.msra.mxu0 0
  %230 = vmatprep.subr.bf16.mxu0 0
  %231 = vmatpush1.bf16.msra.mxu0 0
  %232 = vmatprep.subr.bf16.mxu0 0
  %233 = vmatpush1.bf16.msra.mxu0 0
  %234 = vmatprep.subr.bf16.mxu0 0
  %235 = vmatpush1.bf16.msra.mxu0 0
  %236 = vmatprep.subr.bf16.mxu0 0
  %237 = vmatpush1.bf16.msra.mxu0 0
  %238 = vmatprep.subr.bf16.mxu0 0
  %239 = vmatpush1.bf16.msra.mxu0 %v222
  %240 = vmatprep.subr.bf16.mxu0 0
  %241 = vmatpush2.bf16.msra.mxu0 0
  %242 = vmatprep.subr.bf16.mxu0 0
  %243 = vmatpush2.bf16.msra.mxu0 0
  %244 = vmatprep.subr.bf16.mxu0 0
  %245 = vmatpush2.bf16.msra.mxu0 0
  %246 = vmatprep.subr.bf16.mxu0 0
  %247 = vmatpush2.bf16.msra.mxu0 0
  %248 = vmatprep.subr.bf16.mxu0 0
  %249 = vmatpush2.bf16.msra.mxu0 0
  %250 = vmatprep.subr.bf16.mxu0 0
  %251 = vmatpush2.bf16.msra.mxu0 0
  %252 = vmatprep.subr.bf16.mxu0 0
  %253 = vmatpush2.bf16.msra.mxu0 0
  %254 = vmatprep.subr.bf16.mxu0 0
  %255 = vmatpush2.bf16.msra.mxu0 0
  %256 = vmatprep.mubr.bf16.mxu0 0
  %257 = vmatmul.mubr.bf16.gmra.mxu0 %v218
  %v258 = vpop.f32.mrf.mxu0
  %v259 = vadd.f32 0.0, %v258
  %v260 = vpop.f32.mrf.mxu0
  %v261 = vpop.f32.mrf.mxu0
  %v262 = vpop.f32.mrf.mxu0
  %263 = vdwg.mxu0
  %264 = vst.msk [vmem:[#allocation2] sm:$0xff] %vm150, %v259
  %265 = vrot.lane.b32.xlu0 %v146, 120
  %v266 = vpop.permute.xlu0 %265
  %267 = vrot.lane.b32.xlu0 %v146, 88
  %v268 = vpop.permute.xlu0 %267
  %v270 = vsel %vm150, %v266, 0
  %v273 = vsel %vm150, %v268, 0
  %275 = vmatprep.subr.bf16.mxu0 0
  %276 = vmatpush1.bf16.xpose.msra.mxu0 0
  %277 = vmatprep.subr.bf16.mxu0 0
  %278 = vmatpush1.bf16.xpose.msra.mxu0 0
  %279 = vmatprep.subr.bf16.mxu0 0
  %280 = vmatpush1.bf16.xpose.msra.mxu0 0
  %281 = vmatprep.subr.bf16.mxu0 0
  %282 = vmatpush1.bf16.xpose.msra.mxu0 0
  %283 = vmatprep.subr.bf16.mxu0 0
  %284 = vmatpush1.bf16.xpose.msra.mxu0 0
  %285 = vmatprep.subr.bf16.mxu0 0
  %286 = vmatpush1.bf16.xpose.msra.mxu0 0
  %287 = vmatprep.subr.bf16.mxu0 0
  %288 = vmatpush1.bf16.xpose.msra.mxu0 0
  %289 = vmatprep.subr.bf16.mxu0 0
  %290 = vmatpush1.bf16.xpose.msra.mxu0 %v273
  %291 = vmatprep.subr.bf16.mxu0 0
  %292 = vmatpush2.bf16.xpose.msra.mxu0 0
  %293 = vmatprep.subr.bf16.mxu0 0
  %294 = vmatpush2.bf16.xpose.msra.mxu0 0
  %295 = vmatprep.subr.bf16.mxu0 0
  %296 = vmatpush2.bf16.xpose.msra.mxu0 0
  %297 = vmatprep.subr.bf16.mxu0 0
  %298 = vmatpush2.bf16.xpose.msra.mxu0 0
  %299 = vmatprep.subr.bf16.mxu0 0
  %300 = vmatpush2.bf16.xpose.msra.mxu0 0
  %301 = vmatprep.subr.bf16.mxu0 0
  %302 = vmatpush2.bf16.xpose.msra.mxu0 0
  %303 = vmatprep.subr.bf16.mxu0 0
  %304 = vmatpush2.bf16.xpose.msra.mxu0 0
  %305 = vmatprep.subr.bf16.mxu0 0
  %306 = vmatpush2.bf16.xpose.msra.mxu0 0
  %307 = vmatprep.mubr.bf16.mxu0 0
  %308 = vmatmul.mubr.bf16.gmra.mxu0 %v270
  %v309 = vpop.f32.mrf.mxu0
  %v310 = vadd.f32 0.0, %v309
  %v311 = vpop.f32.mrf.mxu0
  %v312 = vpop.f32.mrf.mxu0
  %v313 = vpop.f32.mrf.mxu0
  %314 = vdwg.mxu0
  %v315 = vmul.f32 %v310, 0.35355338
  %v316 = vadd.f32 %v315, %v201
  %v317 = vsel %vm150, %v316, -inf
  %318 = vmax.xlane.f32.xlu0 %v317
  %v319 = vpop.xlane.xlu0 %318
  %v320 = vsub.f32 %v316, %v319
  %v321 = vmul.f32 %v320, 1.442695
  %v322 = vpow.pop %v321
  %v323 = vsel %vm150, %v322, 0.0
  %324 = vadd.xlane.f32.xlu0 %v323
  %v325 = vpop.xlane.xlu0 %324
  %v326 = vrcp.pop %v325
  %v327 = vmul.f32 %v322, %v326
  %v328 = vpack.c.bf16 %v327, %v327
  %329 = vrot.lane.b32.xlu0 %v146, 56
  %v330 = vpop.permute.xlu0 %329
  %v332 = vsel %vm150, %v328, 0
  %v335 = vsel %vm220, %v330, 0
  %337 = vmatprep.subr.bf16.mxu0 0
  %338 = vmatpush1.bf16.msra.mxu0 0
  %339 = vmatprep.subr.bf16.mxu0 0
  %340 = vmatpush1.bf16.msra.mxu0 0
  %341 = vmatprep.subr.bf16.mxu0 0
  %342 = vmatpush1.bf16.msra.mxu0 0
  %343 = vmatprep.subr.bf16.mxu0 0
  %344 = vmatpush1.bf16.msra.mxu0 0
  %345 = vmatprep.subr.bf16.mxu0 0
  %346 = vmatpush1.bf16.msra.mxu0 0
  %347 = vmatprep.subr.bf16.mxu0 0
  %348 = vmatpush1.bf16.msra.mxu0 0
  %349 = vmatprep.subr.bf16.mxu0 0
  %350 = vmatpush1.bf16.msra.mxu0 0
  %351 = vmatprep.subr.bf16.mxu0 0
  %352 = vmatpush1.bf16.msra.mxu0 %v335
  %353 = vmatprep.subr.bf16.mxu0 0
  %354 = vmatpush2.bf16.msra.mxu0 0
  %355 = vmatprep.subr.bf16.mxu0 0
  %356 = vmatpush2.bf16.msra.mxu0 0
  %357 = vmatprep.subr.bf16.mxu0 0
  %358 = vmatpush2.bf16.msra.mxu0 0
  %359 = vmatprep.subr.bf16.mxu0 0
  %360 = vmatpush2.bf16.msra.mxu0 0
  %361 = vmatprep.subr.bf16.mxu0 0
  %362 = vmatpush2.bf16.msra.mxu0 0
  %363 = vmatprep.subr.bf16.mxu0 0
  %364 = vmatpush2.bf16.msra.mxu0 0
  %365 = vmatprep.subr.bf16.mxu0 0
  %366 = vmatpush2.bf16.msra.mxu0 0
  %367 = vmatprep.subr.bf16.mxu0 0
  %368 = vmatpush2.bf16.msra.mxu0 0
  %369 = vmatprep.mubr.bf16.mxu0 0
  %370 = vmatmul.mubr.bf16.gmra.mxu0 %v332
  %v371 = vpop.f32.mrf.mxu0
  %v372 = vadd.f32 0.0, %v371
  %v373 = vpop.f32.mrf.mxu0
  %v374 = vpop.f32.mrf.mxu0
  %v375 = vpop.f32.mrf.mxu0
  %376 = vdwg.mxu0
  %378 = vrot.lane.b32.xlu0 %v372, 8
  %v379 = vpop.permute.xlu0 %378
  %vm381 = vcmask 130112
  %382 = vst.msk [vmem:[#allocation2] sm:$0xff] %vm381, %v379
  %383 = vrot.lane.b32.xlu0 %v146, 112
  %v384 = vpop.permute.xlu0 %383
  %385 = vrot.lane.b32.xlu0 %v146, 80
  %v386 = vpop.permute.xlu0 %385
  %v388 = vsel %vm150, %v384, 0
  %v391 = vsel %vm150, %v386, 0
  %393 = vmatprep.subr.bf16.mxu0 0
  %394 = vmatpush1.bf16.xpose.msra.mxu0 0
  %395 = vmatprep.subr.bf16.mxu0 0
  %396 = vmatpush1.bf16.xpose.msra.mxu0 0
  %397 = vmatprep.subr.bf16.mxu0 0
  %398 = vmatpush1.bf16.xpose.msra.mxu0 0
  %399 = vmatprep.subr.bf16.mxu0 0
  %400 = vmatpush1.bf16.xpose.msra.mxu0 0
  %401 = vmatprep.subr.bf16.mxu0 0
  %402 = vmatpush1.bf16.xpose.msra.mxu0 0
  %403 = vmatprep.subr.bf16.mxu0 0
  %404 = vmatpush1.bf16.xpose.msra.mxu0 0
  %405 = vmatprep.subr.bf16.mxu0 0
  %406 = vmatpush1.bf16.xpose.msra.mxu0 0
  %407 = vmatprep.subr.bf16.mxu0 0
  %408 = vmatpush1.bf16.xpose.msra.mxu0 %v391
  %409 = vmatprep.subr.bf16.mxu0 0
  %410 = vmatpush2.bf16.xpose.msra.mxu0 0
  %411 = vmatprep.subr.bf16.mxu0 0
  %412 = vmatpush2.bf16.xpose.msra.mxu0 0
  %413 = vmatprep.subr.bf16.mxu0 0
  %414 = vmatpush2.bf16.xpose.msra.mxu0 0
  %415 = vmatprep.subr.bf16.mxu0 0
  %416 = vmatpush2.bf16.xpose.msra.mxu0 0
  %417 = vmatprep.subr.bf16.mxu0 0
  %418 = vmatpush2.bf16.xpose.msra.mxu0 0
  %419 = vmatprep.subr.bf16.mxu0 0
  %420 = vmatpush2.bf16.xpose.msra.mxu0 0
  %421 = vmatprep.subr.bf16.mxu0 0
  %422 = vmatpush2.bf16.xpose.msra.mxu0 0
  %423 = vmatprep.subr.bf16.mxu0 0
  %424 = vmatpush2.bf16.xpose.msra.mxu0 0
  %425 = vmatprep.mubr.bf16.mxu0 0
  %426 = vmatmul.mubr.bf16.gmra.mxu0 %v388
  %v427 = vpop.f32.mrf.mxu0
  %v428 = vadd.f32 0.0, %v427
  %v429 = vpop.f32.mrf.mxu0
  %v430 = vpop.f32.mrf.mxu0
  %v431 = vpop.f32.mrf.mxu0
  %432 = vdwg.mxu0
  %v433 = vmul.f32 %v428, 0.35355338
  %v434 = vadd.f32 %v433, %v201
  %v435 = vsel %vm150, %v434, -inf
  %436 = vmax.xlane.f32.xlu0 %v435
  %v437 = vpop.xlane.xlu0 %436
  %v438 = vsub.f32 %v434, %v437
  %v439 = vmul.f32 %v438, 1.442695
  %v440 = vpow.pop %v439
  %v441 = vsel %vm150, %v440, 0.0
  %442 = vadd.xlane.f32.xlu0 %v441
  %v443 = vpop.xlane.xlu0 %442
  %v444 = vrcp.pop %v443
  %v445 = vmul.f32 %v440, %v444
  %v446 = vpack.c.bf16 %v445, %v445
  %447 = vrot.lane.b32.xlu0 %v146, 48
  %v448 = vpop.permute.xlu0 %447
  %v450 = vsel %vm150, %v446, 0
  %v453 = vsel %vm220, %v448, 0
  %455 = vmatprep.subr.bf16.mxu0 0
  %456 = vmatpush1.bf16.msra.mxu0 0
  %457 = vmatprep.subr.bf16.mxu0 0
  %458 = vmatpush1.bf16.msra.mxu0 0
  %459 = vmatprep.subr.bf16.mxu0 0
  %460 = vmatpush1.bf16.msra.mxu0 0
  %461 = vmatprep.subr.bf16.mxu0 0
  %462 = vmatpush1.bf16.msra.mxu0 0
  %463 = vmatprep.subr.bf16.mxu0 0
  %464 = vmatpush1.bf16.msra.mxu0 0
  %465 = vmatprep.subr.bf16.mxu0 0
  %466 = vmatpush1.bf16.msra.mxu0 0
  %467 = vmatprep.subr.bf16.mxu0 0
  %468 = vmatpush1.bf16.msra.mxu0 0
  %469 = vmatprep.subr.bf16.mxu0 0
  %470 = vmatpush1.bf16.msra.mxu0 %v453
  %471 = vmatprep.subr.bf16.mxu0 0
  %472 = vmatpush2.bf16.msra.mxu0 0
  %473 = vmatprep.subr.bf16.mxu0 0
  %474 = vmatpush2.bf16.msra.mxu0 0
  %475 = vmatprep.subr.bf16.mxu0 0
  %476 = vmatpush2.bf16.msra.mxu0 0
  %477 = vmatprep.subr.bf16.mxu0 0
  %478 = vmatpush2.bf16.msra.mxu0 0
  %479 = vmatprep.subr.bf16.mxu0 0
  %480 = vmatpush2.bf16.msra.mxu0 0
  %481 = vmatprep.subr.bf16.mxu0 0
  %482 = vmatpush2.bf16.msra.mxu0 0
  %483 = vmatprep.subr.bf16.mxu0 0
  %484 = vmatpush2.bf16.msra.mxu0 0
  %485 = vmatprep.subr.bf16.mxu0 0
  %486 = vmatpush2.bf16.msra.mxu0 0
  %487 = vmatprep.mubr.bf16.mxu0 0
  %488 = vmatmul.mubr.bf16.gmra.mxu0 %v450
  %v489 = vpop.f32.mrf.mxu0
  %v490 = vadd.f32 0.0, %v489
  %v491 = vpop.f32.mrf.mxu0
  %v492 = vpop.f32.mrf.mxu0
  %v493 = vpop.f32.mrf.mxu0
  %494 = vdwg.mxu0
  %496 = vrot.lane.b32.xlu0 %v490, 16
  %v497 = vpop.permute.xlu0 %496
  %vm499 = vcmask 195712
  %500 = vst.msk [vmem:[#allocation2] sm:$0xff] %vm499, %v497
  %501 = vrot.lane.b32.xlu0 %v146, 104
  %v502 = vpop.permute.xlu0 %501
  %503 = vrot.lane.b32.xlu0 %v146, 72
  %v504 = vpop.permute.xlu0 %503
  %v506 = vsel %vm150, %v502, 0
  %v509 = vsel %vm150, %v504, 0
  %511 = vmatprep.subr.bf16.mxu0 0
  %512 = vmatpush1.bf16.xpose.msra.mxu0 0
  %513 = vmatprep.subr.bf16.mxu0 0
  %514 = vmatpush1.bf16.xpose.msra.mxu0 0
  %515 = vmatprep.subr.bf16.mxu0 0
  %516 = vmatpush1.bf16.xpose.msra.mxu0 0
  %517 = vmatprep.subr.bf16.mxu0 0
  %518 = vmatpush1.bf16.xpose.msra.mxu0 0
  %519 = vmatprep.subr.bf16.mxu0 0
  %520 = vmatpush1.bf16.xpose.msra.mxu0 0
  %521 = vmatprep.subr.bf16.mxu0 0
  %522 = vmatpush1.bf16.xpose.msra.mxu0 0
  %523 = vmatprep.subr.bf16.mxu0 0
  %524 = vmatpush1.bf16.xpose.msra.mxu0 0
  %525 = vmatprep.subr.bf16.mxu0 0
  %526 = vmatpush1.bf16.xpose.msra.mxu0 %v509
  %527 = vmatprep.subr.bf16.mxu0 0
  %528 = vmatpush2.bf16.xpose.msra.mxu0 0
  %529 = vmatprep.subr.bf16.mxu0 0
  %530 = vmatpush2.bf16.xpose.msra.mxu0 0
  %531 = vmatprep.subr.bf16.mxu0 0
  %532 = vmatpush2.bf16.xpose.msra.mxu0 0
  %533 = vmatprep.subr.bf16.mxu0 0
  %534 = vmatpush2.bf16.xpose.msra.mxu0 0
  %535 = vmatprep.subr.bf16.mxu0 0
  %536 = vmatpush2.bf16.xpose.msra.mxu0 0
  %537 = vmatprep.subr.bf16.mxu0 0
  %538 = vmatpush2.bf16.xpose.msra.mxu0 0
  %539 = vmatprep.subr.bf16.mxu0 0
  %540 = vmatpush2.bf16.xpose.msra.mxu0 0
  %541 = vmatprep.subr.bf16.mxu0 0
  %542 = vmatpush2.bf16.xpose.msra.mxu0 0
  %543 = vmatprep.mubr.bf16.mxu0 0
  %544 = vmatmul.mubr.bf16.gmra.mxu0 %v506
  %v545 = vpop.f32.mrf.mxu0
  %v546 = vadd.f32 0.0, %v545
  %v547 = vpop.f32.mrf.mxu0
  %v548 = vpop.f32.mrf.mxu0
  %v549 = vpop.f32.mrf.mxu0
  %550 = vdwg.mxu0
  %v551 = vmul.f32 %v546, 0.35355338
  %v552 = vadd.f32 %v551, %v201
  %v553 = vsel %vm150, %v552, -inf
  %554 = vmax.xlane.f32.xlu0 %v553
  %v555 = vpop.xlane.xlu0 %554
  %v556 = vsub.f32 %v552, %v555
  %v557 = vmul.f32 %v556, 1.442695
  %v558 = vpow.pop %v557
  %v559 = vsel %vm150, %v558, 0.0
  %560 = vadd.xlane.f32.xlu0 %v559
  %v561 = vpop.xlane.xlu0 %560
  %v562 = vrcp.pop %v561
  %v563 = vmul.f32 %v558, %v562
  %v564 = vpack.c.bf16 %v563, %v563
  %565 = vrot.lane.b32.xlu0 %v146, 40
  %v566 = vpop.permute.xlu0 %565
  %v568 = vsel %vm150, %v564, 0
  %v571 = vsel %vm220, %v566, 0
  %573 = vmatprep.subr.bf16.mxu0 0
  %574 = vmatpush1.bf16.msra.mxu0 0
  %575 = vmatprep.subr.bf16.mxu0 0
  %576 = vmatpush1.bf16.msra.mxu0 0
  %577 = vmatprep.subr.bf16.mxu0 0
  %578 = vmatpush1.bf16.msra.mxu0 0
  %579 = vmatprep.subr.bf16.mxu0 0
  %580 = vmatpush1.bf16.msra.mxu0 0
  %581 = vmatprep.subr.bf16.mxu0 0
  %582 = vmatpush1.bf16.msra.mxu0 0
  %583 = vmatprep.subr.bf16.mxu0 0
  %584 = vmatpush1.bf16.msra.mxu0 0
  %585 = vmatprep.subr.bf16.mxu0 0
  %586 = vmatpush1.bf16.msra.mxu0 0
  %587 = vmatprep.subr.bf16.mxu0 0
  %588 = vmatpush1.bf16.msra.mxu0 %v571
  %589 = vmatprep.subr.bf16.mxu0 0
  %590 = vmatpush2.bf16.msra.mxu0 0
  %591 = vmatprep.subr.bf16.mxu0 0
  %592 = vmatpush2.bf16.msra.mxu0 0
  %593 = vmatprep.subr.bf16.mxu0 0
  %594 = vmatpush2.bf16.msra.mxu0 0
  %595 = vmatprep.subr.bf16.mxu0 0
  %596 = vmatpush2.bf16.msra.mxu0 0
  %597 = vmatprep.subr.bf16.mxu0 0
  %598 = vmatpush2.bf16.msra.mxu0 0
  %599 = vmatprep.subr.bf16.mxu0 0
  %600 = vmatpush2.bf16.msra.mxu0 0
  %601 = vmatprep.subr.bf16.mxu0 0
  %602 = vmatpush2.bf16.msra.mxu0 0
  %603 = vmatprep.subr.bf16.mxu0 0
  %604 = vmatpush2.bf16.msra.mxu0 0
  %605 = vmatprep.mubr.bf16.mxu0 0
  %606 = vmatmul.mubr.bf16.gmra.mxu0 %v568
  %v607 = vpop.f32.mrf.mxu0
  %v608 = vadd.f32 0.0, %v607
  %v609 = vpop.f32.mrf.mxu0
  %v610 = vpop.f32.mrf.mxu0
  %v611 = vpop.f32.mrf.mxu0
  %612 = vdwg.mxu0
  %614 = vrot.lane.b32.xlu0 %v608, 24
  %v615 = vpop.permute.xlu0 %614
  %vm617 = vcmask 261312
  %618 = vst.msk [vmem:[#allocation2] sm:$0xff] %vm617, %v615
  %v619 = vld [vmem:[%s1 + $0x1] sm:$0x1]
  %v620 = vpack.c.bf16 %v142, %v142
  %622 = vrot.lane.b32.xlu0 %v620, 96
  %v623 = vpop.permute.xlu0 %622
  %v625 = vsel %vm150, %v620, 0
  %v628 = vsel %vm150, %v623, 0
  %630 = vmatprep.subr.bf16.mxu0 0
  %631 = vmatpush1.bf16.xpose.msra.mxu0 0
  %632 = vmatprep.subr.bf16.mxu0 0
  %633 = vmatpush1.bf16.xpose.msra.mxu0 0
  %634 = vmatprep.subr.bf16.mxu0 0
  %635 = vmatpush1.bf16.xpose.msra.mxu0 0
  %636 = vmatprep.subr.bf16.mxu0 0
  %637 = vmatpush1.bf16.xpose.msra.mxu0 0
  %638 = vmatprep.subr.bf16.mxu0 0
  %639 = vmatpush1.bf16.xpose.msra.mxu0 0
  %640 = vmatprep.subr.bf16.mxu0 0
  %641 = vmatpush1.bf16.xpose.msra.mxu0 0
  %642 = vmatprep.subr.bf16.mxu0 0
  %643 = vmatpush1.bf16.xpose.msra.mxu0 0
  %644 = vmatprep.subr.bf16.mxu0 0
  %645 = vmatpush1.bf16.xpose.msra.mxu0 %v628
  %646 = vmatprep.subr.bf16.mxu0 0
  %647 = vmatpush2.bf16.xpose.msra.mxu0 0
  %648 = vmatprep.subr.bf16.mxu0 0
  %649 = vmatpush2.bf16.xpose.msra.mxu0 0
  %650 = vmatprep.subr.bf16.mxu0 0
  %651 = vmatpush2.bf16.xpose.msra.mxu0 0
  %652 = vmatprep.subr.bf16.mxu0 0
  %653 = vmatpush2.bf16.xpose.msra.mxu0 0
  %654 = vmatprep.subr.bf16.mxu0 0
  %655 = vmatpush2.bf16.xpose.msra.mxu0 0
  %656 = vmatprep.subr.bf16.mxu0 0
  %657 = vmatpush2.bf16.xpose.msra.mxu0 0
  %658 = vmatprep.subr.bf16.mxu0 0
  %659 = vmatpush2.bf16.xpose.msra.mxu0 0
  %660 = vmatprep.subr.bf16.mxu0 0
  %661 = vmatpush2.bf16.xpose.msra.mxu0 0
  %662 = vmatprep.mubr.bf16.mxu0 0
  %663 = vmatmul.mubr.bf16.gmra.mxu0 %v625
  %v664 = vpop.f32.mrf.mxu0
  %v665 = vadd.f32 0.0, %v664
  %v666 = vpop.f32.mrf.mxu0
  %v667 = vpop.f32.mrf.mxu0
  %v668 = vpop.f32.mrf.mxu0
  %669 = vdwg.mxu0
  %v670 = vmul.f32 %v665, 0.35355338
  %v671 = vlaneseq
  %v672 = vshrl.u32 %v671, 7
  %v673 = vsub.s32 0, %v672
  %v674 = vrot.slane %v619, %v673
  %v675 = vadd.f32 %v670, %v674
  %v676 = vsel %vm150, %v675, -inf
  %677 = vmax.xlane.f32.xlu0 %v676
  %v678 = vpop.xlane.xlu0 %677
  %v679 = vsub.f32 %v675, %v678
  %v680 = vmul.f32 %v679, 1.442695
  %v681 = vpow.pop %v680
  %v682 = vsel %vm150, %v681, 0.0
  %683 = vadd.xlane.f32.xlu0 %v682
  %v684 = vpop.xlane.xlu0 %683
  %v685 = vrcp.pop %v684
  %v686 = vmul.f32 %v681, %v685
  %v687 = vpack.c.bf16 %v686, %v686
  %688 = vrot.lane.b32.xlu0 %v620, 64
  %v689 = vpop.permute.xlu0 %688
  %v691 = vsel %vm150, %v687, 0
  %v694 = vsel %vm220, %v689, 0
  %696 = vmatprep.subr.bf16.mxu0 0
  %697 = vmatpush1.bf16.msra.mxu0 0
  %698 = vmatprep.subr.bf16.mxu0 0
  %699 = vmatpush1.bf16.msra.mxu0 0
  %700 = vmatprep.subr.bf16.mxu0 0
  %701 = vmatpush1.bf16.msra.mxu0 0
  %702 = vmatprep.subr.bf16.mxu0 0
  %703 = vmatpush1.bf16.msra.mxu0 0
  %704 = vmatprep.subr.bf16.mxu0 0
  %705 = vmatpush1.bf16.msra.mxu0 0
  %706 = vmatprep.subr.bf16.mxu0 0
  %707 = vmatpush1.bf16.msra.mxu0 0
  %708 = vmatprep.subr.bf16.mxu0 0
  %709 = vmatpush1.bf16.msra.mxu0 0
  %710 = vmatprep.subr.bf16.mxu0 0
  %711 = vmatpush1.bf16.msra.mxu0 %v694
  %712 = vmatprep.subr.bf16.mxu0 0
  %713 = vmatpush2.bf16.msra.mxu0 0
  %714 = vmatprep.subr.bf16.mxu0 0
  %715 = vmatpush2.bf16.msra.mxu0 0
  %716 = vmatprep.subr.bf16.mxu0 0
  %717 = vmatpush2.bf16.msra.mxu0 0
  %718 = vmatprep.subr.bf16.mxu0 0
  %719 = vmatpush2.bf16.msra.mxu0 0
  %720 = vmatprep.subr.bf16.mxu0 0
  %721 = vmatpush2.bf16.msra.mxu0 0
  %722 = vmatprep.subr.bf16.mxu0 0
  %723 = vmatpush2.bf16.msra.mxu0 0
  %724 = vmatprep.subr.bf16.mxu0 0
  %725 = vmatpush2.bf16.msra.mxu0 0
  %726 = vmatprep.subr.bf16.mxu0 0
  %727 = vmatpush2.bf16.msra.mxu0 0
  %728 = vmatprep.mubr.bf16.mxu0 0
  %729 = vmatmul.mubr.bf16.gmra.mxu0 %v691
  %v730 = vpop.f32.mrf.mxu0
  %v731 = vadd.f32 0.0, %v730
  %v732 = vpop.f32.mrf.mxu0
  %v733 = vpop.f32.mrf.mxu0
  %v734 = vpop.f32.mrf.mxu0
  %735 = vdwg.mxu0
  %736 = vst.msk [vmem:[#allocation2 + $0x8] sm:$0xff] %vm150, %v731
  %737 = vrot.lane.b32.xlu0 %v620, 120
  %v738 = vpop.permute.xlu0 %737
  %739 = vrot.lane.b32.xlu0 %v620, 88
  %v740 = vpop.permute.xlu0 %739
  %v742 = vsel %vm150, %v738, 0
  %v745 = vsel %vm150, %v740, 0
  %747 = vmatprep.subr.bf16.mxu0 0
  %748 = vmatpush1.bf16.xpose.msra.mxu0 0
  %749 = vmatprep.subr.bf16.mxu0 0
  %750 = vmatpush1.bf16.xpose.msra.mxu0 0
  %751 = vmatprep.subr.bf16.mxu0 0
  %752 = vmatpush1.bf16.xpose.msra.mxu0 0
  %753 = vmatprep.subr.bf16.mxu0 0
  %754 = vmatpush1.bf16.xpose.msra.mxu0 0
  %755 = vmatprep.subr.bf16.mxu0 0
  %756 = vmatpush1.bf16.xpose.msra.mxu0 0
  %757 = vmatprep.subr.bf16.mxu0 0
  %758 = vmatpush1.bf16.xpose.msra.mxu0 0
  %759 = vmatprep.subr.bf16.mxu0 0
  %760 = vmatpush1.bf16.xpose.msra.mxu0 0
  %761 = vmatprep.subr.bf16.mxu0 0
  %762 = vmatpush1.bf16.xpose.msra.mxu0 %v745
  %763 = vmatprep.subr.bf16.mxu0 0
  %764 = vmatpush2.bf16.xpose.msra.mxu0 0
  %765 = vmatprep.subr.bf16.mxu0 0
  %766 = vmatpush2.bf16.xpose.msra.mxu0 0
  %767 = vmatprep.subr.bf16.mxu0 0
  %768 = vmatpush2.bf16.xpose.msra.mxu0 0
  %769 = vmatprep.subr.bf16.mxu0 0
  %770 = vmatpush2.bf16.xpose.msra.mxu0 0
  %771 = vmatprep.subr.bf16.mxu0 0
  %772 = vmatpush2.bf16.xpose.msra.mxu0 0
  %773 = vmatprep.subr.bf16.mxu0 0
  %774 = vmatpush2.bf16.xpose.msra.mxu0 0
  %775 = vmatprep.subr.bf16.mxu0 0
  %776 = vmatpush2.bf16.xpose.msra.mxu0 0
  %777 = vmatprep.subr.bf16.mxu0 0
  %778 = vmatpush2.bf16.xpose.msra.mxu0 0
  %779 = vmatprep.mubr.bf16.mxu0 0
  %780 = vmatmul.mubr.bf16.gmra.mxu0 %v742
  %v781 = vpop.f32.mrf.mxu0
  %v782 = vadd.f32 0.0, %v781
  %v783 = vpop.f32.mrf.mxu0
  %v784 = vpop.f32.mrf.mxu0
  %v785 = vpop.f32.mrf.mxu0
  %786 = vdwg.mxu0
  %v787 = vmul.f32 %v782, 0.35355338
  %v788 = vadd.f32 %v787, %v674
  %v789 = vsel %vm150, %v788, -inf
  %790 = vmax.xlane.f32.xlu0 %v789
  %v791 = vpop.xlane.xlu0 %790
  %v792 = vsub.f32 %v788, %v791
  %v793 = vmul.f32 %v792, 1.442695
  %v794 = vpow.pop %v793
  %v795 = vsel %vm150, %v794, 0.0
  %796 = vadd.xlane.f32.xlu0 %v795
  %v797 = vpop.xlane.xlu0 %796
  %v798 = vrcp.pop %v797
  %v799 = vmul.f32 %v794, %v798
  %v800 = vpack.c.bf16 %v799, %v799
  %801 = vrot.lane.b32.xlu0 %v620, 56
  %v802 = vpop.permute.xlu0 %801
  %v804 = vsel %vm150, %v800, 0
  %v807 = vsel %vm220, %v802, 0
  %809 = vmatprep.subr.bf16.mxu0 0
  %810 = vmatpush1.bf16.msra.mxu0 0
  %811 = vmatprep.subr.bf16.mxu0 0
  %812 = vmatpush1.bf16.msra.mxu0 0
  %813 = vmatprep.subr.bf16.mxu0 0
  %814 = vmatpush1.bf16.msra.mxu0 0
  %815 = vmatprep.subr.bf16.mxu0 0
  %816 = vmatpush1.bf16.msra.mxu0 0
  %817 = vmatprep.subr.bf16.mxu0 0
  %818 = vmatpush1.bf16.msra.mxu0 0
  %819 = vmatprep.subr.bf16.mxu0 0
  %820 = vmatpush1.bf16.msra.mxu0 0
  %821 = vmatprep.subr.bf16.mxu0 0
  %822 = vmatpush1.bf16.msra.mxu0 0
  %823 = vmatprep.subr.bf16.mxu0 0
  %824 = vmatpush1.bf16.msra.mxu0 %v807
  %825 = vmatprep.subr.bf16.mxu0 0
  %826 = vmatpush2.bf16.msra.mxu0 0
  %827 = vmatprep.subr.bf16.mxu0 0
  %828 = vmatpush2.bf16.msra.mxu0 0
  %829 = vmatprep.subr.bf16.mxu0 0
  %830 = vmatpush2.bf16.msra.mxu0 0
  %831 = vmatprep.subr.bf16.mxu0 0
  %832 = vmatpush2.bf16.msra.mxu0 0
  %833 = vmatprep.subr.bf16.mxu0 0
  %834 = vmatpush2.bf16.msra.mxu0 0
  %835 = vmatprep.subr.bf16.mxu0 0
  %836 = vmatpush2.bf16.msra.mxu0 0
  %837 = vmatprep.subr.bf16.mxu0 0
  %838 = vmatpush2.bf16.msra.mxu0 0
  %839 = vmatprep.subr.bf16.mxu0 0
  %840 = vmatpush2.bf16.msra.mxu0 0
  %841 = vmatprep.mubr.bf16.mxu0 0
  %842 = vmatmul.mubr.bf16.gmra.mxu0 %v804
  %v843 = vpop.f32.mrf.mxu0
  %v844 = vadd.f32 0.0, %v843
  %v845 = vpop.f32.mrf.mxu0
  %v846 = vpop.f32.mrf.mxu0
  %v847 = vpop.f32.mrf.mxu0
  %848 = vdwg.mxu0
  %850 = vrot.lane.b32.xlu0 %v844, 8
  %v851 = vpop.permute.xlu0 %850
  %853 = vst.msk [vmem:[#allocation2 + $0x8] sm:$0xff] %vm381, %v851
  %854 = vrot.lane.b32.xlu0 %v620, 112
  %v855 = vpop.permute.xlu0 %854
  %856 = vrot.lane.b32.xlu0 %v620, 80
  %v857 = vpop.permute.xlu0 %856
  %v859 = vsel %vm150, %v855, 0
  %v862 = vsel %vm150, %v857, 0
  %864 = vmatprep.subr.bf16.mxu0 0
  %865 = vmatpush1.bf16.xpose.msra.mxu0 0
  %866 = vmatprep.subr.bf16.mxu0 0
  %867 = vmatpush1.bf16.xpose.msra.mxu0 0
  %868 = vmatprep.subr.bf16.mxu0 0
  %869 = vmatpush1.bf16.xpose.msra.mxu0 0
  %870 = vmatprep.subr.bf16.mxu0 0
  %871 = vmatpush1.bf16.xpose.msra.mxu0 0
  %872 = vmatprep.subr.bf16.mxu0 0
  %873 = vmatpush1.bf16.xpose.msra.mxu0 0
  %874 = vmatprep.subr.bf16.mxu0 0
  %875 = vmatpush1.bf16.xpose.msra.mxu0 0
  %876 = vmatprep.subr.bf16.mxu0 0
  %877 = vmatpush1.bf16.xpose.msra.mxu0 0
  %878 = vmatprep.subr.bf16.mxu0 0
  %879 = vmatpush1.bf16.xpose.msra.mxu0 %v862
  %880 = vmatprep.subr.bf16.mxu0 0
  %881 = vmatpush2.bf16.xpose.msra.mxu0 0
  %882 = vmatprep.subr.bf16.mxu0 0
  %883 = vmatpush2.bf16.xpose.msra.mxu0 0
  %884 = vmatprep.subr.bf16.mxu0 0
  %885 = vmatpush2.bf16.xpose.msra.mxu0 0
  %886 = vmatprep.subr.bf16.mxu0 0
  %887 = vmatpush2.bf16.xpose.msra.mxu0 0
  %888 = vmatprep.subr.bf16.mxu0 0
  %889 = vmatpush2.bf16.xpose.msra.mxu0 0
  %890 = vmatprep.subr.bf16.mxu0 0
  %891 = vmatpush2.bf16.xpose.msra.mxu0 0
  %892 = vmatprep.subr.bf16.mxu0 0
  %893 = vmatpush2.bf16.xpose.msra.mxu0 0
  %894 = vmatprep.subr.bf16.mxu0 0
  %895 = vmatpush2.bf16.xpose.msra.mxu0 0
  %896 = vmatprep.mubr.bf16.mxu0 0
  %897 = vmatmul.mubr.bf16.gmra.mxu0 %v859
  %v898 = vpop.f32.mrf.mxu0
  %v899 = vadd.f32 0.0, %v898
  %v900 = vpop.f32.mrf.mxu0
  %v901 = vpop.f32.mrf.mxu0
  %v902 = vpop.f32.mrf.mxu0
  %903 = vdwg.mxu0
  %v904 = vmul.f32 %v899, 0.35355338
  %v905 = vadd.f32 %v904, %v674
  %v906 = vsel %vm150, %v905, -inf
  %907 = vmax.xlane.f32.xlu0 %v906
  %v908 = vpop.xlane.xlu0 %907
  %v909 = vsub.f32 %v905, %v908
  %v910 = vmul.f32 %v909, 1.442695
  %v911 = vpow.pop %v910
  %v912 = vsel %vm150, %v911, 0.0
  %913 = vadd.xlane.f32.xlu0 %v912
  %v914 = vpop.xlane.xlu0 %913
  %v915 = vrcp.pop %v914
  %v916 = vmul.f32 %v911, %v915
  %v917 = vpack.c.bf16 %v916, %v916
  %918 = vrot.lane.b32.xlu0 %v620, 48
  %v919 = vpop.permute.xlu0 %918
  %v921 = vsel %vm150, %v917, 0
  %v924 = vsel %vm220, %v919, 0
  %926 = vmatprep.subr.bf16.mxu0 0
  %927 = vmatpush1.bf16.msra.mxu0 0
  %928 = vmatprep.subr.bf16.mxu0 0
  %929 = vmatpush1.bf16.msra.mxu0 0
  %930 = vmatprep.subr.bf16.mxu0 0
  %931 = vmatpush1.bf16.msra.mxu0 0
  %932 = vmatprep.subr.bf16.mxu0 0
  %933 = vmatpush1.bf16.msra.mxu0 0
  %934 = vmatprep.subr.bf16.mxu0 0
  %935 = vmatpush1.bf16.msra.mxu0 0
  %936 = vmatprep.subr.bf16.mxu0 0
  %937 = vmatpush1.bf16.msra.mxu0 0
  %938 = vmatprep.subr.bf16.mxu0 0
  %939 = vmatpush1.bf16.msra.mxu0 0
  %940 = vmatprep.subr.bf16.mxu0 0
  %941 = vmatpush1.bf16.msra.mxu0 %v924
  %942 = vmatprep.subr.bf16.mxu0 0
  %943 = vmatpush2.bf16.msra.mxu0 0
  %944 = vmatprep.subr.bf16.mxu0 0
  %945 = vmatpush2.bf16.msra.mxu0 0
  %946 = vmatprep.subr.bf16.mxu0 0
  %947 = vmatpush2.bf16.msra.mxu0 0
  %948 = vmatprep.subr.bf16.mxu0 0
  %949 = vmatpush2.bf16.msra.mxu0 0
  %950 = vmatprep.subr.bf16.mxu0 0
  %951 = vmatpush2.bf16.msra.mxu0 0
  %952 = vmatprep.subr.bf16.mxu0 0
  %953 = vmatpush2.bf16.msra.mxu0 0
  %954 = vmatprep.subr.bf16.mxu0 0
  %955 = vmatpush2.bf16.msra.mxu0 0
  %956 = vmatprep.subr.bf16.mxu0 0
  %957 = vmatpush2.bf16.msra.mxu0 0
  %958 = vmatprep.mubr.bf16.mxu0 0
  %959 = vmatmul.mubr.bf16.gmra.mxu0 %v921
  %v960 = vpop.f32.mrf.mxu0
  %v961 = vadd.f32 0.0, %v960
  %v962 = vpop.f32.mrf.mxu0
  %v963 = vpop.f32.mrf.mxu0
  %v964 = vpop.f32.mrf.mxu0
  %965 = vdwg.mxu0
  %967 = vrot.lane.b32.xlu0 %v961, 16
  %v968 = vpop.permute.xlu0 %967
  %970 = vst.msk [vmem:[#allocation2 + $0x8] sm:$0xff] %vm499, %v968
  %971 = vrot.lane.b32.xlu0 %v620, 104
  %v972 = vpop.permute.xlu0 %971
  %973 = vrot.lane.b32.xlu0 %v620, 72
  %v974 = vpop.permute.xlu0 %973
  %v976 = vsel %vm150, %v972, 0
  %v979 = vsel %vm150, %v974, 0
  %981 = vmatprep.subr.bf16.mxu0 0
  %982 = vmatpush1.bf16.xpose.msra.mxu0 0
  %983 = vmatprep.subr.bf16.mxu0 0
  %984 = vmatpush1.bf16.xpose.msra.mxu0 0
  %985 = vmatprep.subr.bf16.mxu0 0
  %986 = vmatpush1.bf16.xpose.msra.mxu0 0
  %987 = vmatprep.subr.bf16.mxu0 0
  %988 = vmatpush1.bf16.xpose.msra.mxu0 0
  %989 = vmatprep.subr.bf16.mxu0 0
  %990 = vmatpush1.bf16.xpose.msra.mxu0 0
  %991 = vmatprep.subr.bf16.mxu0 0
  %992 = vmatpush1.bf16.xpose.msra.mxu0 0
  %993 = vmatprep.subr.bf16.mxu0 0
  %994 = vmatpush1.bf16.xpose.msra.mxu0 0
  %995 = vmatprep.subr.bf16.mxu0 0
  %996 = vmatpush1.bf16.xpose.msra.mxu0 %v979
  %997 = vmatprep.subr.bf16.mxu0 0
  %998 = vmatpush2.bf16.xpose.msra.mxu0 0
  %999 = vmatprep.subr.bf16.mxu0 0
  %1000 = vmatpush2.bf16.xpose.msra.mxu0 0
  %1001 = vmatprep.subr.bf16.mxu0 0
  %1002 = vmatpush2.bf16.xpose.msra.mxu0 0
  %1003 = vmatprep.subr.bf16.mxu0 0
  %1004 = vmatpush2.bf16.xpose.msra.mxu0 0
  %1005 = vmatprep.subr.bf16.mxu0 0
  %1006 = vmatpush2.bf16.xpose.msra.mxu0 0
  %1007 = vmatprep.subr.bf16.mxu0 0
  %1008 = vmatpush2.bf16.xpose.msra.mxu0 0
  %1009 = vmatprep.subr.bf16.mxu0 0
  %1010 = vmatpush2.bf16.xpose.msra.mxu0 0
  %1011 = vmatprep.subr.bf16.mxu0 0
  %1012 = vmatpush2.bf16.xpose.msra.mxu0 0
  %1013 = vmatprep.mubr.bf16.mxu0 0
  %1014 = vmatmul.mubr.bf16.gmra.mxu0 %v976
  %v1015 = vpop.f32.mrf.mxu0
  %v1016 = vadd.f32 0.0, %v1015
  %v1017 = vpop.f32.mrf.mxu0
  %v1018 = vpop.f32.mrf.mxu0
  %v1019 = vpop.f32.mrf.mxu0
  %1020 = vdwg.mxu0
  %v1021 = vmul.f32 %v1016, 0.35355338
  %v1022 = vadd.f32 %v1021, %v674
  %v1023 = vsel %vm150, %v1022, -inf
  %1024 = vmax.xlane.f32.xlu0 %v1023
  %v1025 = vpop.xlane.xlu0 %1024
  %v1026 = vsub.f32 %v1022, %v1025
  %v1027 = vmul.f32 %v1026, 1.442695
  %v1028 = vpow.pop %v1027
  %v1029 = vsel %vm150, %v1028, 0.0
  %1030 = vadd.xlane.f32.xlu0 %v1029
  %v1031 = vpop.xlane.xlu0 %1030
  %v1032 = vrcp.pop %v1031
  %v1033 = vmul.f32 %v1028, %v1032
  %v1034 = vpack.c.bf16 %v1033, %v1033
  %1035 = vrot.lane.b32.xlu0 %v620, 40
  %v1036 = vpop.permute.xlu0 %1035
  %v1038 = vsel %vm150, %v1034, 0
  %v1041 = vsel %vm220, %v1036, 0
  %1043 = vmatprep.subr.bf16.mxu0 0
  %1044 = vmatpush1.bf16.msra.mxu0 0
  %1045 = vmatprep.subr.bf16.mxu0 0
  %1046 = vmatpush1.bf16.msra.mxu0 0
  %1047 = vmatprep.subr.bf16.mxu0 0
  %1048 = vmatpush1.bf16.msra.mxu0 0
  %1049 = vmatprep.subr.bf16.mxu0 0
  %1050 = vmatpush1.bf16.msra.mxu0 0
  %1051 = vmatprep.subr.bf16.mxu0 0
  %1052 = vmatpush1.bf16.msra.mxu0 0
  %1053 = vmatprep.subr.bf16.mxu0 0
  %1054 = vmatpush1.bf16.msra.mxu0 0
  %1055 = vmatprep.subr.bf16.mxu0 0
  %1056 = vmatpush1.bf16.msra.mxu0 0
  %1057 = vmatprep.subr.bf16.mxu0 0
  %1058 = vmatpush1.bf16.msra.mxu0 %v1041
  %1059 = vmatprep.subr.bf16.mxu0 0
  %1060 = vmatpush2.bf16.msra.mxu0 0
  %1061 = vmatprep.subr.bf16.mxu0 0
  %1062 = vmatpush2.bf16.msra.mxu0 0
  %1063 = vmatprep.subr.bf16.mxu0 0
  %1064 = vmatpush2.bf16.msra.mxu0 0
  %1065 = vmatprep.subr.bf16.mxu0 0
  %1066 = vmatpush2.bf16.msra.mxu0 0
  %1067 = vmatprep.subr.bf16.mxu0 0
  %1068 = vmatpush2.bf16.msra.mxu0 0
  %1069 = vmatprep.subr.bf16.mxu0 0
  %1070 = vmatpush2.bf16.msra.mxu0 0
  %1071 = vmatprep.subr.bf16.mxu0 0
  %1072 = vmatpush2.bf16.msra.mxu0 0
  %1073 = vmatprep.subr.bf16.mxu0 0
  %1074 = vmatpush2.bf16.msra.mxu0 0
  %1075 = vmatprep.mubr.bf16.mxu0 0
  %1076 = vmatmul.mubr.bf16.gmra.mxu0 %v1038
  %v1077 = vpop.f32.mrf.mxu0
  %v1078 = vadd.f32 0.0, %v1077
  %v1079 = vpop.f32.mrf.mxu0
  %v1080 = vpop.f32.mrf.mxu0
  %v1081 = vpop.f32.mrf.mxu0
  %1082 = vdwg.mxu0
  %1084 = vrot.lane.b32.xlu0 %v1078, 24
  %v1085 = vpop.permute.xlu0 %1084
  %1087 = vst.msk [vmem:[#allocation2 + $0x8] sm:$0xff] %vm617, %v1085
  %v1088 = vld [vmem:[#allocation2] sm:$0xff]
  %v1089 = vld [vmem:[#allocation2 + $0x8] sm:$0xff]
  %v1090 = vpack.c.bf16 %v1089, %v1088
  %v1091 = vld [vmem:[%s4] sm:$0xf]
  %v1092 = vld [vmem:[%s4 + $0x4] sm:$0xf]
  %v1093 = vld [vmem:[%s4 + $0x8] sm:$0xf]
  %v1094 = vld [vmem:[%s4 + $0xc] sm:$0xf]
  %v1095 = vlaneseq
  %v1096 = vshrl.u32 %v1095, 7
  %v1097 = vsub.s32 1, %v1096
  %v1098 = vrot.slane %v79, %v1097
  %v1103 = vunpack.c.l.b16 %v1091
  %v1104 = vunpack.c.l.b16 %v1092
  %v1105 = vunpack.c.l.b16 %v1093
  %v1106 = vunpack.c.l.b16 %v1094
  %v1107 = vpack.c.b16 %v1104, %v1103
  %v1108 = vpack.c.b16 %v1106, %v1105
  %v1112 = vsel %vm39, %v1090, 0
  %1114 = vmatprep.subr.bf16.mxu0 0
  %1115 = vmatpush1.bf16.msra.mxu0 0
  %1116 = vmatprep.subr.bf16.mxu0 0
  %1117 = vmatpush1.bf16.msra.mxu0 0
  %1118 = vmatprep.subr.bf16.mxu0 0
  %1119 = vmatpush1.bf16.msra.mxu0 0
  %1120 = vmatprep.subr.bf16.mxu0 0
  %1121 = vmatpush1.bf16.msra.mxu0 0
  %1122 = vmatprep.subr.bf16.mxu0 0
  %1123 = vmatpush1.bf16.msra.mxu0 0
  %1124 = vmatprep.subr.bf16.mxu0 0
  %1125 = vmatpush1.bf16.msra.mxu0 0
  %1126 = vmatprep.subr.bf16.mxu0 0
  %1127 = vmatpush1.bf16.msra.mxu0 %v1108
  %1128 = vmatprep.subr.bf16.mxu0 0
  %1129 = vmatpush1.bf16.msra.mxu0 %v1107
  %1130 = vmatprep.subr.bf16.mxu0 0
  %1131 = vmatpush2.bf16.msra.mxu0 0
  %1132 = vmatprep.subr.bf16.mxu0 0
  %1133 = vmatpush2.bf16.msra.mxu0 0
  %1134 = vmatprep.subr.bf16.mxu0 0
  %1135 = vmatpush2.bf16.msra.mxu0 0
  %1136 = vmatprep.subr.bf16.mxu0 0
  %1137 = vmatpush2.bf16.msra.mxu0 0
  %1138 = vmatprep.subr.bf16.mxu0 0
  %1139 = vmatpush2.bf16.msra.mxu0 0
  %1140 = vmatprep.subr.bf16.mxu0 0
  %1141 = vmatpush2.bf16.msra.mxu0 0
  %1142 = vmatprep.subr.bf16.mxu0 0
  %1143 = vmatpush2.bf16.msra.mxu0 0
  %1144 = vmatprep.subr.bf16.mxu0 0
  %1145 = vmatpush2.bf16.msra.mxu0 0
  %1146 = vmatprep.mubr.bf16.mxu0 0
  %1147 = vmatmul.mubr.bf16.gmra.mxu0 %v1112
  %v1148 = vpop.f32.mrf.mxu0
  %v1149 = vadd.f32 %v1098, %v1148
  %v1150 = vpop.f32.mrf.mxu0
  %v1151 = vpop.f32.mrf.mxu0
  %v1152 = vadd.f32 %v1098, %v1151
  %v1153 = vpop.f32.mrf.mxu0
  %1154 = vdwg.mxu0
  %v1155 = vadd.f32 %v77, %v1149
  %v1156 = vadd.f32 %v78, %v1152
  %v1157 = vsel %vm39, %v1155, 0.0
  %1158 = vadd.xlane.f32.xlu0 %v1157
  %v1159 = vpop.xlane.xlu0 %1158
  %v1160 = vsel %vm39, %v1156, 0.0
  %1161 = vadd.xlane.f32.xlu0 %v1160
  %v1162 = vpop.xlane.xlu0 %1161
  %v1163 = vmul.f32 %v1159, %v46
  %v1164 = vmul.f32 %v1162, %v46
  %v1165 = vsub.f32 %v1155, %v1163
  %v1166 = vsub.f32 %v1156, %v1164
  %v1167 = vmul.f32 %v1165, %v1165
  %v1168 = vmul.f32 %v1166, %v1166
  %v1169 = vsel %vm39, %v1167, 0.0
  %1170 = vadd.xlane.f32.xlu0 %v1169
  %v1171 = vpop.xlane.xlu0 %1170
  %v1172 = vsel %vm39, %v1168, 0.0
  %1173 = vadd.xlane.f32.xlu0 %v1172
  %v1174 = vpop.xlane.xlu0 %1173
  %v1175 = vmul.f32 %v1171, %v46
  %v1176 = vmul.f32 %v1174, %v46
  %v1177 = vadd.f32 %v1175, 1e-12
  %v1178 = vadd.f32 %v1176, 1e-12
  %v1179 = vrsqrt.pop %v1177
  %v1180 = vrsqrt.pop %v1178
  %v1181 = vmul.f32 %v1165, %v1179
  %v1182 = vmul.f32 %v1166, %v1180
  %v1183 = vlaneseq
  %v1184 = vshrl.u32 %v1183, 7
  %v1185 = vsub.s32 2, %v1184
  %v1186 = vrot.slane %v79, %v1185
  %v1187 = vmul.f32 %v1181, %v1186
  %v1188 = vmul.f32 %v1182, %v1186
  %v1189 = vlaneseq
  %v1190 = vshrl.u32 %v1189, 7
  %v1191 = vsub.s32 3, %v1190
  %v1192 = vrot.slane %v79, %v1191
  %v1193 = vadd.f32 %v1187, %v1192
  %v1194 = vadd.f32 %v1188, %v1192
  %v1195 = vpack.c.bf16 %v1194, %v1193
  %v1196 = vld [vmem:[%s5] sm:$0xf]
  %v1197 = vld [vmem:[%s5 + $0x4] sm:$0xf]
  %v1198 = vld [vmem:[%s5 + $0x8] sm:$0xf]
  %v1199 = vld [vmem:[%s5 + $0xc] sm:$0xf]
  %v1200 = vlaneseq
  %v1201 = vshrl.u32 %v1200, 7
  %v1202 = vsub.s32 4, %v1201
  %v1203 = vrot.slane %v79, %v1202
  %v1208 = vunpack.c.l.b16 %v1196
  %v1209 = vunpack.c.l.b16 %v1197
  %v1210 = vunpack.c.l.b16 %v1198
  %v1211 = vunpack.c.l.b16 %v1199
  %v1212 = vpack.c.b16 %v1209, %v1208
  %v1213 = vpack.c.b16 %v1211, %v1210
  %v1217 = vsel %vm39, %v1195, 0
  %1219 = vmatprep.subr.bf16.mxu0 0
  %1220 = vmatpush1.bf16.msra.mxu0 0
  %1221 = vmatprep.subr.bf16.mxu0 0
  %1222 = vmatpush1.bf16.msra.mxu0 0
  %1223 = vmatprep.subr.bf16.mxu0 0
  %1224 = vmatpush1.bf16.msra.mxu0 0
  %1225 = vmatprep.subr.bf16.mxu0 0
  %1226 = vmatpush1.bf16.msra.mxu0 0
  %1227 = vmatprep.subr.bf16.mxu0 0
  %1228 = vmatpush1.bf16.msra.mxu0 0
  %1229 = vmatprep.subr.bf16.mxu0 0
  %1230 = vmatpush1.bf16.msra.mxu0 0
  %1231 = vmatprep.subr.bf16.mxu0 0
  %1232 = vmatpush1.bf16.msra.mxu0 %v1213
  %1233 = vmatprep.subr.bf16.mxu0 0
  %1234 = vmatpush1.bf16.msra.mxu0 %v1212
  %1235 = vmatprep.subr.bf16.mxu0 0
  %1236 = vmatpush2.bf16.msra.mxu0 0
  %1237 = vmatprep.subr.bf16.mxu0 0
  %1238 = vmatpush2.bf16.msra.mxu0 0
  %1239 = vmatprep.subr.bf16.mxu0 0
  %1240 = vmatpush2.bf16.msra.mxu0 0
  %1241 = vmatprep.subr.bf16.mxu0 0
  %1242 = vmatpush2.bf16.msra.mxu0 0
  %1243 = vmatprep.subr.bf16.mxu0 0
  %1244 = vmatpush2.bf16.msra.mxu0 0
  %1245 = vmatprep.subr.bf16.mxu0 0
  %1246 = vmatpush2.bf16.msra.mxu0 0
  %1247 = vmatprep.subr.bf16.mxu0 0
  %1248 = vmatpush2.bf16.msra.mxu0 0
  %1249 = vmatprep.subr.bf16.mxu0 0
  %1250 = vmatpush2.bf16.msra.mxu0 0
  %1251 = vmatprep.mubr.bf16.mxu0 0
  %1252 = vmatmul.mubr.bf16.gmra.mxu0 %v1217
  %v1253 = vpop.f32.mrf.mxu0
  %v1254 = vadd.f32 %v1203, %v1253
  %v1255 = vpop.f32.mrf.mxu0
  %v1256 = vpop.f32.mrf.mxu0
  %v1257 = vadd.f32 %v1203, %v1256
  %v1258 = vpop.f32.mrf.mxu0
  %1259 = vdwg.mxu0
  %v1260 = vmul.f32 %v1254, 0.5
  %v1261 = vmul.f32 %v1257, 0.5
  %v1262 = vmul.f32 %v1254, 0.044715
  %v1263 = vmul.f32 %v1257, 0.044715
  %v1264 = vmul.f32 %v1262, %v1254
  %v1265 = vmul.f32 %v1263, %v1257
  %v1266 = vmul.f32 %v1264, %v1254
  %v1267 = vmul.f32 %v1265, %v1257
  %v1268 = vadd.f32 %v1254, %v1266
  %v1269 = vadd.f32 %v1257, %v1267
  %v1270 = vmul.f32 %v1268, 0.7978846
  %v1271 = vmul.f32 %v1269, 0.7978846
  %v1272 = vtanh.pop %v1270
  %v1273 = vtanh.pop %v1271
  %v1274 = vadd.f32 %v1272, 1.0
  %v1275 = vadd.f32 %v1273, 1.0
  %v1276 = vmul.f32 %v1260, %v1274
  %v1277 = vmul.f32 %v1261, %v1275
  %v1278 = vpack.c.bf16 %v1277, %v1276
  %v1279 = vld [vmem:[%s6] sm:$0xf]
  %v1280 = vld [vmem:[%s6 + $0x4] sm:$0xf]
  %v1281 = vld [vmem:[%s6 + $0x8] sm:$0xf]
  %v1282 = vld [vmem:[%s6 + $0xc] sm:$0xf]
  %v1283 = vld [vmem:[%s6 + $0x10] sm:$0xf]
  %v1284 = vld [vmem:[%s6 + $0x14] sm:$0xf]
  %v1285 = vld [vmem:[%s6 + $0x18] sm:$0xf]
  %v1286 = vld [vmem:[%s6 + $0x1c] sm:$0xf]
  %v1287 = vlaneseq
  %v1288 = vshrl.u32 %v1287, 7
  %v1289 = vsub.s32 5, %v1288
  %v1290 = vrot.slane %v79, %v1289
  %v1299 = vunpack.c.l.b16 %v1279
  %v1300 = vunpack.c.l.b16 %v1280
  %v1301 = vunpack.c.l.b16 %v1281
  %v1302 = vunpack.c.l.b16 %v1282
  %v1303 = vunpack.c.l.b16 %v1283
  %v1304 = vunpack.c.l.b16 %v1284
  %v1305 = vunpack.c.l.b16 %v1285
  %v1306 = vunpack.c.l.b16 %v1286
  %v1307 = vpack.c.b16 %v1300, %v1299
  %v1308 = vpack.c.b16 %v1302, %v1301
  %v1309 = vpack.c.b16 %v1304, %v1303
  %v1310 = vpack.c.b16 %v1306, %v1305
  %vm1315 = vcmask 523264
  %v1317 = vsel %vm1315, %v1278, 0
  %1319 = vmatprep.subr.bf16.mxu0 0
  %1320 = vmatpush1.bf16.msra.mxu0 0
  %1321 = vmatprep.subr.bf16.mxu0 0
  %1322 = vmatpush1.bf16.msra.mxu0 0
  %1323 = vmatprep.subr.bf16.mxu0 0
  %1324 = vmatpush1.bf16.msra.mxu0 0
  %1325 = vmatprep.subr.bf16.mxu0 0
  %1326 = vmatpush1.bf16.msra.mxu0 0
  %1327 = vmatprep.subr.bf16.mxu0 0
  %1328 = vmatpush1.bf16.msra.mxu0 %v1310
  %1329 = vmatprep.subr.bf16.mxu0 0
  %1330 = vmatpush1.bf16.msra.mxu0 %v1309
  %1331 = vmatprep.subr.bf16.mxu0 0
  %1332 = vmatpush1.bf16.msra.mxu0 %v1308
  %1333 = vmatprep.subr.bf16.mxu0 0
  %1334 = vmatpush1.bf16.msra.mxu0 %v1307
  %1335 = vmatprep.subr.bf16.mxu0 0
  %1336 = vmatpush2.bf16.msra.mxu0 0
  %1337 = vmatprep.subr.bf16.mxu0 0
  %1338 = vmatpush2.bf16.msra.mxu0 0
  %1339 = vmatprep.subr.bf16.mxu0 0
  %1340 = vmatpush2.bf16.msra.mxu0 0
  %1341 = vmatprep.subr.bf16.mxu0 0
  %1342 = vmatpush2.bf16.msra.mxu0 0
  %1343 = vmatprep.subr.bf16.mxu0 0
  %1344 = vmatpush2.bf16.msra.mxu0 0
  %1345 = vmatprep.subr.bf16.mxu0 0
  %1346 = vmatpush2.bf16.msra.mxu0 0
  %1347 = vmatprep.subr.bf16.mxu0 0
  %1348 = vmatpush2.bf16.msra.mxu0 0
  %1349 = vmatprep.subr.bf16.mxu0 0
  %1350 = vmatpush2.bf16.msra.mxu0 0
  %1351 = vmatprep.mubr.bf16.mxu0 0
  %1352 = vmatmul.mubr.bf16.gmra.mxu0 %v1317
  %v1353 = vpop.f32.mrf.mxu0
  %v1354 = vadd.f32 %v1290, %v1353
  %v1355 = vpop.f32.mrf.mxu0
  %v1356 = vpop.f32.mrf.mxu0
  %v1357 = vadd.f32 %v1290, %v1356
  %v1358 = vpop.f32.mrf.mxu0
  %1359 = vdwg.mxu0
  %v1360 = vadd.f32 %v1193, %v1354
  %v1361 = vadd.f32 %v1194, %v1357
  %v1362 = vsel %vm39, %v1360, 0.0
  %1363 = vadd.xlane.f32.xlu0 %v1362
  %v1364 = vpop.xlane.xlu0 %1363
  %v1365 = vsel %vm39, %v1361, 0.0
  %1366 = vadd.xlane.f32.xlu0 %v1365
  %v1367 = vpop.xlane.xlu0 %1366
  %v1368 = vmul.f32 %v1364, %v46
  %v1369 = vmul.f32 %v1367, %v46
  %v1370 = vsub.f32 %v1360, %v1368
  %v1371 = vsub.f32 %v1361, %v1369
  %v1372 = vmul.f32 %v1370, %v1370
  %v1373 = vmul.f32 %v1371, %v1371
  %v1374 = vsel %vm39, %v1372, 0.0
  %1375 = vadd.xlane.f32.xlu0 %v1374
  %v1376 = vpop.xlane.xlu0 %1375
  %v1377 = vsel %vm39, %v1373, 0.0
  %1378 = vadd.xlane.f32.xlu0 %v1377
  %v1379 = vpop.xlane.xlu0 %1378
  %v1380 = vmul.f32 %v1376, %v46
  %v1381 = vmul.f32 %v1379, %v46
  %v1382 = vadd.f32 %v1380, 1e-12
  %v1383 = vadd.f32 %v1381, 1e-12
  %v1384 = vrsqrt.pop %v1382
  %v1385 = vrsqrt.pop %v1383
  %v1386 = vmul.f32 %v1370, %v1384
  %v1387 = vmul.f32 %v1371, %v1385
  %v1388 = vlaneseq
  %v1389 = vshrl.u32 %v1388, 7
  %v1390 = vsub.s32 6, %v1389
  %v1391 = vrot.slane %v79, %v1390
  %v1392 = vmul.f32 %v1386, %v1391
  %v1393 = vmul.f32 %v1387, %v1391
  %v1394 = vlaneseq
  %v1395 = vshrl.u32 %v1394, 7
  %v1396 = vsub.s32 7, %v1395
  %v1397 = vrot.slane %v79, %v1396
  %v1398 = vadd.f32 %v1392, %v1397
  %v1399 = vadd.f32 %v1393, %v1397
  %s1400 = scalar_lea.vmem %s7, 8
  %v1401 = vld [vmem:[%s1400] sm:$0xff]
  %v1402 = vpack.c.bf16 %v1399, %v1398
  %s1403 = scalar_lea.vmem %s3, 16
  %v1404 = vld [vmem:[%s1403] sm:$0xf]
  %v1405 = vld [vmem:[%s1403 + $0x4] sm:$0xf]
  %v1406 = vld [vmem:[%s1403 + $0x8] sm:$0xf]
  %v1407 = vld [vmem:[%s1403 + $0xc] sm:$0xf]
  %v1408 = vlaneseq
  %v1409 = vshrl.u32 %v1408, 7
  %v1410 = vsub.s32 0, %v1409
  %v1411 = vrot.slane %v1401, %v1410
  %v1416 = vunpack.c.l.b16 %v1404
  %v1417 = vunpack.c.l.b16 %v1405
  %v1418 = vunpack.c.l.b16 %v1406
  %v1419 = vunpack.c.l.b16 %v1407
  %v1420 = vpack.c.b16 %v1417, %v1416
  %v1421 = vpack.c.b16 %v1419, %v1418
  %v1425 = vsel %vm39, %v1402, 0
  %1427 = vmatprep.subr.bf16.mxu0 0
  %1428 = vmatpush1.bf16.msra.mxu0 0
  %1429 = vmatprep.subr.bf16.mxu0 0
  %1430 = vmatpush1.bf16.msra.mxu0 0
  %1431 = vmatprep.subr.bf16.mxu0 0
  %1432 = vmatpush1.bf16.msra.mxu0 0
  %1433 = vmatprep.subr.bf16.mxu0 0
  %1434 = vmatpush1.bf16.msra.mxu0 0
  %1435 = vmatprep.subr.bf16.mxu0 0
  %1436 = vmatpush1.bf16.msra.mxu0 0
  %1437 = vmatprep.subr.bf16.mxu0 0
  %1438 = vmatpush1.bf16.msra.mxu0 0
  %1439 = vmatprep.subr.bf16.mxu0 0
  %1440 = vmatpush1.bf16.msra.mxu0 %v1421
  %1441 = vmatprep.subr.bf16.mxu0 0
  %1442 = vmatpush1.bf16.msra.mxu0 %v1420
  %1443 = vmatprep.subr.bf16.mxu0 0
  %1444 = vmatpush2.bf16.msra.mxu0 0
  %1445 = vmatprep.subr.bf16.mxu0 0
  %1446 = vmatpush2.bf16.msra.mxu0 0
  %1447 = vmatprep.subr.bf16.mxu0 0
  %1448 = vmatpush2.bf16.msra.mxu0 0
  %1449 = vmatprep.subr.bf16.mxu0 0
  %1450 = vmatpush2.bf16.msra.mxu0 0
  %1451 = vmatprep.subr.bf16.mxu0 0
  %1452 = vmatpush2.bf16.msra.mxu0 0
  %1453 = vmatprep.subr.bf16.mxu0 0
  %1454 = vmatpush2.bf16.msra.mxu0 0
  %1455 = vmatprep.subr.bf16.mxu0 0
  %1456 = vmatpush2.bf16.msra.mxu0 0
  %1457 = vmatprep.subr.bf16.mxu0 0
  %1458 = vmatpush2.bf16.msra.mxu0 0
  %1459 = vmatprep.mubr.bf16.mxu0 0
  %1460 = vmatmul.mubr.bf16.gmra.mxu0 %v1425
  %v1461 = vpop.f32.mrf.mxu0
  %v1462 = vadd.f32 %v1411, %v1461
  %v1463 = vpop.f32.mrf.mxu0
  %v1464 = vpop.f32.mrf.mxu0
  %v1465 = vadd.f32 %v1411, %v1464
  %v1466 = vpop.f32.mrf.mxu0
  %1467 = vdwg.mxu0
  %v1468 = vld [vmem:[%s1] sm:$0x1]
  %v1469 = vpack.c.bf16 %v1462, %v1462
  %1471 = vrot.lane.b32.xlu0 %v1469, 96
  %v1472 = vpop.permute.xlu0 %1471
  %v1474 = vsel %vm150, %v1469, 0
  %v1477 = vsel %vm150, %v1472, 0
  %1479 = vmatprep.subr.bf16.mxu0 0
  %1480 = vmatpush1.bf16.xpose.msra.mxu0 0
  %1481 = vmatprep.subr.bf16.mxu0 0
  %1482 = vmatpush1.bf16.xpose.msra.mxu0 0
  %1483 = vmatprep.subr.bf16.mxu0 0
  %1484 = vmatpush1.bf16.xpose.msra.mxu0 0
  %1485 = vmatprep.subr.bf16.mxu0 0
  %1486 = vmatpush1.bf16.xpose.msra.mxu0 0
  %1487 = vmatprep.subr.bf16.mxu0 0
  %1488 = vmatpush1.bf16.xpose.msra.mxu0 0
  %1489 = vmatprep.subr.bf16.mxu0 0
  %1490 = vmatpush1.bf16.xpose.msra.mxu0 0
  %1491 = vmatprep.subr.bf16.mxu0 0
  %1492 = vmatpush1.bf16.xpose.msra.mxu0 0
  %1493 = vmatprep.subr.bf16.mxu0 0
  %1494 = vmatpush1.bf16.xpose.msra.mxu0 %v1477
  %1495 = vmatprep.subr.bf16.mxu0 0
  %1496 = vmatpush2.bf16.xpose.msra.mxu0 0
  %1497 = vmatprep.subr.bf16.mxu0 0
  %1498 = vmatpush2.bf16.xpose.msra.mxu0 0
  %1499 = vmatprep.subr.bf16.mxu0 0
  %1500 = vmatpush2.bf16.xpose.msra.mxu0 0
  %1501 = vmatprep.subr.bf16.mxu0 0
  %1502 = vmatpush2.bf16.xpose.msra.mxu0 0
  %1503 = vmatprep.subr.bf16.mxu0 0
  %1504 = vmatpush2.bf16.xpose.msra.mxu0 0
  %1505 = vmatprep.subr.bf16.mxu0 0
  %1506 = vmatpush2.bf16.xpose.msra.mxu0 0
  %1507 = vmatprep.subr.bf16.mxu0 0
  %1508 = vmatpush2.bf16.xpose.msra.mxu0 0
  %1509 = vmatprep.subr.bf16.mxu0 0
  %1510 = vmatpush2.bf16.xpose.msra.mxu0 0
  %1511 = vmatprep.mubr.bf16.mxu0 0
  %1512 = vmatmul.mubr.bf16.gmra.mxu0 %v1474
  %v1513 = vpop.f32.mrf.mxu0
  %v1514 = vadd.f32 0.0, %v1513
  %v1515 = vpop.f32.mrf.mxu0
  %v1516 = vpop.f32.mrf.mxu0
  %v1517 = vpop.f32.mrf.mxu0
  %1518 = vdwg.mxu0
  %v1519 = vmul.f32 %v1514, 0.35355338
  %v1520 = vlaneseq
  %v1521 = vshrl.u32 %v1520, 7
  %v1522 = vsub.s32 0, %v1521
  %v1523 = vrot.slane %v1468, %v1522
  %v1524 = vadd.f32 %v1519, %v1523
  %v1525 = vsel %vm150, %v1524, -inf
  %1526 = vmax.xlane.f32.xlu0 %v1525
  %v1527 = vpop.xlane.xlu0 %1526
  %v1528 = vsub.f32 %v1524, %v1527
  %v1529 = vmul.f32 %v1528, 1.442695
  %v1530 = vpow.pop %v1529
  %v1531 = vsel %vm150, %v1530, 0.0
  %1532 = vadd.xlane.f32.xlu0 %v1531
  %v1533 = vpop.xlane.xlu0 %1532
  %v1534 = vrcp.pop %v1533
  %v1535 = vmul.f32 %v1530, %v1534
  %v1536 = vpack.c.bf16 %v1535, %v1535
  %1537 = vrot.lane.b32.xlu0 %v1469, 64
  %v1538 = vpop.permute.xlu0 %1537
  %v1540 = vsel %vm150, %v1536, 0
  %v1543 = vsel %vm220, %v1538, 0
  %1545 = vmatprep.subr.bf16.mxu0 0
  %1546 = vmatpush1.bf16.msra.mxu0 0
  %1547 = vmatprep.subr.bf16.mxu0 0
  %1548 = vmatpush1.bf16.msra.mxu0 0
  %1549 = vmatprep.subr.bf16.mxu0 0
  %1550 = vmatpush1.bf16.msra.mxu0 0
  %1551 = vmatprep.subr.bf16.mxu0 0
  %1552 = vmatpush1.bf16.msra.mxu0 0
  %1553 = vmatprep.subr.bf16.mxu0 0
  %1554 = vmatpush1.bf16.msra.mxu0 0
  %1555 = vmatprep.subr.bf16.mxu0 0
  %1556 = vmatpush1.bf16.msra.mxu0 0
  %1557 = vmatprep.subr.bf16.mxu0 0
  %1558 = vmatpush1.bf16.msra.mxu0 0
  %1559 = vmatprep.subr.bf16.mxu0 0
  %1560 = vmatpush1.bf16.msra.mxu0 %v1543
  %1561 = vmatprep.subr.bf16.mxu0 0
  %1562 = vmatpush2.bf16.msra.mxu0 0
  %1563 = vmatprep.subr.bf16.mxu0 0
  %1564 = vmatpush2.bf16.msra.mxu0 0
  %1565 = vmatprep.subr.bf16.mxu0 0
  %1566 = vmatpush2.bf16.msra.mxu0 0
  %1567 = vmatprep.subr.bf16.mxu0 0
  %1568 = vmatpush2.bf16.msra.mxu0 0
  %1569 = vmatprep.subr.bf16.mxu0 0
  %1570 = vmatpush2.bf16.msra.mxu0 0
  %1571 = vmatprep.subr.bf16.mxu0 0
  %1572 = vmatpush2.bf16.msra.mxu0 0
  %1573 = vmatprep.subr.bf16.mxu0 0
  %1574 = vmatpush2.bf16.msra.mxu0 0
  %1575 = vmatprep.subr.bf16.mxu0 0
  %1576 = vmatpush2.bf16.msra.mxu0 0
  %1577 = vmatprep.mubr.bf16.mxu0 0
  %1578 = vmatmul.mubr.bf16.gmra.mxu0 %v1540
  %v1579 = vpop.f32.mrf.mxu0
  %v1580 = vadd.f32 0.0, %v1579
  %v1581 = vpop.f32.mrf.mxu0
  %v1582 = vpop.f32.mrf.mxu0
  %v1583 = vpop.f32.mrf.mxu0
  %1584 = vdwg.mxu0
  %1585 = vst.msk [vmem:[#allocation2] sm:$0xff] %vm150, %v1580
  %1586 = vrot.lane.b32.xlu0 %v1469, 120
  %v1587 = vpop.permute.xlu0 %1586
  %1588 = vrot.lane.b32.xlu0 %v1469, 88
  %v1589 = vpop.permute.xlu0 %1588
  %v1591 = vsel %vm150, %v1587, 0
  %v1594 = vsel %vm150, %v1589, 0
  %1596 = vmatprep.subr.bf16.mxu0 0
  %1597 = vmatpush1.bf16.xpose.msra.mxu0 0
  %1598 = vmatprep.subr.bf16.mxu0 0
  %1599 = vmatpush1.bf16.xpose.msra.mxu0 0
  %1600 = vmatprep.subr.bf16.mxu0 0
  %1601 = vmatpush1.bf16.xpose.msra.mxu0 0
  %1602 = vmatprep.subr.bf16.mxu0 0
  %1603 = vmatpush1.bf16.xpose.msra.mxu0 0
  %1604 = vmatprep.subr.bf16.mxu0 0
  %1605 = vmatpush1.bf16.xpose.msra.mxu0 0
  %1606 = vmatprep.subr.bf16.mxu0 0
  %1607 = vmatpush1.bf16.xpose.msra.mxu0 0
  %1608 = vmatprep.subr.bf16.mxu0 0
  %1609 = vmatpush1.bf16.xpose.msra.mxu0 0
  %1610 = vmatprep.subr.bf16.mxu0 0
  %1611 = vmatpush1.bf16.xpose.msra.mxu0 %v1594
  %1612 = vmatprep.subr.bf16.mxu0 0
  %1613 = vmatpush2.bf16.xpose.msra.mxu0 0
  %1614 = vmatprep.subr.bf16.mxu0 0
  %1615 = vmatpush2.bf16.xpose.msra.mxu0 0
  %1616 = vmatprep.subr.bf16.mxu0 0
  %1617 = vmatpush2.bf16.xpose.msra.mxu0 0
  %1618 = vmatprep.subr.bf16.mxu0 0
  %1619 = vmatpush2.bf16.xpose.msra.mxu0 0
  %1620 = vmatprep.subr.bf16.mxu0 0
  %1621 = vmatpush2.bf16.xpose.msra.mxu0 0
  %1622 = vmatprep.subr.bf16.mxu0 0
  %1623 = vmatpush2.bf16.xpose.msra.mxu0 0
  %1624 = vmatprep.subr.bf16.mxu0 0
  %1625 = vmatpush2.bf16.xpose.msra.mxu0 0
  %1626 = vmatprep.subr.bf16.mxu0 0
  %1627 = vmatpush2.bf16.xpose.msra.mxu0 0
  %1628 = vmatprep.mubr.bf16.mxu0 0
  %1629 = vmatmul.mubr.bf16.gmra.mxu0 %v1591
  %v1630 = vpop.f32.mrf.mxu0
  %v1631 = vadd.f32 0.0, %v1630
  %v1632 = vpop.f32.mrf.mxu0
  %v1633 = vpop.f32.mrf.mxu0
  %v1634 = vpop.f32.mrf.mxu0
  %1635 = vdwg.mxu0
  %v1636 = vmul.f32 %v1631, 0.35355338
  %v1637 = vadd.f32 %v1636, %v1523
  %v1638 = vsel %vm150, %v1637, -inf
  %1639 = vmax.xlane.f32.xlu0 %v1638
  %v1640 = vpop.xlane.xlu0 %1639
  %v1641 = vsub.f32 %v1637, %v1640
  %v1642 = vmul.f32 %v1641, 1.442695
  %v1643 = vpow.pop %v1642
  %v1644 = vsel %vm150, %v1643, 0.0
  %1645 = vadd.xlane.f32.xlu0 %v1644
  %v1646 = vpop.xlane.xlu0 %1645
  %v1647 = vrcp.pop %v1646
  %v1648 = vmul.f32 %v1643, %v1647
  %v1649 = vpack.c.bf16 %v1648, %v1648
  %1650 = vrot.lane.b32.xlu0 %v1469, 56
  %v1651 = vpop.permute.xlu0 %1650
  %v1653 = vsel %vm150, %v1649, 0
  %v1656 = vsel %vm220, %v1651, 0
  %1658 = vmatprep.subr.bf16.mxu0 0
  %1659 = vmatpush1.bf16.msra.mxu0 0
  %1660 = vmatprep.subr.bf16.mxu0 0
  %1661 = vmatpush1.bf16.msra.mxu0 0
  %1662 = vmatprep.subr.bf16.mxu0 0
  %1663 = vmatpush1.bf16.msra.mxu0 0
  %1664 = vmatprep.subr.bf16.mxu0 0
  %1665 = vmatpush1.bf16.msra.mxu0 0
  %1666 = vmatprep.subr.bf16.mxu0 0
  %1667 = vmatpush1.bf16.msra.mxu0 0
  %1668 = vmatprep.subr.bf16.mxu0 0
  %1669 = vmatpush1.bf16.msra.mxu0 0
  %1670 = vmatprep.subr.bf16.mxu0 0
  %1671 = vmatpush1.bf16.msra.mxu0 0
  %1672 = vmatprep.subr.bf16.mxu0 0
  %1673 = vmatpush1.bf16.msra.mxu0 %v1656
  %1674 = vmatprep.subr.bf16.mxu0 0
  %1675 = vmatpush2.bf16.msra.mxu0 0
  %1676 = vmatprep.subr.bf16.mxu0 0
  %1677 = vmatpush2.bf16.msra.mxu0 0
  %1678 = vmatprep.subr.bf16.mxu0 0
  %1679 = vmatpush2.bf16.msra.mxu0 0
  %1680 = vmatprep.subr.bf16.mxu0 0
  %1681 = vmatpush2.bf16.msra.mxu0 0
  %1682 = vmatprep.subr.bf16.mxu0 0
  %1683 = vmatpush2.bf16.msra.mxu0 0
  %1684 = vmatprep.subr.bf16.mxu0 0
  %1685 = vmatpush2.bf16.msra.mxu0 0
  %1686 = vmatprep.subr.bf16.mxu0 0
  %1687 = vmatpush2.bf16.msra.mxu0 0
  %1688 = vmatprep.subr.bf16.mxu0 0
  %1689 = vmatpush2.bf16.msra.mxu0 0
  %1690 = vmatprep.mubr.bf16.mxu0 0
  %1691 = vmatmul.mubr.bf16.gmra.mxu0 %v1653
  %v1692 = vpop.f32.mrf.mxu0
  %v1693 = vadd.f32 0.0, %v1692
  %v1694 = vpop.f32.mrf.mxu0
  %v1695 = vpop.f32.mrf.mxu0
  %v1696 = vpop.f32.mrf.mxu0
  %1697 = vdwg.mxu0
  %1699 = vrot.lane.b32.xlu0 %v1693, 8
  %v1700 = vpop.permute.xlu0 %1699
  %1702 = vst.msk [vmem:[#allocation2] sm:$0xff] %vm381, %v1700
  %1703 = vrot.lane.b32.xlu0 %v1469, 112
  %v1704 = vpop.permute.xlu0 %1703
  %1705 = vrot.lane.b32.xlu0 %v1469, 80
  %v1706 = vpop.permute.xlu0 %1705
  %v1708 = vsel %vm150, %v1704, 0
  %v1711 = vsel %vm150, %v1706, 0
  %1713 = vmatprep.subr.bf16.mxu0 0
  %1714 = vmatpush1.bf16.xpose.msra.mxu0 0
  %1715 = vmatprep.subr.bf16.mxu0 0
  %1716 = vmatpush1.bf16.xpose.msra.mxu0 0
  %1717 = vmatprep.subr.bf16.mxu0 0
  %1718 = vmatpush1.bf16.xpose.msra.mxu0 0
  %1719 = vmatprep.subr.bf16.mxu0 0
  %1720 = vmatpush1.bf16.xpose.msra.mxu0 0
  %1721 = vmatprep.subr.bf16.mxu0 0
  %1722 = vmatpush1.bf16.xpose.msra.mxu0 0
  %1723 = vmatprep.subr.bf16.mxu0 0
  %1724 = vmatpush1.bf16.xpose.msra.mxu0 0
  %1725 = vmatprep.subr.bf16.mxu0 0
  %1726 = vmatpush1.bf16.xpose.msra.mxu0 0
  %1727 = vmatprep.subr.bf16.mxu0 0
  %1728 = vmatpush1.bf16.xpose.msra.mxu0 %v1711
  %1729 = vmatprep.subr.bf16.mxu0 0
  %1730 = vmatpush2.bf16.xpose.msra.mxu0 0
  %1731 = vmatprep.subr.bf16.mxu0 0
  %1732 = vmatpush2.bf16.xpose.msra.mxu0 0
  %1733 = vmatprep.subr.bf16.mxu0 0
  %1734 = vmatpush2.bf16.xpose.msra.mxu0 0
  %1735 = vmatprep.subr.bf16.mxu0 0
  %1736 = vmatpush2.bf16.xpose.msra.mxu0 0
  %1737 = vmatprep.subr.bf16.mxu0 0
  %1738 = vmatpush2.bf16.xpose.msra.mxu0 0
  %1739 = vmatprep.subr.bf16.mxu0 0
  %1740 = vmatpush2.bf16.xpose.msra.mxu0 0
  %1741 = vmatprep.subr.bf16.mxu0 0
  %1742 = vmatpush2.bf16.xpose.msra.mxu0 0
  %1743 = vmatprep.subr.bf16.mxu0 0
  %1744 = vmatpush2.bf16.xpose.msra.mxu0 0
  %1745 = vmatprep.mubr.bf16.mxu0 0
  %1746 = vmatmul.mubr.bf16.gmra.mxu0 %v1708
  %v1747 = vpop.f32.mrf.mxu0
  %v1748 = vadd.f32 0.0, %v1747
  %v1749 = vpop.f32.mrf.mxu0
  %v1750 = vpop.f32.mrf.mxu0
  %v1751 = vpop.f32.mrf.mxu0
  %1752 = vdwg.mxu0
  %v1753 = vmul.f32 %v1748, 0.35355338
  %v1754 = vadd.f32 %v1753, %v1523
  %v1755 = vsel %vm150, %v1754, -inf
  %1756 = vmax.xlane.f32.xlu0 %v1755
  %v1757 = vpop.xlane.xlu0 %1756
  %v1758 = vsub.f32 %v1754, %v1757
  %v1759 = vmul.f32 %v1758, 1.442695
  %v1760 = vpow.pop %v1759
  %v1761 = vsel %vm150, %v1760, 0.0
  %1762 = vadd.xlane.f32.xlu0 %v1761
  %v1763 = vpop.xlane.xlu0 %1762
  %v1764 = vrcp.pop %v1763
  %v1765 = vmul.f32 %v1760, %v1764
  %v1766 = vpack.c.bf16 %v1765, %v1765
  %1767 = vrot.lane.b32.xlu0 %v1469, 48
  %v1768 = vpop.permute.xlu0 %1767
  %v1770 = vsel %vm150, %v1766, 0
  %v1773 = vsel %vm220, %v1768, 0
  %1775 = vmatprep.subr.bf16.mxu0 0
  %1776 = vmatpush1.bf16.msra.mxu0 0
  %1777 = vmatprep.subr.bf16.mxu0 0
  %1778 = vmatpush1.bf16.msra.mxu0 0
  %1779 = vmatprep.subr.bf16.mxu0 0
  %1780 = vmatpush1.bf16.msra.mxu0 0
  %1781 = vmatprep.subr.bf16.mxu0 0
  %1782 = vmatpush1.bf16.msra.mxu0 0
  %1783 = vmatprep.subr.bf16.mxu0 0
  %1784 = vmatpush1.bf16.msra.mxu0 0
  %1785 = vmatprep.subr.bf16.mxu0 0
  %1786 = vmatpush1.bf16.msra.mxu0 0
  %1787 = vmatprep.subr.bf16.mxu0 0
  %1788 = vmatpush1.bf16.msra.mxu0 0
  %1789 = vmatprep.subr.bf16.mxu0 0
  %1790 = vmatpush1.bf16.msra.mxu0 %v1773
  %1791 = vmatprep.subr.bf16.mxu0 0
  %1792 = vmatpush2.bf16.msra.mxu0 0
  %1793 = vmatprep.subr.bf16.mxu0 0
  %1794 = vmatpush2.bf16.msra.mxu0 0
  %1795 = vmatprep.subr.bf16.mxu0 0
  %1796 = vmatpush2.bf16.msra.mxu0 0
  %1797 = vmatprep.subr.bf16.mxu0 0
  %1798 = vmatpush2.bf16.msra.mxu0 0
  %1799 = vmatprep.subr.bf16.mxu0 0
  %1800 = vmatpush2.bf16.msra.mxu0 0
  %1801 = vmatprep.subr.bf16.mxu0 0
  %1802 = vmatpush2.bf16.msra.mxu0 0
  %1803 = vmatprep.subr.bf16.mxu0 0
  %1804 = vmatpush2.bf16.msra.mxu0 0
  %1805 = vmatprep.subr.bf16.mxu0 0
  %1806 = vmatpush2.bf16.msra.mxu0 0
  %1807 = vmatprep.mubr.bf16.mxu0 0
  %1808 = vmatmul.mubr.bf16.gmra.mxu0 %v1770
  %v1809 = vpop.f32.mrf.mxu0
  %v1810 = vadd.f32 0.0, %v1809
  %v1811 = vpop.f32.mrf.mxu0
  %v1812 = vpop.f32.mrf.mxu0
  %v1813 = vpop.f32.mrf.mxu0
  %1814 = vdwg.mxu0
  %1816 = vrot.lane.b32.xlu0 %v1810, 16
  %v1817 = vpop.permute.xlu0 %1816
  %1819 = vst.msk [vmem:[#allocation2] sm:$0xff] %vm499, %v1817
  %1820 = vrot.lane.b32.xlu0 %v1469, 104
  %v1821 = vpop.permute.xlu0 %1820
  %1822 = vrot.lane.b32.xlu0 %v1469, 72
  %v1823 = vpop.permute.xlu0 %1822
  %v1825 = vsel %vm150, %v1821, 0
  %v1828 = vsel %vm150, %v1823, 0
  %1830 = vmatprep.subr.bf16.mxu0 0
  %1831 = vmatpush1.bf16.xpose.msra.mxu0 0
  %1832 = vmatprep.subr.bf16.mxu0 0
  %1833 = vmatpush1.bf16.xpose.msra.mxu0 0
  %1834 = vmatprep.subr.bf16.mxu0 0
  %1835 = vmatpush1.bf16.xpose.msra.mxu0 0
  %1836 = vmatprep.subr.bf16.mxu0 0
  %1837 = vmatpush1.bf16.xpose.msra.mxu0 0
  %1838 = vmatprep.subr.bf16.mxu0 0
  %1839 = vmatpush1.bf16.xpose.msra.mxu0 0
  %1840 = vmatprep.subr.bf16.mxu0 0
  %1841 = vmatpush1.bf16.xpose.msra.mxu0 0
  %1842 = vmatprep.subr.bf16.mxu0 0
  %1843 = vmatpush1.bf16.xpose.msra.mxu0 0
  %1844 = vmatprep.subr.bf16.mxu0 0
  %1845 = vmatpush1.bf16.xpose.msra.mxu0 %v1828
  %1846 = vmatprep.subr.bf16.mxu0 0
  %1847 = vmatpush2.bf16.xpose.msra.mxu0 0
  %1848 = vmatprep.subr.bf16.mxu0 0
  %1849 = vmatpush2.bf16.xpose.msra.mxu0 0
  %1850 = vmatprep.subr.bf16.mxu0 0
  %1851 = vmatpush2.bf16.xpose.msra.mxu0 0
  %1852 = vmatprep.subr.bf16.mxu0 0
  %1853 = vmatpush2.bf16.xpose.msra.mxu0 0
  %1854 = vmatprep.subr.bf16.mxu0 0
  %1855 = vmatpush2.bf16.xpose.msra.mxu0 0
  %1856 = vmatprep.subr.bf16.mxu0 0
  %1857 = vmatpush2.bf16.xpose.msra.mxu0 0
  %1858 = vmatprep.subr.bf16.mxu0 0
  %1859 = vmatpush2.bf16.xpose.msra.mxu0 0
  %1860 = vmatprep.subr.bf16.mxu0 0
  %1861 = vmatpush2.bf16.xpose.msra.mxu0 0
  %1862 = vmatprep.mubr.bf16.mxu0 0
  %1863 = vmatmul.mubr.bf16.gmra.mxu0 %v1825
  %v1864 = vpop.f32.mrf.mxu0
  %v1865 = vadd.f32 0.0, %v1864
  %v1866 = vpop.f32.mrf.mxu0
  %v1867 = vpop.f32.mrf.mxu0
  %v1868 = vpop.f32.mrf.mxu0
  %1869 = vdwg.mxu0
  %v1870 = vmul.f32 %v1865, 0.35355338
  %v1871 = vadd.f32 %v1870, %v1523
  %v1872 = vsel %vm150, %v1871, -inf
  %1873 = vmax.xlane.f32.xlu0 %v1872
  %v1874 = vpop.xlane.xlu0 %1873
  %v1875 = vsub.f32 %v1871, %v1874
  %v1876 = vmul.f32 %v1875, 1.442695
  %v1877 = vpow.pop %v1876
  %v1878 = vsel %vm150, %v1877, 0.0
  %1879 = vadd.xlane.f32.xlu0 %v1878
  %v1880 = vpop.xlane.xlu0 %1879
  %v1881 = vrcp.pop %v1880
  %v1882 = vmul.f32 %v1877, %v1881
  %v1883 = vpack.c.bf16 %v1882, %v1882
  %1884 = vrot.lane.b32.xlu0 %v1469, 40
  %v1885 = vpop.permute.xlu0 %1884
  %v1887 = vsel %vm150, %v1883, 0
  %v1890 = vsel %vm220, %v1885, 0
  %1892 = vmatprep.subr.bf16.mxu0 0
  %1893 = vmatpush1.bf16.msra.mxu0 0
  %1894 = vmatprep.subr.bf16.mxu0 0
  %1895 = vmatpush1.bf16.msra.mxu0 0
  %1896 = vmatprep.subr.bf16.mxu0 0
  %1897 = vmatpush1.bf16.msra.mxu0 0
  %1898 = vmatprep.subr.bf16.mxu0 0
  %1899 = vmatpush1.bf16.msra.mxu0 0
  %1900 = vmatprep.subr.bf16.mxu0 0
  %1901 = vmatpush1.bf16.msra.mxu0 0
  %1902 = vmatprep.subr.bf16.mxu0 0
  %1903 = vmatpush1.bf16.msra.mxu0 0
  %1904 = vmatprep.subr.bf16.mxu0 0
  %1905 = vmatpush1.bf16.msra.mxu0 0
  %1906 = vmatprep.subr.bf16.mxu0 0
  %1907 = vmatpush1.bf16.msra.mxu0 %v1890
  %1908 = vmatprep.subr.bf16.mxu0 0
  %1909 = vmatpush2.bf16.msra.mxu0 0
  %1910 = vmatprep.subr.bf16.mxu0 0
  %1911 = vmatpush2.bf16.msra.mxu0 0
  %1912 = vmatprep.subr.bf16.mxu0 0
  %1913 = vmatpush2.bf16.msra.mxu0 0
  %1914 = vmatprep.subr.bf16.mxu0 0
  %1915 = vmatpush2.bf16.msra.mxu0 0
  %1916 = vmatprep.subr.bf16.mxu0 0
  %1917 = vmatpush2.bf16.msra.mxu0 0
  %1918 = vmatprep.subr.bf16.mxu0 0
  %1919 = vmatpush2.bf16.msra.mxu0 0
  %1920 = vmatprep.subr.bf16.mxu0 0
  %1921 = vmatpush2.bf16.msra.mxu0 0
  %1922 = vmatprep.subr.bf16.mxu0 0
  %1923 = vmatpush2.bf16.msra.mxu0 0
  %1924 = vmatprep.mubr.bf16.mxu0 0
  %1925 = vmatmul.mubr.bf16.gmra.mxu0 %v1887
  %v1926 = vpop.f32.mrf.mxu0
  %v1927 = vadd.f32 0.0, %v1926
  %v1928 = vpop.f32.mrf.mxu0
  %v1929 = vpop.f32.mrf.mxu0
  %v1930 = vpop.f32.mrf.mxu0
  %1931 = vdwg.mxu0
  %1933 = vrot.lane.b32.xlu0 %v1927, 24
  %v1934 = vpop.permute.xlu0 %1933
  %1936 = vst.msk [vmem:[#allocation2] sm:$0xff] %vm617, %v1934
  %v1937 = vld [vmem:[%s1 + $0x1] sm:$0x1]
  %v1938 = vpack.c.bf16 %v1465, %v1465
  %1940 = vrot.lane.b32.xlu0 %v1938, 96
  %v1941 = vpop.permute.xlu0 %1940
  %v1943 = vsel %vm150, %v1938, 0
  %v1946 = vsel %vm150, %v1941, 0
  %1948 = vmatprep.subr.bf16.mxu0 0
  %1949 = vmatpush1.bf16.xpose.msra.mxu0 0
  %1950 = vmatprep.subr.bf16.mxu0 0
  %1951 = vmatpush1.bf16.xpose.msra.mxu0 0
  %1952 = vmatprep.subr.bf16.mxu0 0
  %1953 = vmatpush1.bf16.xpose.msra.mxu0 0
  %1954 = vmatprep.subr.bf16.mxu0 0
  %1955 = vmatpush1.bf16.xpose.msra.mxu0 0
  %1956 = vmatprep.subr.bf16.mxu0 0
  %1957 = vmatpush1.bf16.xpose.msra.mxu0 0
  %1958 = vmatprep.subr.bf16.mxu0 0
  %1959 = vmatpush1.bf16.xpose.msra.mxu0 0
  %1960 = vmatprep.subr.bf16.mxu0 0
  %1961 = vmatpush1.bf16.xpose.msra.mxu0 0
  %1962 = vmatprep.subr.bf16.mxu0 0
  %1963 = vmatpush1.bf16.xpose.msra.mxu0 %v1946
  %1964 = vmatprep.subr.bf16.mxu0 0
  %1965 = vmatpush2.bf16.xpose.msra.mxu0 0
  %1966 = vmatprep.subr.bf16.mxu0 0
  %1967 = vmatpush2.bf16.xpose.msra.mxu0 0
  %1968 = vmatprep.subr.bf16.mxu0 0
  %1969 = vmatpush2.bf16.xpose.msra.mxu0 0
  %1970 = vmatprep.subr.bf16.mxu0 0
  %1971 = vmatpush2.bf16.xpose.msra.mxu0 0
  %1972 = vmatprep.subr.bf16.mxu0 0
  %1973 = vmatpush2.bf16.xpose.msra.mxu0 0
  %1974 = vmatprep.subr.bf16.mxu0 0
  %1975 = vmatpush2.bf16.xpose.msra.mxu0 0
  %1976 = vmatprep.subr.bf16.mxu0 0
  %1977 = vmatpush2.bf16.xpose.msra.mxu0 0
  %1978 = vmatprep.subr.bf16.mxu0 0
  %1979 = vmatpush2.bf16.xpose.msra.mxu0 0
  %1980 = vmatprep.mubr.bf16.mxu0 0
  %1981 = vmatmul.mubr.bf16.gmra.mxu0 %v1943
  %v1982 = vpop.f32.mrf.mxu0
  %v1983 = vadd.f32 0.0, %v1982
  %v1984 = vpop.f32.mrf.mxu0
  %v1985 = vpop.f32.mrf.mxu0
  %v1986 = vpop.f32.mrf.mxu0
  %1987 = vdwg.mxu0
  %v1988 = vmul.f32 %v1983, 0.35355338
  %v1989 = vlaneseq
  %v1990 = vshrl.u32 %v1989, 7
  %v1991 = vsub.s32 0, %v1990
  %v1992 = vrot.slane %v1937, %v1991
  %v1993 = vadd.f32 %v1988, %v1992
  %v1994 = vsel %vm150, %v1993, -inf
  %1995 = vmax.xlane.f32.xlu0 %v1994
  %v1996 = vpop.xlane.xlu0 %1995
  %v1997 = vsub.f32 %v1993, %v1996
  %v1998 = vmul.f32 %v1997, 1.442695
  %v1999 = vpow.pop %v1998
  %v2000 = vsel %vm150, %v1999, 0.0
  %2001 = vadd.xlane.f32.xlu0 %v2000
  %v2002 = vpop.xlane.xlu0 %2001
  %v2003 = vrcp.pop %v2002
  %v2004 = vmul.f32 %v1999, %v2003
  %v2005 = vpack.c.bf16 %v2004, %v2004
  %2006 = vrot.lane.b32.xlu0 %v1938, 64
  %v2007 = vpop.permute.xlu0 %2006
  %v2009 = vsel %vm150, %v2005, 0
  %v2012 = vsel %vm220, %v2007, 0
  %2014 = vmatprep.subr.bf16.mxu0 0
  %2015 = vmatpush1.bf16.msra.mxu0 0
  %2016 = vmatprep.subr.bf16.mxu0 0
  %2017 = vmatpush1.bf16.msra.mxu0 0
  %2018 = vmatprep.subr.bf16.mxu0 0
  %2019 = vmatpush1.bf16.msra.mxu0 0
  %2020 = vmatprep.subr.bf16.mxu0 0
  %2021 = vmatpush1.bf16.msra.mxu0 0
  %2022 = vmatprep.subr.bf16.mxu0 0
  %2023 = vmatpush1.bf16.msra.mxu0 0
  %2024 = vmatprep.subr.bf16.mxu0 0
  %2025 = vmatpush1.bf16.msra.mxu0 0
  %2026 = vmatprep.subr.bf16.mxu0 0
  %2027 = vmatpush1.bf16.msra.mxu0 0
  %2028 = vmatprep.subr.bf16.mxu0 0
  %2029 = vmatpush1.bf16.msra.mxu0 %v2012
  %2030 = vmatprep.subr.bf16.mxu0 0
  %2031 = vmatpush2.bf16.msra.mxu0 0
  %2032 = vmatprep.subr.bf16.mxu0 0
  %2033 = vmatpush2.bf16.msra.mxu0 0
  %2034 = vmatprep.subr.bf16.mxu0 0
  %2035 = vmatpush2.bf16.msra.mxu0 0
  %2036 = vmatprep.subr.bf16.mxu0 0
  %2037 = vmatpush2.bf16.msra.mxu0 0
  %2038 = vmatprep.subr.bf16.mxu0 0
  %2039 = vmatpush2.bf16.msra.mxu0 0
  %2040 = vmatprep.subr.bf16.mxu0 0
  %2041 = vmatpush2.bf16.msra.mxu0 0
  %2042 = vmatprep.subr.bf16.mxu0 0
  %2043 = vmatpush2.bf16.msra.mxu0 0
  %2044 = vmatprep.subr.bf16.mxu0 0
  %2045 = vmatpush2.bf16.msra.mxu0 0
  %2046 = vmatprep.mubr.bf16.mxu0 0
  %2047 = vmatmul.mubr.bf16.gmra.mxu0 %v2009
  %v2048 = vpop.f32.mrf.mxu0
  %v2049 = vadd.f32 0.0, %v2048
  %v2050 = vpop.f32.mrf.mxu0
  %v2051 = vpop.f32.mrf.mxu0
  %v2052 = vpop.f32.mrf.mxu0
  %2053 = vdwg.mxu0
  %2054 = vst.msk [vmem:[#allocation2 + $0x8] sm:$0xff] %vm150, %v2049
  %2055 = vrot.lane.b32.xlu0 %v1938, 120
  %v2056 = vpop.permute.xlu0 %2055
  %2057 = vrot.lane.b32.xlu0 %v1938, 88
  %v2058 = vpop.permute.xlu0 %2057
  %v2060 = vsel %vm150, %v2056, 0
  %v2063 = vsel %vm150, %v2058, 0
  %2065 = vmatprep.subr.bf16.mxu0 0
  %2066 = vmatpush1.bf16.xpose.msra.mxu0 0
  %2067 = vmatprep.subr.bf16.mxu0 0
  %2068 = vmatpush1.bf16.xpose.msra.mxu0 0
  %2069 = vmatprep.subr.bf16.mxu0 0
  %2070 = vmatpush1.bf16.xpose.msra.mxu0 0
  %2071 = vmatprep.subr.bf16.mxu0 0
  %2072 = vmatpush1.bf16.xpose.msra.mxu0 0
  %2073 = vmatprep.subr.bf16.mxu0 0
  %2074 = vmatpush1.bf16.xpose.msra.mxu0 0
  %2075 = vmatprep.subr.bf16.mxu0 0
  %2076 = vmatpush1.bf16.xpose.msra.mxu0 0
  %2077 = vmatprep.subr.bf16.mxu0 0
  %2078 = vmatpush1.bf16.xpose.msra.mxu0 0
  %2079 = vmatprep.subr.bf16.mxu0 0
  %2080 = vmatpush1.bf16.xpose.msra.mxu0 %v2063
  %2081 = vmatprep.subr.bf16.mxu0 0
  %2082 = vmatpush2.bf16.xpose.msra.mxu0 0
  %2083 = vmatprep.subr.bf16.mxu0 0
  %2084 = vmatpush2.bf16.xpose.msra.mxu0 0
  %2085 = vmatprep.subr.bf16.mxu0 0
  %2086 = vmatpush2.bf16.xpose.msra.mxu0 0
  %2087 = vmatprep.subr.bf16.mxu0 0
  %2088 = vmatpush2.bf16.xpose.msra.mxu0 0
  %2089 = vmatprep.subr.bf16.mxu0 0
  %2090 = vmatpush2.bf16.xpose.msra.mxu0 0
  %2091 = vmatprep.subr.bf16.mxu0 0
  %2092 = vmatpush2.bf16.xpose.msra.mxu0 0
  %2093 = vmatprep.subr.bf16.mxu0 0
  %2094 = vmatpush2.bf16.xpose.msra.mxu0 0
  %2095 = vmatprep.subr.bf16.mxu0 0
  %2096 = vmatpush2.bf16.xpose.msra.mxu0 0
  %2097 = vmatprep.mubr.bf16.mxu0 0
  %2098 = vmatmul.mubr.bf16.gmra.mxu0 %v2060
  %v2099 = vpop.f32.mrf.mxu0
  %v2100 = vadd.f32 0.0, %v2099
  %v2101 = vpop.f32.mrf.mxu0
  %v2102 = vpop.f32.mrf.mxu0
  %v2103 = vpop.f32.mrf.mxu0
  %2104 = vdwg.mxu0
  %v2105 = vmul.f32 %v2100, 0.35355338
  %v2106 = vadd.f32 %v2105, %v1992
  %v2107 = vsel %vm150, %v2106, -inf
  %2108 = vmax.xlane.f32.xlu0 %v2107
  %v2109 = vpop.xlane.xlu0 %2108
  %v2110 = vsub.f32 %v2106, %v2109
  %v2111 = vmul.f32 %v2110, 1.442695
  %v2112 = vpow.pop %v2111
  %v2113 = vsel %vm150, %v2112, 0.0
  %2114 = vadd.xlane.f32.xlu0 %v2113
  %v2115 = vpop.xlane.xlu0 %2114
  %v2116 = vrcp.pop %v2115
  %v2117 = vmul.f32 %v2112, %v2116
  %v2118 = vpack.c.bf16 %v2117, %v2117
  %2119 = vrot.lane.b32.xlu0 %v1938, 56
  %v2120 = vpop.permute.xlu0 %2119
  %v2122 = vsel %vm150, %v2118, 0
  %v2125 = vsel %vm220, %v2120, 0
  %2127 = vmatprep.subr.bf16.mxu0 0
  %2128 = vmatpush1.bf16.msra.mxu0 0
  %2129 = vmatprep.subr.bf16.mxu0 0
  %2130 = vmatpush1.bf16.msra.mxu0 0
  %2131 = vmatprep.subr.bf16.mxu0 0
  %2132 = vmatpush1.bf16.msra.mxu0 0
  %2133 = vmatprep.subr.bf16.mxu0 0
  %2134 = vmatpush1.bf16.msra.mxu0 0
  %2135 = vmatprep.subr.bf16.mxu0 0
  %2136 = vmatpush1.bf16.msra.mxu0 0
  %2137 = vmatprep.subr.bf16.mxu0 0
  %2138 = vmatpush1.bf16.msra.mxu0 0
  %2139 = vmatprep.subr.bf16.mxu0 0
  %2140 = vmatpush1.bf16.msra.mxu0 0
  %2141 = vmatprep.subr.bf16.mxu0 0
  %2142 = vmatpush1.bf16.msra.mxu0 %v2125
  %2143 = vmatprep.subr.bf16.mxu0 0
  %2144 = vmatpush2.bf16.msra.mxu0 0
  %2145 = vmatprep.subr.bf16.mxu0 0
  %2146 = vmatpush2.bf16.msra.mxu0 0
  %2147 = vmatprep.subr.bf16.mxu0 0
  %2148 = vmatpush2.bf16.msra.mxu0 0
  %2149 = vmatprep.subr.bf16.mxu0 0
  %2150 = vmatpush2.bf16.msra.mxu0 0
  %2151 = vmatprep.subr.bf16.mxu0 0
  %2152 = vmatpush2.bf16.msra.mxu0 0
  %2153 = vmatprep.subr.bf16.mxu0 0
  %2154 = vmatpush2.bf16.msra.mxu0 0
  %2155 = vmatprep.subr.bf16.mxu0 0
  %2156 = vmatpush2.bf16.msra.mxu0 0
  %2157 = vmatprep.subr.bf16.mxu0 0
  %2158 = vmatpush2.bf16.msra.mxu0 0
  %2159 = vmatprep.mubr.bf16.mxu0 0
  %2160 = vmatmul.mubr.bf16.gmra.mxu0 %v2122
  %v2161 = vpop.f32.mrf.mxu0
  %v2162 = vadd.f32 0.0, %v2161
  %v2163 = vpop.f32.mrf.mxu0
  %v2164 = vpop.f32.mrf.mxu0
  %v2165 = vpop.f32.mrf.mxu0
  %2166 = vdwg.mxu0
  %2168 = vrot.lane.b32.xlu0 %v2162, 8
  %v2169 = vpop.permute.xlu0 %2168
  %2171 = vst.msk [vmem:[#allocation2 + $0x8] sm:$0xff] %vm381, %v2169
  %2172 = vrot.lane.b32.xlu0 %v1938, 112
  %v2173 = vpop.permute.xlu0 %2172
  %2174 = vrot.lane.b32.xlu0 %v1938, 80
  %v2175 = vpop.permute.xlu0 %2174
  %v2177 = vsel %vm150, %v2173, 0
  %v2180 = vsel %vm150, %v2175, 0
  %2182 = vmatprep.subr.bf16.mxu0 0
  %2183 = vmatpush1.bf16.xpose.msra.mxu0 0
  %2184 = vmatprep.subr.bf16.mxu0 0
  %2185 = vmatpush1.bf16.xpose.msra.mxu0 0
  %2186 = vmatprep.subr.bf16.mxu0 0
  %2187 = vmatpush1.bf16.xpose.msra.mxu0 0
  %2188 = vmatprep.subr.bf16.mxu0 0
  %2189 = vmatpush1.bf16.xpose.msra.mxu0 0
  %2190 = vmatprep.subr.bf16.mxu0 0
  %2191 = vmatpush1.bf16.xpose.msra.mxu0 0
  %2192 = vmatprep.subr.bf16.mxu0 0
  %2193 = vmatpush1.bf16.xpose.msra.mxu0 0
  %2194 = vmatprep.subr.bf16.mxu0 0
  %2195 = vmatpush1.bf16.xpose.msra.mxu0 0
  %2196 = vmatprep.subr.bf16.mxu0 0
  %2197 = vmatpush1.bf16.xpose.msra.mxu0 %v2180
  %2198 = vmatprep.subr.bf16.mxu0 0
  %2199 = vmatpush2.bf16.xpose.msra.mxu0 0
  %2200 = vmatprep.subr.bf16.mxu0 0
  %2201 = vmatpush2.bf16.xpose.msra.mxu0 0
  %2202 = vmatprep.subr.bf16.mxu0 0
  %2203 = vmatpush2.bf16.xpose.msra.mxu0 0
  %2204 = vmatprep.subr.bf16.mxu0 0
  %2205 = vmatpush2.bf16.xpose.msra.mxu0 0
  %2206 = vmatprep.subr.bf16.mxu0 0
  %2207 = vmatpush2.bf16.xpose.msra.mxu0 0
  %2208 = vmatprep.subr.bf16.mxu0 0
  %2209 = vmatpush2.bf16.xpose.msra.mxu0 0
  %2210 = vmatprep.subr.bf16.mxu0 0
  %2211 = vmatpush2.bf16.xpose.msra.mxu0 0
  %2212 = vmatprep.subr.bf16.mxu0 0
  %2213 = vmatpush2.bf16.xpose.msra.mxu0 0
  %2214 = vmatprep.mubr.bf16.mxu0 0
  %2215 = vmatmul.mubr.bf16.gmra.mxu0 %v2177
  %v2216 = vpop.f32.mrf.mxu0
  %v2217 = vadd.f32 0.0, %v2216
  %v2218 = vpop.f32.mrf.mxu0
  %v2219 = vpop.f32.mrf.mxu0
  %v2220 = vpop.f32.mrf.mxu0
  %2221 = vdwg.mxu0
  %v2222 = vmul.f32 %v2217, 0.35355338
  %v2223 = vadd.f32 %v2222, %v1992
  %v2224 = vsel %vm150, %v2223, -inf
  %2225 = vmax.xlane.f32.xlu0 %v2224
  %v2226 = vpop.xlane.xlu0 %2225
  %v2227 = vsub.f32 %v2223, %v2226
  %v2228 = vmul.f32 %v2227, 1.442695
  %v2229 = vpow.pop %v2228
  %v2230 = vsel %vm150, %v2229, 0.0
  %2231 = vadd.xlane.f32.xlu0 %v2230
  %v2232 = vpop.xlane.xlu0 %2231
  %v2233 = vrcp.pop %v2232
  %v2234 = vmul.f32 %v2229, %v2233
  %v2235 = vpack.c.bf16 %v2234, %v2234
  %2236 = vrot.lane.b32.xlu0 %v1938, 48
  %v2237 = vpop.permute.xlu0 %2236
  %v2239 = vsel %vm150, %v2235, 0
  %v2242 = vsel %vm220, %v2237, 0
  %2244 = vmatprep.subr.bf16.mxu0 0
  %2245 = vmatpush1.bf16.msra.mxu0 0
  %2246 = vmatprep.subr.bf16.mxu0 0
  %2247 = vmatpush1.bf16.msra.mxu0 0
  %2248 = vmatprep.subr.bf16.mxu0 0
  %2249 = vmatpush1.bf16.msra.mxu0 0
  %2250 = vmatprep.subr.bf16.mxu0 0
  %2251 = vmatpush1.bf16.msra.mxu0 0
  %2252 = vmatprep.subr.bf16.mxu0 0
  %2253 = vmatpush1.bf16.msra.mxu0 0
  %2254 = vmatprep.subr.bf16.mxu0 0
  %2255 = vmatpush1.bf16.msra.mxu0 0
  %2256 = vmatprep.subr.bf16.mxu0 0
  %2257 = vmatpush1.bf16.msra.mxu0 0
  %2258 = vmatprep.subr.bf16.mxu0 0
  %2259 = vmatpush1.bf16.msra.mxu0 %v2242
  %2260 = vmatprep.subr.bf16.mxu0 0
  %2261 = vmatpush2.bf16.msra.mxu0 0
  %2262 = vmatprep.subr.bf16.mxu0 0
  %2263 = vmatpush2.bf16.msra.mxu0 0
  %2264 = vmatprep.subr.bf16.mxu0 0
  %2265 = vmatpush2.bf16.msra.mxu0 0
  %2266 = vmatprep.subr.bf16.mxu0 0
  %2267 = vmatpush2.bf16.msra.mxu0 0
  %2268 = vmatprep.subr.bf16.mxu0 0
  %2269 = vmatpush2.bf16.msra.mxu0 0
  %2270 = vmatprep.subr.bf16.mxu0 0
  %2271 = vmatpush2.bf16.msra.mxu0 0
  %2272 = vmatprep.subr.bf16.mxu0 0
  %2273 = vmatpush2.bf16.msra.mxu0 0
  %2274 = vmatprep.subr.bf16.mxu0 0
  %2275 = vmatpush2.bf16.msra.mxu0 0
  %2276 = vmatprep.mubr.bf16.mxu0 0
  %2277 = vmatmul.mubr.bf16.gmra.mxu0 %v2239
  %v2278 = vpop.f32.mrf.mxu0
  %v2279 = vadd.f32 0.0, %v2278
  %v2280 = vpop.f32.mrf.mxu0
  %v2281 = vpop.f32.mrf.mxu0
  %v2282 = vpop.f32.mrf.mxu0
  %2283 = vdwg.mxu0
  %2285 = vrot.lane.b32.xlu0 %v2279, 16
  %v2286 = vpop.permute.xlu0 %2285
  %2288 = vst.msk [vmem:[#allocation2 + $0x8] sm:$0xff] %vm499, %v2286
  %2289 = vrot.lane.b32.xlu0 %v1938, 104
  %v2290 = vpop.permute.xlu0 %2289
  %2291 = vrot.lane.b32.xlu0 %v1938, 72
  %v2292 = vpop.permute.xlu0 %2291
  %v2294 = vsel %vm150, %v2290, 0
  %v2297 = vsel %vm150, %v2292, 0
  %2299 = vmatprep.subr.bf16.mxu0 0
  %2300 = vmatpush1.bf16.xpose.msra.mxu0 0
  %2301 = vmatprep.subr.bf16.mxu0 0
  %2302 = vmatpush1.bf16.xpose.msra.mxu0 0
  %2303 = vmatprep.subr.bf16.mxu0 0
  %2304 = vmatpush1.bf16.xpose.msra.mxu0 0
  %2305 = vmatprep.subr.bf16.mxu0 0
  %2306 = vmatpush1.bf16.xpose.msra.mxu0 0
  %2307 = vmatprep.subr.bf16.mxu0 0
  %2308 = vmatpush1.bf16.xpose.msra.mxu0 0
  %2309 = vmatprep.subr.bf16.mxu0 0
  %2310 = vmatpush1.bf16.xpose.msra.mxu0 0
  %2311 = vmatprep.subr.bf16.mxu0 0
  %2312 = vmatpush1.bf16.xpose.msra.mxu0 0
  %2313 = vmatprep.subr.bf16.mxu0 0
  %2314 = vmatpush1.bf16.xpose.msra.mxu0 %v2297
  %2315 = vmatprep.subr.bf16.mxu0 0
  %2316 = vmatpush2.bf16.xpose.msra.mxu0 0
  %2317 = vmatprep.subr.bf16.mxu0 0
  %2318 = vmatpush2.bf16.xpose.msra.mxu0 0
  %2319 = vmatprep.subr.bf16.mxu0 0
  %2320 = vmatpush2.bf16.xpose.msra.mxu0 0
  %2321 = vmatprep.subr.bf16.mxu0 0
  %2322 = vmatpush2.bf16.xpose.msra.mxu0 0
  %2323 = vmatprep.subr.bf16.mxu0 0
  %2324 = vmatpush2.bf16.xpose.msra.mxu0 0
  %2325 = vmatprep.subr.bf16.mxu0 0
  %2326 = vmatpush2.bf16.xpose.msra.mxu0 0
  %2327 = vmatprep.subr.bf16.mxu0 0
  %2328 = vmatpush2.bf16.xpose.msra.mxu0 0
  %2329 = vmatprep.subr.bf16.mxu0 0
  %2330 = vmatpush2.bf16.xpose.msra.mxu0 0
  %2331 = vmatprep.mubr.bf16.mxu0 0
  %2332 = vmatmul.mubr.bf16.gmra.mxu0 %v2294
  %v2333 = vpop.f32.mrf.mxu0
  %v2334 = vadd.f32 0.0, %v2333
  %v2335 = vpop.f32.mrf.mxu0
  %v2336 = vpop.f32.mrf.mxu0
  %v2337 = vpop.f32.mrf.mxu0
  %2338 = vdwg.mxu0
  %v2339 = vmul.f32 %v2334, 0.35355338
  %v2340 = vadd.f32 %v2339, %v1992
  %v2341 = vsel %vm150, %v2340, -inf
  %2342 = vmax.xlane.f32.xlu0 %v2341
  %v2343 = vpop.xlane.xlu0 %2342
  %v2344 = vsub.f32 %v2340, %v2343
  %v2345 = vmul.f32 %v2344, 1.442695
  %v2346 = vpow.pop %v2345
  %v2347 = vsel %vm150, %v2346, 0.0
  %2348 = vadd.xlane.f32.xlu0 %v2347
  %v2349 = vpop.xlane.xlu0 %2348
  %v2350 = vrcp.pop %v2349
  %v2351 = vmul.f32 %v2346, %v2350
  %v2352 = vpack.c.bf16 %v2351, %v2351
  %2353 = vrot.lane.b32.xlu0 %v1938, 40
  %v2354 = vpop.permute.xlu0 %2353
  %v2356 = vsel %vm150, %v2352, 0
  %v2359 = vsel %vm220, %v2354, 0
  %2361 = vmatprep.subr.bf16.mxu0 0
  %2362 = vmatpush1.bf16.msra.mxu0 0
  %2363 = vmatprep.subr.bf16.mxu0 0
  %2364 = vmatpush1.bf16.msra.mxu0 0
  %2365 = vmatprep.subr.bf16.mxu0 0
  %2366 = vmatpush1.bf16.msra.mxu0 0
  %2367 = vmatprep.subr.bf16.mxu0 0
  %2368 = vmatpush1.bf16.msra.mxu0 0
  %2369 = vmatprep.subr.bf16.mxu0 0
  %2370 = vmatpush1.bf16.msra.mxu0 0
  %2371 = vmatprep.subr.bf16.mxu0 0
  %2372 = vmatpush1.bf16.msra.mxu0 0
  %2373 = vmatprep.subr.bf16.mxu0 0
  %2374 = vmatpush1.bf16.msra.mxu0 0
  %2375 = vmatprep.subr.bf16.mxu0 0
  %2376 = vmatpush1.bf16.msra.mxu0 %v2359
  %2377 = vmatprep.subr.bf16.mxu0 0
  %2378 = vmatpush2.bf16.msra.mxu0 0
  %2379 = vmatprep.subr.bf16.mxu0 0
  %2380 = vmatpush2.bf16.msra.mxu0 0
  %2381 = vmatprep.subr.bf16.mxu0 0
  %2382 = vmatpush2.bf16.msra.mxu0 0
  %2383 = vmatprep.subr.bf16.mxu0 0
  %2384 = vmatpush2.bf16.msra.mxu0 0
  %2385 = vmatprep.subr.bf16.mxu0 0
  %2386 = vmatpush2.bf16.msra.mxu0 0
  %2387 = vmatprep.subr.bf16.mxu0 0
  %2388 = vmatpush2.bf16.msra.mxu0 0
  %2389 = vmatprep.subr.bf16.mxu0 0
  %2390 = vmatpush2.bf16.msra.mxu0 0
  %2391 = vmatprep.subr.bf16.mxu0 0
  %2392 = vmatpush2.bf16.msra.mxu0 0
  %2393 = vmatprep.mubr.bf16.mxu0 0
  %2394 = vmatmul.mubr.bf16.gmra.mxu0 %v2356
  %v2395 = vpop.f32.mrf.mxu0
  %v2396 = vadd.f32 0.0, %v2395
  %v2397 = vpop.f32.mrf.mxu0
  %v2398 = vpop.f32.mrf.mxu0
  %v2399 = vpop.f32.mrf.mxu0
  %2400 = vdwg.mxu0
  %2402 = vrot.lane.b32.xlu0 %v2396, 24
  %v2403 = vpop.permute.xlu0 %2402
  %2405 = vst.msk [vmem:[#allocation2 + $0x8] sm:$0xff] %vm617, %v2403
  %v2406 = vld [vmem:[#allocation2] sm:$0xff]
  %v2407 = vld [vmem:[#allocation2 + $0x8] sm:$0xff]
  %v2408 = vpack.c.bf16 %v2407, %v2406
  %s2409 = scalar_lea.vmem %s4, 16
  %v2410 = vld [vmem:[%s2409] sm:$0xf]
  %v2411 = vld [vmem:[%s2409 + $0x4] sm:$0xf]
  %v2412 = vld [vmem:[%s2409 + $0x8] sm:$0xf]
  %v2413 = vld [vmem:[%s2409 + $0xc] sm:$0xf]
  %v2414 = vlaneseq
  %v2415 = vshrl.u32 %v2414, 7
  %v2416 = vsub.s32 1, %v2415
  %v2417 = vrot.slane %v1401, %v2416
  %v2422 = vunpack.c.l.b16 %v2410
  %v2423 = vunpack.c.l.b16 %v2411
  %v2424 = vunpack.c.l.b16 %v2412
  %v2425 = vunpack.c.l.b16 %v2413
  %v2426 = vpack.c.b16 %v2423, %v2422
  %v2427 = vpack.c.b16 %v2425, %v2424
  %v2431 = vsel %vm39, %v2408, 0
  %2433 = vmatprep.subr.bf16.mxu0 0
  %2434 = vmatpush1.bf16.msra.mxu0 0
  %2435 = vmatprep.subr.bf16.mxu0 0
  %2436 = vmatpush1.bf16.msra.mxu0 0
  %2437 = vmatprep.subr.bf16.mxu0 0
  %2438 = vmatpush1.bf16.msra.mxu0 0
  %2439 = vmatprep.subr.bf16.mxu0 0
  %2440 = vmatpush1.bf16.msra.mxu0 0
  %2441 = vmatprep.subr.bf16.mxu0 0
  %2442 = vmatpush1.bf16.msra.mxu0 0
  %2443 = vmatprep.subr.bf16.mxu0 0
  %2444 = vmatpush1.bf16.msra.mxu0 0
  %2445 = vmatprep.subr.bf16.mxu0 0
  %2446 = vmatpush1.bf16.msra.mxu0 %v2427
  %2447 = vmatprep.subr.bf16.mxu0 0
  %2448 = vmatpush1.bf16.msra.mxu0 %v2426
  %2449 = vmatprep.subr.bf16.mxu0 0
  %2450 = vmatpush2.bf16.msra.mxu0 0
  %2451 = vmatprep.subr.bf16.mxu0 0
  %2452 = vmatpush2.bf16.msra.mxu0 0
  %2453 = vmatprep.subr.bf16.mxu0 0
  %2454 = vmatpush2.bf16.msra.mxu0 0
  %2455 = vmatprep.subr.bf16.mxu0 0
  %2456 = vmatpush2.bf16.msra.mxu0 0
  %2457 = vmatprep.subr.bf16.mxu0 0
  %2458 = vmatpush2.bf16.msra.mxu0 0
  %2459 = vmatprep.subr.bf16.mxu0 0
  %2460 = vmatpush2.bf16.msra.mxu0 0
  %2461 = vmatprep.subr.bf16.mxu0 0
  %2462 = vmatpush2.bf16.msra.mxu0 0
  %2463 = vmatprep.subr.bf16.mxu0 0
  %2464 = vmatpush2.bf16.msra.mxu0 0
  %2465 = vmatprep.mubr.bf16.mxu0 0
  %2466 = vmatmul.mubr.bf16.gmra.mxu0 %v2431
  %v2467 = vpop.f32.mrf.mxu0
  %v2468 = vadd.f32 %v2417, %v2467
  %v2469 = vpop.f32.mrf.mxu0
  %v2470 = vpop.f32.mrf.mxu0
  %v2471 = vadd.f32 %v2417, %v2470
  %v2472 = vpop.f32.mrf.mxu0
  %2473 = vdwg.mxu0
  %v2474 = vadd.f32 %v1398, %v2468
  %v2475 = vadd.f32 %v1399, %v2471
  %v2476 = vsel %vm39, %v2474, 0.0
  %2477 = vadd.xlane.f32.xlu0 %v2476
  %v2478 = vpop.xlane.xlu0 %2477
  %v2479 = vsel %vm39, %v2475, 0.0
  %2480 = vadd.xlane.f32.xlu0 %v2479
  %v2481 = vpop.xlane.xlu0 %2480
  %v2482 = vmul.f32 %v2478, %v46
  %v2483 = vmul.f32 %v2481, %v46
  %v2484 = vsub.f32 %v2474, %v2482
  %v2485 = vsub.f32 %v2475, %v2483
  %v2486 = vmul.f32 %v2484, %v2484
  %v2487 = vmul.f32 %v2485, %v2485
  %v2488 = vsel %vm39, %v2486, 0.0
  %2489 = vadd.xlane.f32.xlu0 %v2488
  %v2490 = vpop.xlane.xlu0 %2489
  %v2491 = vsel %vm39, %v2487, 0.0
  %2492 = vadd.xlane.f32.xlu0 %v2491
  %v2493 = vpop.xlane.xlu0 %2492
  %v2494 = vmul.f32 %v2490, %v46
  %v2495 = vmul.f32 %v2493, %v46
  %v2496 = vadd.f32 %v2494, 1e-12
  %v2497 = vadd.f32 %v2495, 1e-12
  %v2498 = vrsqrt.pop %v2496
  %v2499 = vrsqrt.pop %v2497
  %v2500 = vmul.f32 %v2484, %v2498
  %v2501 = vmul.f32 %v2485, %v2499
  %v2502 = vlaneseq
  %v2503 = vshrl.u32 %v2502, 7
  %v2504 = vsub.s32 2, %v2503
  %v2505 = vrot.slane %v1401, %v2504
  %v2506 = vmul.f32 %v2500, %v2505
  %v2507 = vmul.f32 %v2501, %v2505
  %v2508 = vlaneseq
  %v2509 = vshrl.u32 %v2508, 7
  %v2510 = vsub.s32 3, %v2509
  %v2511 = vrot.slane %v1401, %v2510
  %v2512 = vadd.f32 %v2506, %v2511
  %v2513 = vadd.f32 %v2507, %v2511
  %v2514 = vpack.c.bf16 %v2513, %v2512
  %s2515 = scalar_lea.vmem %s5, 16
  %v2516 = vld [vmem:[%s2515] sm:$0xf]
  %v2517 = vld [vmem:[%s2515 + $0x4] sm:$0xf]
  %v2518 = vld [vmem:[%s2515 + $0x8] sm:$0xf]
  %v2519 = vld [vmem:[%s2515 + $0xc] sm:$0xf]
  %v2520 = vlaneseq
  %v2521 = vshrl.u32 %v2520, 7
  %v2522 = vsub.s32 4, %v2521
  %v2523 = vrot.slane %v1401, %v2522
  %v2528 = vunpack.c.l.b16 %v2516
  %v2529 = vunpack.c.l.b16 %v2517
  %v2530 = vunpack.c.l.b16 %v2518
  %v2531 = vunpack.c.l.b16 %v2519
  %v2532 = vpack.c.b16 %v2529, %v2528
  %v2533 = vpack.c.b16 %v2531, %v2530
  %v2537 = vsel %vm39, %v2514, 0
  %2539 = vmatprep.subr.bf16.mxu0 0
  %2540 = vmatpush1.bf16.msra.mxu0 0
  %2541 = vmatprep.subr.bf16.mxu0 0
  %2542 = vmatpush1.bf16.msra.mxu0 0
  %2543 = vmatprep.subr.bf16.mxu0 0
  %2544 = vmatpush1.bf16.msra.mxu0 0
  %2545 = vmatprep.subr.bf16.mxu0 0
  %2546 = vmatpush1.bf16.msra.mxu0 0
  %2547 = vmatprep.subr.bf16.mxu0 0
  %2548 = vmatpush1.bf16.msra.mxu0 0
  %2549 = vmatprep.subr.bf16.mxu0 0
  %2550 = vmatpush1.bf16.msra.mxu0 0
  %2551 = vmatprep.subr.bf16.mxu0 0
  %2552 = vmatpush1.bf16.msra.mxu0 %v2533
  %2553 = vmatprep.subr.bf16.mxu0 0
  %2554 = vmatpush1.bf16.msra.mxu0 %v2532
  %2555 = vmatprep.subr.bf16.mxu0 0
  %2556 = vmatpush2.bf16.msra.mxu0 0
  %2557 = vmatprep.subr.bf16.mxu0 0
  %2558 = vmatpush2.bf16.msra.mxu0 0
  %2559 = vmatprep.subr.bf16.mxu0 0
  %2560 = vmatpush2.bf16.msra.mxu0 0
  %2561 = vmatprep.subr.bf16.mxu0 0
  %2562 = vmatpush2.bf16.msra.mxu0 0
  %2563 = vmatprep.subr.bf16.mxu0 0
  %2564 = vmatpush2.bf16.msra.mxu0 0
  %2565 = vmatprep.subr.bf16.mxu0 0
  %2566 = vmatpush2.bf16.msra.mxu0 0
  %2567 = vmatprep.subr.bf16.mxu0 0
  %2568 = vmatpush2.bf16.msra.mxu0 0
  %2569 = vmatprep.subr.bf16.mxu0 0
  %2570 = vmatpush2.bf16.msra.mxu0 0
  %2571 = vmatprep.mubr.bf16.mxu0 0
  %2572 = vmatmul.mubr.bf16.gmra.mxu0 %v2537
  %v2573 = vpop.f32.mrf.mxu0
  %v2574 = vadd.f32 %v2523, %v2573
  %v2575 = vpop.f32.mrf.mxu0
  %v2576 = vpop.f32.mrf.mxu0
  %v2577 = vadd.f32 %v2523, %v2576
  %v2578 = vpop.f32.mrf.mxu0
  %2579 = vdwg.mxu0
  %v2580 = vmul.f32 %v2574, 0.5
  %v2581 = vmul.f32 %v2577, 0.5
  %v2582 = vmul.f32 %v2574, 0.044715
  %v2583 = vmul.f32 %v2577, 0.044715
  %v2584 = vmul.f32 %v2582, %v2574
  %v2585 = vmul.f32 %v2583, %v2577
  %v2586 = vmul.f32 %v2584, %v2574
  %v2587 = vmul.f32 %v2585, %v2577
  %v2588 = vadd.f32 %v2574, %v2586
  %v2589 = vadd.f32 %v2577, %v2587
  %v2590 = vmul.f32 %v2588, 0.7978846
  %v2591 = vmul.f32 %v2589, 0.7978846
  %v2592 = vtanh.pop %v2590
  %v2593 = vtanh.pop %v2591
  %v2594 = vadd.f32 %v2592, 1.0
  %v2595 = vadd.f32 %v2593, 1.0
  %v2596 = vmul.f32 %v2580, %v2594
  %v2597 = vmul.f32 %v2581, %v2595
  %v2598 = vpack.c.bf16 %v2597, %v2596
  %s2599 = scalar_lea.vmem %s6, 32
  %v2600 = vld [vmem:[%s2599] sm:$0xf]
  %v2601 = vld [vmem:[%s2599 + $0x4] sm:$0xf]
  %v2602 = vld [vmem:[%s2599 + $0x8] sm:$0xf]
  %v2603 = vld [vmem:[%s2599 + $0xc] sm:$0xf]
  %v2604 = vld [vmem:[%s2599 + $0x10] sm:$0xf]
  %v2605 = vld [vmem:[%s2599 + $0x14] sm:$0xf]
  %v2606 = vld [vmem:[%s2599 + $0x18] sm:$0xf]
  %v2607 = vld [vmem:[%s2599 + $0x1c] sm:$0xf]
  %v2608 = vlaneseq
  %v2609 = vshrl.u32 %v2608, 7
  %v2610 = vsub.s32 5, %v2609
  %v2611 = vrot.slane %v1401, %v2610
  %v2620 = vunpack.c.l.b16 %v2600
  %v2621 = vunpack.c.l.b16 %v2601
  %v2622 = vunpack.c.l.b16 %v2602
  %v2623 = vunpack.c.l.b16 %v2603
  %v2624 = vunpack.c.l.b16 %v2604
  %v2625 = vunpack.c.l.b16 %v2605
  %v2626 = vunpack.c.l.b16 %v2606
  %v2627 = vunpack.c.l.b16 %v2607
  %v2628 = vpack.c.b16 %v2621, %v2620
  %v2629 = vpack.c.b16 %v2623, %v2622
  %v2630 = vpack.c.b16 %v2625, %v2624
  %v2631 = vpack.c.b16 %v2627, %v2626
  %v2637 = vsel %vm1315, %v2598, 0
  %2639 = vmatprep.subr.bf16.mxu0 0
  %2640 = vmatpush1.bf16.msra.mxu0 0
  %2641 = vmatprep.subr.bf16.mxu0 0
  %2642 = vmatpush1.bf16.msra.mxu0 0
  %2643 = vmatprep.subr.bf16.mxu0 0
  %2644 = vmatpush1.bf16.msra.mxu0 0
  %2645 = vmatprep.subr.bf16.mxu0 0
  %2646 = vmatpush1.bf16.msra.mxu0 0
  %2647 = vmatprep.subr.bf16.mxu0 0
  %2648 = vmatpush1.bf16.msra.mxu0 %v2631
  %2649 = vmatprep.subr.bf16.mxu0 0
  %2650 = vmatpush1.bf16.msra.mxu0 %v2630
  %2651 = vmatprep.subr.bf16.mxu0 0
  %2652 = vmatpush1.bf16.msra.mxu0 %v2629
  %2653 = vmatprep.subr.bf16.mxu0 0
  %2654 = vmatpush1.bf16.msra.mxu0 %v2628
  %2655 = vmatprep.subr.bf16.mxu0 0
  %2656 = vmatpush2.bf16.msra.mxu0 0
  %2657 = vmatprep.subr.bf16.mxu0 0
  %2658 = vmatpush2.bf16.msra.mxu0 0
  %2659 = vmatprep.subr.bf16.mxu0 0
  %2660 = vmatpush2.bf16.msra.mxu0 0
  %2661 = vmatprep.subr.bf16.mxu0 0
  %2662 = vmatpush2.bf16.msra.mxu0 0
  %2663 = vmatprep.subr.bf16.mxu0 0
  %2664 = vmatpush2.bf16.msra.mxu0 0
  %2665 = vmatprep.subr.bf16.mxu0 0
  %2666 = vmatpush2.bf16.msra.mxu0 0
  %2667 = vmatprep.subr.bf16.mxu0 0
  %2668 = vmatpush2.bf16.msra.mxu0 0
  %2669 = vmatprep.subr.bf16.mxu0 0
  %2670 = vmatpush2.bf16.msra.mxu0 0
  %2671 = vmatprep.mubr.bf16.mxu0 0
  %2672 = vmatmul.mubr.bf16.gmra.mxu0 %v2637
  %v2673 = vpop.f32.mrf.mxu0
  %v2674 = vadd.f32 %v2611, %v2673
  %v2675 = vpop.f32.mrf.mxu0
  %v2676 = vpop.f32.mrf.mxu0
  %v2677 = vadd.f32 %v2611, %v2676
  %v2678 = vpop.f32.mrf.mxu0
  %2679 = vdwg.mxu0
  %v2680 = vadd.f32 %v2512, %v2674
  %v2681 = vadd.f32 %v2513, %v2677
  %v2682 = vsel %vm39, %v2680, 0.0
  %2683 = vadd.xlane.f32.xlu0 %v2682
  %v2684 = vpop.xlane.xlu0 %2683
  %v2685 = vsel %vm39, %v2681, 0.0
  %2686 = vadd.xlane.f32.xlu0 %v2685
  %v2687 = vpop.xlane.xlu0 %2686
  %v2688 = vmul.f32 %v2684, %v46
  %v2689 = vmul.f32 %v2687, %v46
  %v2690 = vsub.f32 %v2680, %v2688
  %v2691 = vsub.f32 %v2681, %v2689
  %v2692 = vmul.f32 %v2690, %v2690
  %v2693 = vmul.f32 %v2691, %v2691
  %v2694 = vsel %vm39, %v2692, 0.0
  %2695 = vadd.xlane.f32.xlu0 %v2694
  %v2696 = vpop.xlane.xlu0 %2695
  %v2697 = vsel %vm39, %v2693, 0.0
  %2698 = vadd.xlane.f32.xlu0 %v2697
  %v2699 = vpop.xlane.xlu0 %2698
  %v2700 = vmul.f32 %v2696, %v46
  %v2701 = vmul.f32 %v2699, %v46
  %v2702 = vadd.f32 %v2700, 1e-12
  %v2703 = vadd.f32 %v2701, 1e-12
  %v2704 = vrsqrt.pop %v2702
  %v2705 = vrsqrt.pop %v2703
  %v2706 = vmul.f32 %v2690, %v2704
  %v2707 = vmul.f32 %v2691, %v2705
  %v2708 = vlaneseq
  %v2709 = vshrl.u32 %v2708, 7
  %v2710 = vsub.s32 6, %v2709
  %v2711 = vrot.slane %v1401, %v2710
  %v2712 = vmul.f32 %v2706, %v2711
  %v2713 = vmul.f32 %v2707, %v2711
  %v2714 = vlaneseq
  %v2715 = vshrl.u32 %v2714, 7
  %v2716 = vsub.s32 7, %v2715
  %v2717 = vrot.slane %v1401, %v2716
  %v2718 = vadd.f32 %v2712, %v2717
  %v2719 = vadd.f32 %v2713, %v2717
  %v2721 = vrot.slane %v2719, 7
  %vm2723 = vcmask 1040384
  %v2724 = vsel %vm2723, %v2718, %v2721
  %v2725 = vpack.c.bf16 %v2724, %v2724
  %v2726 = vld [vmem:[%s8] sm:$0xf]
  %v2727 = vld [vmem:[%s8 + $0x4] sm:$0xf]
  %v2728 = vld [vmem:[%s8 + $0x8] sm:$0xf]
  %v2729 = vld [vmem:[%s8 + $0xc] sm:$0xf]
  %v2730 = vlaneseq
  %v2731 = vshrl.u32 %v2730, 7
  %v2732 = vsub.s32 2, %v2731
  %v2733 = vrot.slane %v36, %v2732
  %v2738 = vunpack.c.l.b16 %v2726
  %v2739 = vunpack.c.l.b16 %v2727
  %v2740 = vunpack.c.l.b16 %v2728
  %v2741 = vunpack.c.l.b16 %v2729
  %v2742 = vpack.c.b16 %v2739, %v2738
  %v2743 = vpack.c.b16 %v2741, %v2740
  %v2747 = vsel %vm39, %v2725, 0
  %2749 = vmatprep.subr.bf16.mxu0 0
  %2750 = vmatpush1.bf16.msra.mxu0 0
  %2751 = vmatprep.subr.bf16.mxu0 0
  %2752 = vmatpush1.bf16.msra.mxu0 0
  %2753 = vmatprep.subr.bf16.mxu0 0
  %2754 = vmatpush1.bf16.msra.mxu0 0
  %2755 = vmatprep.subr.bf16.mxu0 0
  %2756 = vmatpush1.bf16.msra.mxu0 0
  %2757 = vmatprep.subr.bf16.mxu0 0
  %2758 = vmatpush1.bf16.msra.mxu0 0
  %2759 = vmatprep.subr.bf16.mxu0 0
  %2760 = vmatpush1.bf16.msra.mxu0 0
  %2761 = vmatprep.subr.bf16.mxu0 0
  %2762 = vmatpush1.bf16.msra.mxu0 %v2743
  %2763 = vmatprep.subr.bf16.mxu0 0
  %2764 = vmatpush1.bf16.msra.mxu0 %v2742
  %2765 = vmatprep.subr.bf16.mxu0 0
  %2766 = vmatpush2.bf16.msra.mxu0 0
  %2767 = vmatprep.subr.bf16.mxu0 0
  %2768 = vmatpush2.bf16.msra.mxu0 0
  %2769 = vmatprep.subr.bf16.mxu0 0
  %2770 = vmatpush2.bf16.msra.mxu0 0
  %2771 = vmatprep.subr.bf16.mxu0 0
  %2772 = vmatpush2.bf16.msra.mxu0 0
  %2773 = vmatprep.subr.bf16.mxu0 0
  %2774 = vmatpush2.bf16.msra.mxu0 0
  %2775 = vmatprep.subr.bf16.mxu0 0
  %2776 = vmatpush2.bf16.msra.mxu0 0
  %2777 = vmatprep.subr.bf16.mxu0 0
  %2778 = vmatpush2.bf16.msra.mxu0 0
  %2779 = vmatprep.subr.bf16.mxu0 0
  %2780 = vmatpush2.bf16.msra.mxu0 0
  %2781 = vmatprep.mubr.bf16.mxu0 0
  %2782 = vmatmul.mubr.bf16.gmra.mxu0 %v2747
  %v2783 = vpop.f32.mrf.mxu0
  %v2784 = vadd.f32 %v2733, %v2783
  %v2785 = vpop.f32.mrf.mxu0
  %v2786 = vpop.f32.mrf.mxu0
  %v2787 = vpop.f32.mrf.mxu0
  %2788 = vdwg.mxu0
  %v2789 = vld [vmem:[%s9] sm:$0x3]
  %v2790 = vmax.f32 %v2784, 0.0
  %v2791 = vmul.f32 %v2784, %v2789
  %v2792 = vsub.f32 %v2790, %v2791
  %v2793 = vand.u32 2147483647, %v2784
  %v2794 = vsub.f32 0.0, %v2793
  %v2795 = vmul.f32 %v2794, 1.442695
  %v2796 = vpow.pop %v2795
  %v2797 = vadd.f32 %v2796, 1.0
  %v2798 = vlog2.pop %v2797
  %v2799 = vmul.f32 %v2798, 0.6931472
  %v2800 = vadd.f32 %v2792, %v2799
  %vm2801 = vcmask 41984
  %v2802 = vsel %vm2801, %v2800, 0.0
  %2803 = vadd.xlane.f32.xlu0 %v2802
  %v2804 = vpop.xlane.xlu0 %2803
  %vm2805 = vcmask 1041408
  %v2806 = vsel %vm2805, %v2804, 0.0
  %v2807 = vrot.slane %v2806, 4
  %v2808 = vadd.f32 %v2806, %v2807
  %v2809 = vrot.slane %v2808, 2
  %v2810 = vadd.f32 %v2808, %v2809
  %v2811 = vrot.slane %v2810, 1
  %v2812 = vadd.f32 %v2810, %v2811
  %v2813 = vmul.f32 %v2812, 0.083333336
  %vm2814 = vcmp.ge.f32.partialorder %v2789, 0.0
  %v2815 = vsel %vm2814, 1, 0
  %v2816 = vcvt.s32.f32 %v2815
  %v2817 = vsel %vm2814, %v2789, 0.0
  %v2818 = vcvt.f32.s32.to.zero.pseudo %v2817
  %v2819 = vlaneseq
  %v2820 = vand.u32 %v2819, 127
  %2821 = vset.pattern.permute.xlu0 6
  %2822 = vperm.xlu0 %2821, %v2818
  %v2823 = vpop.permute.xlu0 %2822
  %vm2824 = vcmp.eq.s32.totalorder %v2820, %v2823
  %v2825 = vsel %vm2824, 1, 0
  %v2826 = vcvt.s32.f32 %v2825
  %vm2827 = vcmask 82992
  %v2828 = vsel %vm2827, %v2784, -inf
  %2829 = vmax.xlane.f32.xlu0 %v2828
  %v2830 = vpop.xlane.xlu0 %2829
  %v2831 = vsub.f32 %v2784, %v2830
  %v2832 = vmul.f32 %v2831, 1.442695
  %v2833 = vpow.pop %v2832
  %2835 = vrot.lane.b32.xlu0 %v2833, 122
  %v2836 = vpop.permute.xlu0 %2835
  %vm2838 = vcmask 33792
  %v2839 = vsel %vm2838, %v2836, 0.0
  %2840 = vadd.xlane.f32.xlu0 %v2839
  %v2841 = vpop.xlane.xlu0 %2840
  %v2842 = vlog2.pop %v2841
  %v2843 = vmul.f32 %v2842, 0.6931472
  %v2844 = vadd.f32 %v2830, %v2843
  %2846 = vrot.lane.b32.xlu0 %v2784, 122
  %v2847 = vpop.permute.xlu0 %2846
  %v2849 = vmul.f32 %v2826, %v2847
  %v2850 = vsel %vm2838, %v2849, 0.0
  %2851 = vadd.xlane.f32.xlu0 %v2850
  %v2852 = vpop.xlane.xlu0 %2851
  %v2853 = vsub.f32 %v2844, %v2852
  %v2854 = vmul.f32 %v2853, %v2816
  %vm2855 = vcmask 50224
  %v2856 = vsel %vm2855, %v2854, 0.0
  %v2857 = vrot.slane %v2856, 4
  %v2858 = vadd.f32 %v2856, %v2857
  %v2859 = vrot.slane %v2858, 2
  %v2860 = vadd.f32 %v2858, %v2859
  %v2861 = vrot.slane %v2860, 1
  %v2862 = vadd.f32 %v2860, %v2861
  %v2863 = vsel %vm2855, %v2816, 0.0
  %v2864 = vrot.slane %v2863, 4
  %v2865 = vadd.f32 %v2863, %v2864
  %v2866 = vrot.slane %v2865, 2
  %v2867 = vadd.f32 %v2865, %v2866
  %v2868 = vrot.slane %v2867, 1
  %v2869 = vadd.f32 %v2867, %v2868
  %v2870 = vrcp.pop %v2869
  %v2871 = vmul.f32 %v2862, %v2870
  %v2872 = vadd.f32 %v2813, %v2871
  %vm2873 = vcmp.eq.s32.totalorder %v2820, 16
  %2875 = vset.pattern.permute.xlu0 6
  %2876 = vperm.xlu0 %2875, %v2872
  %v2877 = vpop.permute.xlu0 %2876
  %v2879 = vsel %vm2873, %v2877, %v2784
  %vm2880 = vcmask 254976
  %2881 = vst.msk [vmem:[%s10] sm:$0x3] %vm2880, %v2879
  // Predicated region
  $region42: #{forward.1} parent=0 // pred_check
    _
  $region43: #{forward.1} parent=0 // pred_check_branch
    %2883 = sbr.rel (0) target = $region45
  $region44: #{forward.1} parent=0 // pred_region
    _
  $region45: #{forward.1} parent=0 // pred_fallthru
    _
  // Predicated region
  $region46: #{forward.1} parent=0 // pred_check
    _
  $region47: #{forward.1} parent=0 // pred_check_branch
    %2885 = sbr.rel (0) target = $region49
  $region48: #{forward.1} parent=0 // pred_region
    _
  $region49: #{forward.1} parent=0 // pred_fallthru
    _

</llo_original>
